<compile_context>
chip_gen: v7x
topology: tpu7x:2x2x1
jax: 0.10.0
libtpu: 0.0.40
codegen_flags: <defaults>
</compile_context>

<pallas_src>
import math
import functools

import jax
import jax.numpy as jnp
from jax import lax
from jax.experimental import pallas as pl
from jax.experimental.pallas import tpu as pltpu

NEG_INF = -1e9
LN_EPS = 1e-5
_M_INIT = -1e30   # finite "minus infinity" for the online-softmax running max


# ---------------------------------------------------------------------------
# Static chunk-size heuristics (trace-time)
# ---------------------------------------------------------------------------
def _chunk_len(skv):
    if skv <= 512:
        return skv
    for c in (512, 256, 128):
        if skv % c == 0:
            return c
    return skv


def _ffn_chunk(d_ff):
    if d_ff <= 2048:
        return d_ff
    for c in (2048, 1024, 512):
        if d_ff % c == 0:
            return c
    return d_ff


# ---------------------------------------------------------------------------
# In-kernel helpers
# ---------------------------------------------------------------------------
def _layernorm(x, w, b):
    mu = jnp.mean(x, axis=-1, keepdims=True)
    xc = x - mu
    var = jnp.mean(xc * xc, axis=-1, keepdims=True)
    return xc * lax.rsqrt(var + LN_EPS) * w + b


def _flash_attend(q_all, k_ref, v_ref, wo_ref, bo_ref, ctx_ref,
                  num_heads, cdt, n_chunks, kc, mask_fn):
    """Online-softmax attention for one query tile with pre-projected K/V.

    q_all: (TQ, D) f32 projected (pre-scaled) queries.
    k_ref/v_ref: (H, Skv, dk) bf16 VMEM refs.
    ctx_ref: (TQ, D) f32 VMEM scratch — per-head contexts written into lane
    slices so the output projection is a single fused (TQ,D)@(D,D) matmul.
    mask_fn(c0) -> bool mask broadcastable to (TQ, kc); True = attend.
    """
    tq, d_model = q_all.shape
    dk = d_model // num_heads

    for h in range(num_heads):                          # small H: keep unrolled
        qh = q_all[:, h * dk:(h + 1) * dk].astype(cdt)

        def chunk_body(c, carry, _h=h, _qh=qh):
            m, l, acc = carry
            c0 = c * kc
            if not isinstance(c0, int):
                c0 = pl.multiple_of(c0, kc)
            kh = k_ref[_h, pl.ds(c0, kc), :]                         # (KC, dk)
            vh = v_ref[_h, pl.ds(c0, kc), :]                         # (KC, dk)
            s = lax.dot_general(_qh, kh, (((1,), (1,)), ((), ())),
                                preferred_element_type=jnp.float32)  # (TQ, KC)
            s = jnp.where(mask_fn(c0), s, NEG_INF)
            m_new = jnp.maximum(m, jnp.max(s, axis=-1, keepdims=True))
            p = jnp.exp(s - m_new)
            alpha = jnp.exp(m - m_new)
            l_new = alpha * l + jnp.sum(p, axis=-1, keepdims=True)
            acc_new = alpha * acc + jnp.dot(p.astype(cdt), vh,
                                            preferred_element_type=jnp.float32)
            return m_new, l_new, acc_new

        init = (jnp.full((tq, 1), _M_INIT, jnp.float32),
                jnp.zeros((tq, 1), jnp.float32),
                jnp.zeros((tq, dk), jnp.float32))
        if isinstance(n_chunks, int) and n_chunks == 1:
            m, l, acc = chunk_body(0, init)            # fully static fast path
        else:
            m, l, acc = lax.fori_loop(0, n_chunks, chunk_body, init)
        ctx_ref[:, h * dk:(h + 1) * dk] = acc / l

    return (jnp.dot(ctx_ref[...].astype(cdt), wo_ref[...],
                    preferred_element_type=jnp.float32) + bo_ref[...])


def _ffn(x2, w1_ref, b1_ref, w2_ref, b2_ref, cdt):
    """Position-wise FFN, chunked over d_ff to bound the hidden activation."""
    tq, d_model = x2.shape
    d_ff = w1_ref.shape[1]
    fc = _ffn_chunk(d_ff)
    n = d_ff // fc
    x_c = x2.astype(cdt)

    if n == 1:                                          # static single-chunk
        h = jnp.maximum(jnp.dot(x_c, w1_ref[...],
                                preferred_element_type=jnp.float32)
                        + b1_ref[...], 0.0).astype(cdt)
        return (jnp.dot(h, w2_ref[...], preferred_element_type=jnp.float32)
                + b2_ref[...])

    def body(c, acc):
        c0 = pl.multiple_of(c * fc, fc)
        h = (jnp.dot(x_c, w1_ref[:, pl.ds(c0, fc)],
                     preferred_element_type=jnp.float32)
             + b1_ref[:, pl.ds(c0, fc)])
        h = jnp.maximum(h, 0.0).astype(cdt)
        return acc + jnp.dot(h, w2_ref[pl.ds(c0, fc), :],
                             preferred_element_type=jnp.float32)

    acc = lax.fori_loop(0, n, body, jnp.zeros((tq, d_model), jnp.float32))
    return acc + b2_ref[...]


# ---------------------------------------------------------------------------
# Pallas kernel: one (batch, query-tile) of a full decoder layer per grid step
# ---------------------------------------------------------------------------
def decoder_layer_kernel(
    num_heads, cdt,
    # activations (query/residual tile), compact padding mask, pre-projected KV
    x_ref, kvalid_ref, k1_ref, v1_ref, k2_ref, v2_ref,
    # self-attention params (Q/O only) + LN1
    wq1, bq1, wo1, bo1, ln1_w, ln1_b,
    # cross-attention params (Q/O only) + LN2
    wq2, bq2, wo2, bo2, ln2_w, ln2_b,
    # FFN params + LN3
    w_ff1, b_ff1, w_ff2, b_ff2, ln3_w, ln3_b,
    # output + scratch
    out_ref, ctx_ref,
):
    tq = out_ref.shape[0]
    s_self = k1_ref.shape[1]
    s_mem = k2_ref.shape[1]
    q0 = pl.multiple_of(pl.program_id(1) * tq, tq)

    x_tile = x_ref[...].astype(jnp.float32)                        # (TQ, D)

    # --- masked self-attention + residual + LayerNorm1 (dropout = identity) --
    kc1 = _chunk_len(s_self)
    if s_self // kc1 == 1:
        n1 = 1                                                     # static path
    else:
        # causal skip: chunks strictly above this tile's last row are all dead
        n1 = (q0 + tq + kc1 - 1) // kc1

    def causal_mask(c0):
        rows = q0 + lax.broadcasted_iota(jnp.int32, (tq, kc1), 0)
        cols = c0 + lax.broadcasted_iota(jnp.int32, (tq, kc1), 1)
        return cols <= rows

    q1 = (jnp.dot(x_tile.astype(cdt), wq1[...],
                  preferred_element_type=jnp.float32) + bq1[...])  # pre-scaled
    attn1 = _flash_attend(q1, k1_ref, v1_ref, wo1, bo1, ctx_ref,
                          num_heads, cdt, n1, kc1, causal_mask)
    x1 = _layernorm(attn1 + x_tile, ln1_w[...], ln1_b[...])

    # --- cross-attention over memory + residual + LayerNorm2 -----------------
    kc2 = _chunk_len(s_mem)
    n2 = s_mem // kc2
    if n2 == 1:
        def pad_mask(c0):
            return kvalid_ref[...] > 0.5                           # (1, S_mem)
    else:
        def pad_mask(c0):
            return kvalid_ref[:, pl.ds(c0, kc2)] > 0.5             # (1, kc2)

    q2 = (jnp.dot(x1.astype(cdt), wq2[...],
                  preferred_element_type=jnp.float32) + bq2[...])
    attn2 = _flash_attend(q2, k2_ref, v2_ref, wo2, bo2, ctx_ref,
                          num_heads, cdt, n2, kc2, pad_mask)
    x2 = _layernorm(attn2 + x1, ln2_w[...], ln2_b[...])

    # --- position-wise FFN (Linear -> ReLU -> Linear) + residual + LayerNorm3 -
    ff = _ffn(x2, w_ff1, b_ff1, w_ff2, b_ff2, cdt)
    x3 = _layernorm(ff + x2, ln3_w[...], ln3_b[...])

    out_ref[...] = x3.astype(out_ref.dtype)


# ---------------------------------------------------------------------------
# Host wrapper
# ---------------------------------------------------------------------------
def decoder_layer(x, memory, key_valid, params, num_heads, *,
                  seq_tile=None, compute_dtype=jnp.bfloat16,
                  vmem_limit_bytes=None):
    """x: (B,S,D) f32, memory: (B,S_mem,D) f32, key_valid: (B,S_mem) {0,1}.

    The causal look-ahead mask is generated in-kernel; key_valid is the memory
    padding mask (1.0 = attend to that memory position).
    """
    B, S, D = x.shape
    _, S_mem, _ = memory.shape
    assert D % num_heads == 0
    dk = D // num_heads
    d_ff = params["w_ff1"].shape[1]
    cdt = compute_dtype

    tq = seq_tile if seq_tile is not None else min(S, 256)
    assert S % tq == 0 and (tq % 8 == 0 or tq == S), \
        "query tile must be sublane-aligned"

    scale = 1.0 / math.sqrt(dk)

    # --- K/V pre-projection once per call (plain XLA) -> (B, H, Skv, dk) bf16.
    def project_kv(src, w, b):
        kv = src @ w + b[0]
        kv = kv.reshape(src.shape[0], src.shape[1], num_heads, dk)
        return jnp.transpose(kv, (0, 2, 1, 3)).astype(cdt)

    k1 = project_kv(x, params["wk1"], params["bk1"])
    v1 = project_kv(x, params["wv1"], params["bv1"])
    k2 = project_kv(memory, params["wk2"], params["bk2"])
    v2 = project_kv(memory, params["wv2"], params["bv2"])

    kvalid = key_valid.reshape(B, 1, S_mem).astype(jnp.float32)

    operands = [
        x, kvalid, k1, v1, k2, v2,
        (params["wq1"] * scale).astype(cdt), params["bq1"] * scale,
        params["wo1"].astype(cdt), params["bo1"],
        params["ln1_w"], params["ln1_b"],
        (params["wq2"] * scale).astype(cdt), params["bq2"] * scale,
        params["wo2"].astype(cdt), params["bo2"],
        params["ln2_w"], params["ln2_b"],
        params["w_ff1"].astype(cdt), params["b_ff1"],
        params["w_ff2"].astype(cdt), params["b_ff2"],
        params["ln3_w"], params["ln3_b"],
    ]

    def tile_spec():
        return pl.BlockSpec((None, tq, D), lambda b, q: (b, q, 0))

    def per_batch_spec(arr):
        tail = (0,) * (arr.ndim - 1)
        return pl.BlockSpec((None,) + tuple(arr.shape[1:]),
                            lambda b, q: (b,) + tail)

    def shared_spec(arr):
        zeros = (0,) * arr.ndim
        return pl.BlockSpec(arr.shape, lambda b, q: zeros)

    in_specs = ([tile_spec(), per_batch_spec(kvalid),
                 per_batch_spec(k1), per_batch_spec(v1),
                 per_batch_spec(k2), per_batch_spec(v2)]
                + [shared_spec(p) for p in operands[6:]])
    out_spec = pl.BlockSpec((None, tq, D), lambda b, q: (b, q, 0))

    # --- VMEM accounting: 2x double-buffered blocks + resident weights + live -
    kc1, kc2, fc = _chunk_len(S), _chunk_len(S_mem), _ffn_chunk(d_ff)
    weight_bytes = sum(int(p.size) * p.dtype.itemsize for p in operands[6:])
    block_bytes = (tq * D * 4 + S_mem * 4
                   + 2 * S * D * 2 + 2 * S_mem * D * 2
                   + tq * D * 4)
    live_bytes = tq * (kc1 + kc2 + fc + 6 * D) * 4 + tq * D * 4
    per_step_bytes = 2 * block_bytes + weight_bytes + live_bytes
    if vmem_limit_bytes is None:
        try:
            cap = int(pltpu.get_tpu_info().vmem_capacity_bytes)
        except Exception:
            cap = 64 * 2 ** 20                       # conservative (v7x-sized)
        vmem_limit_bytes = int(min(cap * 3 // 4,
                                   max(32 * 2 ** 20, 2 * per_step_bytes)))

    flops = (4 * B * S * D * D                       # Q projections (self+cross)
             + 4 * B * S * D * D                     # output projections
             + 2 * B * S * S * D                     # causal self scores + PV
             + 4 * B * S * S_mem * D                 # cross scores + PV
             + 4 * B * S * D * d_ff)                 # FFN
    transcendentals = B * num_heads * S * (S // 2 + S_mem)
    bytes_accessed = int(sum(int(p.size) * p.dtype.itemsize for p in operands)
                         + B * S * D * 4)
    cost = pl.CostEstimate(flops=int(flops),
                           transcendentals=int(transcendentals),
                           bytes_accessed=bytes_accessed)

    kernel = functools.partial(decoder_layer_kernel, num_heads, cdt)
    return pl.pallas_call(
        kernel,
        out_shape=jax.ShapeDtypeStruct((B, S, D), jnp.float32),
        grid_spec=pltpu.PrefetchScalarGridSpec(
            num_scalar_prefetch=0,
            grid=(B, S // tq),               # batch outermost: cores split on B
            in_specs=in_specs,
            out_specs=out_spec,
            scratch_shapes=[pltpu.VMEM((tq, D), jnp.float32)],
        ),
        compiler_params=pltpu.CompilerParams(
            dimension_semantics=("parallel", "parallel"),
            vmem_limit_bytes=vmem_limit_bytes,
        ),
        cost_estimate=cost,
    )(*operands)


# ---------------------------------------------------------------------------
# Deterministic parameter init (synthetic; shapes from DecoderLayer.__init__)
# ---------------------------------------------------------------------------
def init_params(key, d_model, d_ff):
    keys = jax.random.split(key, 16)
    k = iter(keys)
    s = 0.02

    def lin(kk, din, dout):
        return jax.random.normal(kk, (din, dout), jnp.float32) * s

    return {
        "wq1": lin(next(k), d_model, d_model), "bq1": jnp.zeros((1, d_model), jnp.float32),
        "wk1": lin(next(k), d_model, d_model), "bk1": jnp.zeros((1, d_model), jnp.float32),
        "wv1": lin(next(k), d_model, d_model), "bv1": jnp.zeros((1, d_model), jnp.float32),
        "wo1": lin(next(k), d_model, d_model), "bo1": jnp.zeros((1, d_model), jnp.float32),
        "ln1_w": jnp.ones((1, d_model), jnp.float32), "ln1_b": jnp.zeros((1, d_model), jnp.float32),
        "wq2": lin(next(k), d_model, d_model), "bq2": jnp.zeros((1, d_model), jnp.float32),
        "wk2": lin(next(k), d_model, d_model), "bk2": jnp.zeros((1, d_model), jnp.float32),
        "wv2": lin(next(k), d_model, d_model), "bv2": jnp.zeros((1, d_model), jnp.float32),
        "wo2": lin(next(k), d_model, d_model), "bo2": jnp.zeros((1, d_model), jnp.float32),
        "ln2_w": jnp.ones((1, d_model), jnp.float32), "ln2_b": jnp.zeros((1, d_model), jnp.float32),
        "w_ff1": lin(next(k), d_model, d_ff), "b_ff1": jnp.zeros((1, d_ff), jnp.float32),
        "w_ff2": lin(next(k), d_ff, d_model), "b_ff2": jnp.zeros((1, d_model), jnp.float32),
        "ln3_w": jnp.ones((1, d_model), jnp.float32), "ln3_b": jnp.zeros((1, d_model), jnp.float32),
    }


# ---------------------------------------------------------------------------
# Pure-JAX reference (mirrors the PyTorch DecoderLayer forward, eval mode, f32)
# ---------------------------------------------------------------------------
def ref_decoder_layer(x, memory, la_mask, pad_mask, p, num_heads):
    def ln(v, w, b):
        mu = jnp.mean(v, -1, keepdims=True)
        var = jnp.mean((v - mu) ** 2, -1, keepdims=True)
        return (v - mu) / jnp.sqrt(var + LN_EPS) * w[0] + b[0]

    def mha(q, kk, vv, mask, wq, bq, wk, bk, wv, bv, wo, bo):
        B, Sq, D = q.shape
        Sk = kk.shape[1]
        dk = D // num_heads
        Q = (q @ wq + bq[0]).reshape(B, Sq, num_heads, dk).transpose(0, 2, 1, 3)
        K = (kk @ wk + bk[0]).reshape(B, Sk, num_heads, dk).transpose(0, 2, 1, 3)
        V = (vv @ wv + bv[0]).reshape(B, Sk, num_heads, dk).transpose(0, 2, 1, 3)
        s = jnp.einsum("bhqd,bhkd->bhqk", Q, K) / math.sqrt(dk)
        s = jnp.where(mask[:, None, :, :] == 0.0, NEG_INF, s)
        a = jax.nn.softmax(s, -1)
        o = jnp.einsum("bhqk,bhkd->bhqd", a, V)
        o = o.transpose(0, 2, 1, 3).reshape(B, Sq, D)
        return o @ wo + bo[0]

    r = x
    h = mha(x, x, x, la_mask, p["wq1"], p["bq1"], p["wk1"], p["bk1"],
            p["wv1"], p["bv1"], p["wo1"], p["bo1"])
    h = ln(h + r, p["ln1_w"], p["ln1_b"])
    r = h
    h2 = mha(h, memory, memory, pad_mask, p["wq2"], p["bq2"], p["wk2"], p["bk2"],
             p["wv2"], p["bv2"], p["wo2"], p["bo2"])
    h = ln(h2 + r, p["ln2_w"], p["ln2_b"])
    r = h
    ff = jnp.maximum(h @ p["w_ff1"] + p["b_ff1"][0], 0.0) @ p["w_ff2"] + p["b_ff2"][0]
    return ln(ff + r, p["ln3_w"], p["ln3_b"])


# ---------------------------------------------------------------------------
if __name__ == "__main__":
    B, S, S_MEM = 2, 16, 16
    D_MODEL, HEADS, D_FF = 32, 4, 64
    TQ = 8   # 2 query tiles per batch element -> grid (2, 2)

    key = jax.random.PRNGKey(0)
    kx, kmem, kp = jax.random.split(key, 3)

    x = jax.random.normal(kx, (B, S, D_MODEL), jnp.float32)
    memory = jax.random.normal(kmem, (B, S_MEM, D_MODEL), jnp.float32)

    # memory padding mask as a compact key-valid vector: batch 0 attends
    # everywhere, batch 1 masks the last 3 memory positions
    key_valid = jnp.stack([
        jnp.ones((S_MEM,), jnp.float32),
        jnp.concatenate([jnp.ones((S_MEM - 3,), jnp.float32),
                         jnp.zeros((3,), jnp.float32)]),
    ])

    params = init_params(kp, D_MODEL, D_FF)

    out = decoder_layer(x, memory, key_valid, params, HEADS, seq_tile=TQ)
    out = jax.block_until_ready(out)

    # full-mask f32 reference (mirrors the PyTorch module, eval mode)
    la_mask = jnp.broadcast_to(jnp.tril(jnp.ones((S, S), jnp.float32))[None],
                               (B, S, S))
    pad_mask = jnp.broadcast_to(key_valid[:, None, :], (B, S, S_MEM))
    ref = jax.block_until_ready(
        ref_decoder_layer(x, memory, la_mask, pad_mask, params, HEADS))

    assert out.shape == (B, S, D_MODEL)
    err = jnp.max(jnp.abs(out - ref))
    assert jnp.allclose(out, ref, atol=5e-2, rtol=5e-2), f"max abs err {err}"

    print("KERNEL_OK")
</pallas_src>

<mosaic_0001>
module attributes {stable_mosaic.version = 11 : i64} {
  func.func @decoder_layer_kernel(%arg0: i32, %arg1: i32, %arg2: memref<1x8x32xf32, #tpu.memory_space<vmem>>, %arg3: memref<1x1x16xf32, #tpu.memory_space<vmem>>, %arg4: memref<1x4x16x8xbf16, #tpu.memory_space<vmem>>, %arg5: memref<1x4x16x8xbf16, #tpu.memory_space<vmem>>, %arg6: memref<1x4x16x8xbf16, #tpu.memory_space<vmem>>, %arg7: memref<1x4x16x8xbf16, #tpu.memory_space<vmem>>, %arg8: memref<32x32xbf16, #tpu.memory_space<vmem>>, %arg9: memref<1x32xf32, #tpu.memory_space<vmem>>, %arg10: memref<32x32xbf16, #tpu.memory_space<vmem>>, %arg11: memref<1x32xf32, #tpu.memory_space<vmem>>, %arg12: memref<1x32xf32, #tpu.memory_space<vmem>>, %arg13: memref<1x32xf32, #tpu.memory_space<vmem>>, %arg14: memref<32x32xbf16, #tpu.memory_space<vmem>>, %arg15: memref<1x32xf32, #tpu.memory_space<vmem>>, %arg16: memref<32x32xbf16, #tpu.memory_space<vmem>>, %arg17: memref<1x32xf32, #tpu.memory_space<vmem>>, %arg18: memref<1x32xf32, #tpu.memory_space<vmem>>, %arg19: memref<1x32xf32, #tpu.memory_space<vmem>>, %arg20: memref<32x64xbf16, #tpu.memory_space<vmem>>, %arg21: memref<1x64xf32, #tpu.memory_space<vmem>>, %arg22: memref<64x32xbf16, #tpu.memory_space<vmem>>, %arg23: memref<1x32xf32, #tpu.memory_space<vmem>>, %arg24: memref<1x32xf32, #tpu.memory_space<vmem>>, %arg25: memref<1x32xf32, #tpu.memory_space<vmem>>, %arg26: memref<1x8x32xf32, #tpu.memory_space<vmem>>, %arg27: memref<8x32xf32, #tpu.memory_space<vmem>>) attributes {dimension_semantics = [#tpu.dimension_semantics<parallel>, #tpu.dimension_semantics<parallel>], iteration_bounds = array<i64: 2, 2>, scalar_prefetch = 0 : i64, scratch_operands = 1 : i64, tpu.core_type = #tpu.core_type<tc>, window_params = [{transform_indices = @transform_0, window_bounds = array<i64: 1, 8, 32>}, {transform_indices = @transform_1, window_bounds = array<i64: 1, 1, 16>}, {transform_indices = @transform_2, window_bounds = array<i64: 1, 4, 16, 8>}, {transform_indices = @transform_3, window_bounds = array<i64: 1, 4, 16, 8>}, {transform_indices = @transform_4, window_bounds = array<i64: 1, 4, 16, 8>}, {transform_indices = @transform_5, window_bounds = array<i64: 1, 4, 16, 8>}, {pipeline_mode = #tpu.pipeline_mode<synchronous>, transform_indices = @transform_6, window_bounds = array<i64: 32, 32>}, {pipeline_mode = #tpu.pipeline_mode<synchronous>, transform_indices = @transform_7, window_bounds = array<i64: 1, 32>}, {pipeline_mode = #tpu.pipeline_mode<synchronous>, transform_indices = @transform_8, window_bounds = array<i64: 32, 32>}, {pipeline_mode = #tpu.pipeline_mode<synchronous>, transform_indices = @transform_9, window_bounds = array<i64: 1, 32>}, {pipeline_mode = #tpu.pipeline_mode<synchronous>, transform_indices = @transform_10, window_bounds = array<i64: 1, 32>}, {pipeline_mode = #tpu.pipeline_mode<synchronous>, transform_indices = @transform_11, window_bounds = array<i64: 1, 32>}, {pipeline_mode = #tpu.pipeline_mode<synchronous>, transform_indices = @transform_12, window_bounds = array<i64: 32, 32>}, {pipeline_mode = #tpu.pipeline_mode<synchronous>, transform_indices = @transform_13, window_bounds = array<i64: 1, 32>}, {pipeline_mode = #tpu.pipeline_mode<synchronous>, transform_indices = @transform_14, window_bounds = array<i64: 32, 32>}, {pipeline_mode = #tpu.pipeline_mode<synchronous>, transform_indices = @transform_15, window_bounds = array<i64: 1, 32>}, {pipeline_mode = #tpu.pipeline_mode<synchronous>, transform_indices = @transform_16, window_bounds = array<i64: 1, 32>}, {pipeline_mode = #tpu.pipeline_mode<synchronous>, transform_indices = @transform_17, window_bounds = array<i64: 1, 32>}, {pipeline_mode = #tpu.pipeline_mode<synchronous>, transform_indices = @transform_18, window_bounds = array<i64: 32, 64>}, {pipeline_mode = #tpu.pipeline_mode<synchronous>, transform_indices = @transform_19, window_bounds = array<i64: 1, 64>}, {pipeline_mode = #tpu.pipeline_mode<synchronous>, transform_indices = @transform_20, window_bounds = array<i64: 64, 32>}, {pipeline_mode = #tpu.pipeline_mode<synchronous>, transform_indices = @transform_21, window_bounds = array<i64: 1, 32>}, {pipeline_mode = #tpu.pipeline_mode<synchronous>, transform_indices = @transform_22, window_bounds = array<i64: 1, 32>}, {pipeline_mode = #tpu.pipeline_mode<synchronous>, transform_indices = @transform_23, window_bounds = array<i64: 1, 32>}, {transform_indices = @transform_24, window_bounds = array<i64: 1, 8, 32>}]} {
    %c8_i32 = arith.constant 8 : i32
    %0 = arith.muli %arg1, %c8_i32 : i32
    %1 = tpu.assume_multiple %0, 8 : i32
    %c0 = arith.constant 0 : index
    %c0_0 = arith.constant 0 : index
    %c0_1 = arith.constant 0 : index
    %2 = vector.load %arg2[%c0, %c0_0, %c0_1] : memref<1x8x32xf32, #tpu.memory_space<vmem>>, vector<1x8x32xf32>
    %3 = vector.shape_cast %2 : vector<1x8x32xf32> to vector<8x32xf32>
    %4 = arith.truncf %3 : vector<8x32xf32> to vector<8x32xbf16>
    %c0_2 = arith.constant 0 : index
    %c0_3 = arith.constant 0 : index
    %5 = vector.load %arg8[%c0_2, %c0_3] : memref<32x32xbf16, #tpu.memory_space<vmem>>, vector<32x32xbf16>
    %cst = arith.constant dense<0.000000e+00> : vector<8x32xf32>
    %6 = tpu.matmul %4, %5, %cst {dimension_numbers = #tpu.dot_dimension_numbers<[1], [0], [0], [1], [0, 0, 1, 1], [], []>} : vector<8x32xbf16>, vector<32x32xbf16>, vector<8x32xf32> -> vector<8x32xf32>
    %c0_4 = arith.constant 0 : index
    %c0_5 = arith.constant 0 : index
    %7 = vector.load %arg9[%c0_4, %c0_5] : memref<1x32xf32, #tpu.memory_space<vmem>>, vector<1x32xf32>
    %8 = vector.broadcast %7 : vector<1x32xf32> to vector<8x32xf32>
    %9 = arith.addf %6, %8 : vector<8x32xf32>
    %10 = vector.extract_strided_slice %9 {offsets = [0, 0], sizes = [8, 8], strides = [1, 1]} : vector<8x32xf32> to vector<8x8xf32>
    %11 = arith.truncf %10 : vector<8x8xf32> to vector<8x8xbf16>
    %cst_6 = arith.constant -1.000000e+30 : f32
    %12 = vector.broadcast %cst_6 : f32 to vector<8x1xf32>
    %cst_7 = arith.constant 0.000000e+00 : f32
    %13 = vector.broadcast %cst_7 : f32 to vector<8x1xf32>
    %cst_8 = arith.constant 0.000000e+00 : f32
    %14 = vector.broadcast %cst_8 : f32 to vector<8x8xf32>
    %c0_9 = arith.constant 0 : index
    %c0_10 = arith.constant 0 : index
    %c0_11 = arith.constant 0 : index
    %c0_12 = arith.constant 0 : index
    %15 = vector.load %arg4[%c0_9, %c0_10, %c0_11, %c0_12] : memref<1x4x16x8xbf16, #tpu.memory_space<vmem>>, vector<1x1x16x8xbf16>
    %16 = vector.shape_cast %15 : vector<1x1x16x8xbf16> to vector<16x8xbf16>
    %c0_13 = arith.constant 0 : index
    %c0_14 = arith.constant 0 : index
    %c0_15 = arith.constant 0 : index
    %c0_16 = arith.constant 0 : index
    %17 = vector.load %arg5[%c0_13, %c0_14, %c0_15, %c0_16] : memref<1x4x16x8xbf16, #tpu.memory_space<vmem>>, vector<1x1x16x8xbf16>
    %18 = vector.shape_cast %17 : vector<1x1x16x8xbf16> to vector<16x8xbf16>
    %cst_17 = arith.constant dense<0.000000e+00> : vector<8x16xf32>
    %19 = tpu.matmul %11, %16, %cst_17 {dimension_numbers = #tpu.dot_dimension_numbers<[1], [1], [0], [0], [0, 0, 1, 0], [], []>} : vector<8x8xbf16>, vector<16x8xbf16>, vector<8x16xf32> -> vector<8x16xf32>
    %20 = tpu.iota {dimensions = array<i32: 0>} : vector<8x16xi32>
    %21 = vector.broadcast %1 : i32 to vector<8x16xi32>
    %22 = arith.addi %21, %20 : vector<8x16xi32>
    %23 = tpu.iota {dimensions = array<i32: 1>} : vector<8x16xi32>
    %c0_i32 = arith.constant 0 : i32
    %24 = vector.broadcast %c0_i32 : i32 to vector<8x16xi32>
    %25 = arith.addi %24, %23 : vector<8x16xi32>
    %26 = arith.cmpi sle, %25, %22 : vector<8x16xi32>
    %cst_18 = arith.constant -1.000000e+09 : f32
    %27 = vector.broadcast %cst_18 : f32 to vector<8x16xf32>
    %28 = arith.select %26, %19, %27 : vector<8x16xi1>, vector<8x16xf32>
    %cst_19 = arith.constant dense<0xFF800000> : vector<8xf32>
    %29 = vector.multi_reduction <maximumf>, %28, %cst_19 [1] : vector<8x16xf32> to vector<8xf32>
    %30 = vector.shape_cast %29 : vector<8xf32> to vector<8x1xf32>
    %31 = arith.maximumf %12, %30 : vector<8x1xf32>
    %32 = vector.broadcast %31 : vector<8x1xf32> to vector<8x16xf32>
    %33 = arith.subf %28, %32 : vector<8x16xf32>
    %34 = math.exp %33 : vector<8x16xf32>
    %35 = arith.subf %12, %31 : vector<8x1xf32>
    %36 = math.exp %35 : vector<8x1xf32>
    %37 = arith.mulf %36, %13 : vector<8x1xf32>
    %cst_20 = arith.constant dense<0.000000e+00> : vector<8xf32>
    %38 = vector.multi_reduction <add>, %34, %cst_20 [1] : vector<8x16xf32> to vector<8xf32>
    %39 = vector.shape_cast %38 : vector<8xf32> to vector<8x1xf32>
    %40 = arith.addf %37, %39 : vector<8x1xf32>
    %41 = vector.broadcast %36 : vector<8x1xf32> to vector<8x8xf32>
    %42 = arith.mulf %41, %14 : vector<8x8xf32>
    %43 = arith.truncf %34 : vector<8x16xf32> to vector<8x16xbf16>
    %cst_21 = arith.constant dense<0.000000e+00> : vector<8x8xf32>
    %44 = tpu.matmul %43, %18, %cst_21 {dimension_numbers = #tpu.dot_dimension_numbers<[1], [0], [0], [1], [0, 0, 1, 1], [], []>} : vector<8x16xbf16>, vector<16x8xbf16>, vector<8x8xf32> -> vector<8x8xf32>
    %45 = arith.addf %42, %44 : vector<8x8xf32>
    %46 = vector.broadcast %40 : vector<8x1xf32> to vector<8x8xf32>
    %47 = arith.divf %45, %46 : vector<8x8xf32>
    %c0_22 = arith.constant 0 : index
    %c0_23 = arith.constant 0 : index
    %48 = vector.load %arg27[%c0_22, %c0_23] : memref<8x32xf32, #tpu.memory_space<vmem>>, vector<8x8xf32>
    tpu.vector_store %arg27[%c0_22, %c0_23], %47 {strides = array<i32>} : memref<8x32xf32, #tpu.memory_space<vmem>>, vector<8x8xf32>,
    %49 = vector.extract_strided_slice %9 {offsets = [0, 8], sizes = [8, 8], strides = [1, 1]} : vector<8x32xf32> to vector<8x8xf32>
    %50 = arith.truncf %49 : vector<8x8xf32> to vector<8x8xbf16>
    %cst_24 = arith.constant -1.000000e+30 : f32
    %51 = vector.broadcast %cst_24 : f32 to vector<8x1xf32>
    %cst_25 = arith.constant 0.000000e+00 : f32
    %52 = vector.broadcast %cst_25 : f32 to vector<8x1xf32>
    %cst_26 = arith.constant 0.000000e+00 : f32
    %53 = vector.broadcast %cst_26 : f32 to vector<8x8xf32>
    %c0_27 = arith.constant 0 : index
    %c1 = arith.constant 1 : index
    %c0_28 = arith.constant 0 : index
    %c0_29 = arith.constant 0 : index
    %54 = vector.load %arg4[%c0_27, %c1, %c0_28, %c0_29] : memref<1x4x16x8xbf16, #tpu.memory_space<vmem>>, vector<1x1x16x8xbf16>
    %55 = vector.shape_cast %54 : vector<1x1x16x8xbf16> to vector<16x8xbf16>
    %c0_30 = arith.constant 0 : index
    %c1_31 = arith.constant 1 : index
    %c0_32 = arith.constant 0 : index
    %c0_33 = arith.constant 0 : index
    %56 = vector.load %arg5[%c0_30, %c1_31, %c0_32, %c0_33] : memref<1x4x16x8xbf16, #tpu.memory_space<vmem>>, vector<1x1x16x8xbf16>
    %57 = vector.shape_cast %56 : vector<1x1x16x8xbf16> to vector<16x8xbf16>
    %cst_34 = arith.constant dense<0.000000e+00> : vector<8x16xf32>
    %58 = tpu.matmul %50, %55, %cst_34 {dimension_numbers = #tpu.dot_dimension_numbers<[1], [1], [0], [0], [0, 0, 1, 0], [], []>} : vector<8x8xbf16>, vector<16x8xbf16>, vector<8x16xf32> -> vector<8x16xf32>
    %59 = tpu.iota {dimensions = array<i32: 0>} : vector<8x16xi32>
    %60 = vector.broadcast %1 : i32 to vector<8x16xi32>
    %61 = arith.addi %60, %59 : vector<8x16xi32>
    %62 = tpu.iota {dimensions = array<i32: 1>} : vector<8x16xi32>
    %c0_i32_35 = arith.constant 0 : i32
    %63 = vector.broadcast %c0_i32_35 : i32 to vector<8x16xi32>
    %64 = arith.addi %63, %62 : vector<8x16xi32>
    %65 = arith.cmpi sle, %64, %61 : vector<8x16xi32>
    %cst_36 = arith.constant -1.000000e+09 : f32
    %66 = vector.broadcast %cst_36 : f32 to vector<8x16xf32>
    %67 = arith.select %65, %58, %66 : vector<8x16xi1>, vector<8x16xf32>
    %cst_37 = arith.constant dense<0xFF800000> : vector<8xf32>
    %68 = vector.multi_reduction <maximumf>, %67, %cst_37 [1] : vector<8x16xf32> to vector<8xf32>
    %69 = vector.shape_cast %68 : vector<8xf32> to vector<8x1xf32>
    %70 = arith.maximumf %51, %69 : vector<8x1xf32>
    %71 = vector.broadcast %70 : vector<8x1xf32> to vector<8x16xf32>
    %72 = arith.subf %67, %71 : vector<8x16xf32>
    %73 = math.exp %72 : vector<8x16xf32>
    %74 = arith.subf %51, %70 : vector<8x1xf32>
    %75 = math.exp %74 : vector<8x1xf32>
    %76 = arith.mulf %75, %52 : vector<8x1xf32>
    %cst_38 = arith.constant dense<0.000000e+00> : vector<8xf32>
    %77 = vector.multi_reduction <add>, %73, %cst_38 [1] : vector<8x16xf32> to vector<8xf32>
    %78 = vector.shape_cast %77 : vector<8xf32> to vector<8x1xf32>
    %79 = arith.addf %76, %78 : vector<8x1xf32>
    %80 = vector.broadcast %75 : vector<8x1xf32> to vector<8x8xf32>
    %81 = arith.mulf %80, %53 : vector<8x8xf32>
    %82 = arith.truncf %73 : vector<8x16xf32> to vector<8x16xbf16>
    %cst_39 = arith.constant dense<0.000000e+00> : vector<8x8xf32>
    %83 = tpu.matmul %82, %57, %cst_39 {dimension_numbers = #tpu.dot_dimension_numbers<[1], [0], [0], [1], [0, 0, 1, 1], [], []>} : vector<8x16xbf16>, vector<16x8xbf16>, vector<8x8xf32> -> vector<8x8xf32>
    %84 = arith.addf %81, %83 : vector<8x8xf32>
    %85 = vector.broadcast %79 : vector<8x1xf32> to vector<8x8xf32>
    %86 = arith.divf %84, %85 : vector<8x8xf32>
    %c0_40 = arith.constant 0 : index
    %c8 = arith.constant 8 : index
    %87 = vector.load %arg27[%c0_40, %c8] : memref<8x32xf32, #tpu.memory_space<vmem>>, vector<8x8xf32>
    tpu.vector_store %arg27[%c0_40, %c8], %86 {strides = array<i32>} : memref<8x32xf32, #tpu.memory_space<vmem>>, vector<8x8xf32>,
    %88 = vector.extract_strided_slice %9 {offsets = [0, 16], sizes = [8, 8], strides = [1, 1]} : vector<8x32xf32> to vector<8x8xf32>
    %89 = arith.truncf %88 : vector<8x8xf32> to vector<8x8xbf16>
    %cst_41 = arith.constant -1.000000e+30 : f32
    %90 = vector.broadcast %cst_41 : f32 to vector<8x1xf32>
    %cst_42 = arith.constant 0.000000e+00 : f32
    %91 = vector.broadcast %cst_42 : f32 to vector<8x1xf32>
    %cst_43 = arith.constant 0.000000e+00 : f32
    %92 = vector.broadcast %cst_43 : f32 to vector<8x8xf32>
    %c0_44 = arith.constant 0 : index
    %c2 = arith.constant 2 : index
    %c0_45 = arith.constant 0 : index
    %c0_46 = arith.constant 0 : index
    %93 = vector.load %arg4[%c0_44, %c2, %c0_45, %c0_46] : memref<1x4x16x8xbf16, #tpu.memory_space<vmem>>, vector<1x1x16x8xbf16>
    %94 = vector.shape_cast %93 : vector<1x1x16x8xbf16> to vector<16x8xbf16>
    %c0_47 = arith.constant 0 : index
    %c2_48 = arith.constant 2 : index
    %c0_49 = arith.constant 0 : index
    %c0_50 = arith.constant 0 : index
    %95 = vector.load %arg5[%c0_47, %c2_48, %c0_49, %c0_50] : memref<1x4x16x8xbf16, #tpu.memory_space<vmem>>, vector<1x1x16x8xbf16>
    %96 = vector.shape_cast %95 : vector<1x1x16x8xbf16> to vector<16x8xbf16>
    %cst_51 = arith.constant dense<0.000000e+00> : vector<8x16xf32>
    %97 = tpu.matmul %89, %94, %cst_51 {dimension_numbers = #tpu.dot_dimension_numbers<[1], [1], [0], [0], [0, 0, 1, 0], [], []>} : vector<8x8xbf16>, vector<16x8xbf16>, vector<8x16xf32> -> vector<8x16xf32>
    %98 = tpu.iota {dimensions = array<i32: 0>} : vector<8x16xi32>
    %99 = vector.broadcast %1 : i32 to vector<8x16xi32>
    %100 = arith.addi %99, %98 : vector<8x16xi32>
    %101 = tpu.iota {dimensions = array<i32: 1>} : vector<8x16xi32>
    %c0_i32_52 = arith.constant 0 : i32
    %102 = vector.broadcast %c0_i32_52 : i32 to vector<8x16xi32>
    %103 = arith.addi %102, %101 : vector<8x16xi32>
    %104 = arith.cmpi sle, %103, %100 : vector<8x16xi32>
    %cst_53 = arith.constant -1.000000e+09 : f32
    %105 = vector.broadcast %cst_53 : f32 to vector<8x16xf32>
    %106 = arith.select %104, %97, %105 : vector<8x16xi1>, vector<8x16xf32>
    %cst_54 = arith.constant dense<0xFF800000> : vector<8xf32>
    %107 = vector.multi_reduction <maximumf>, %106, %cst_54 [1] : vector<8x16xf32> to vector<8xf32>
    %108 = vector.shape_cast %107 : vector<8xf32> to vector<8x1xf32>
    %109 = arith.maximumf %90, %108 : vector<8x1xf32>
    %110 = vector.broadcast %109 : vector<8x1xf32> to vector<8x16xf32>
    %111 = arith.subf %106, %110 : vector<8x16xf32>
    %112 = math.exp %111 : vector<8x16xf32>
    %113 = arith.subf %90, %109 : vector<8x1xf32>
    %114 = math.exp %113 : vector<8x1xf32>
    %115 = arith.mulf %114, %91 : vector<8x1xf32>
    %cst_55 = arith.constant dense<0.000000e+00> : vector<8xf32>
    %116 = vector.multi_reduction <add>, %112, %cst_55 [1] : vector<8x16xf32> to vector<8xf32>
    %117 = vector.shape_cast %116 : vector<8xf32> to vector<8x1xf32>
    %118 = arith.addf %115, %117 : vector<8x1xf32>
    %119 = vector.broadcast %114 : vector<8x1xf32> to vector<8x8xf32>
    %120 = arith.mulf %119, %92 : vector<8x8xf32>
    %121 = arith.truncf %112 : vector<8x16xf32> to vector<8x16xbf16>
    %cst_56 = arith.constant dense<0.000000e+00> : vector<8x8xf32>
    %122 = tpu.matmul %121, %96, %cst_56 {dimension_numbers = #tpu.dot_dimension_numbers<[1], [0], [0], [1], [0, 0, 1, 1], [], []>} : vector<8x16xbf16>, vector<16x8xbf16>, vector<8x8xf32> -> vector<8x8xf32>
    %123 = arith.addf %120, %122 : vector<8x8xf32>
    %124 = vector.broadcast %118 : vector<8x1xf32> to vector<8x8xf32>
    %125 = arith.divf %123, %124 : vector<8x8xf32>
    %c0_57 = arith.constant 0 : index
    %c16 = arith.constant 16 : index
    %126 = vector.load %arg27[%c0_57, %c16] : memref<8x32xf32, #tpu.memory_space<vmem>>, vector<8x8xf32>
    tpu.vector_store %arg27[%c0_57, %c16], %125 {strides = array<i32>} : memref<8x32xf32, #tpu.memory_space<vmem>>, vector<8x8xf32>,
    %127 = vector.extract_strided_slice %9 {offsets = [0, 24], sizes = [8, 8], strides = [1, 1]} : vector<8x32xf32> to vector<8x8xf32>
    %128 = arith.truncf %127 : vector<8x8xf32> to vector<8x8xbf16>
    %cst_58 = arith.constant -1.000000e+30 : f32
    %129 = vector.broadcast %cst_58 : f32 to vector<8x1xf32>
    %cst_59 = arith.constant 0.000000e+00 : f32
    %130 = vector.broadcast %cst_59 : f32 to vector<8x1xf32>
    %cst_60 = arith.constant 0.000000e+00 : f32
    %131 = vector.broadcast %cst_60 : f32 to vector<8x8xf32>
    %c0_61 = arith.constant 0 : index
    %c3 = arith.constant 3 : index
    %c0_62 = arith.constant 0 : index
    %c0_63 = arith.constant 0 : index
    %132 = vector.load %arg4[%c0_61, %c3, %c0_62, %c0_63] : memref<1x4x16x8xbf16, #tpu.memory_space<vmem>>, vector<1x1x16x8xbf16>
    %133 = vector.shape_cast %132 : vector<1x1x16x8xbf16> to vector<16x8xbf16>
    %c0_64 = arith.constant 0 : index
    %c3_65 = arith.constant 3 : index
    %c0_66 = arith.constant 0 : index
    %c0_67 = arith.constant 0 : index
    %134 = vector.load %arg5[%c0_64, %c3_65, %c0_66, %c0_67] : memref<1x4x16x8xbf16, #tpu.memory_space<vmem>>, vector<1x1x16x8xbf16>
    %135 = vector.shape_cast %134 : vector<1x1x16x8xbf16> to vector<16x8xbf16>
    %cst_68 = arith.constant dense<0.000000e+00> : vector<8x16xf32>
    %136 = tpu.matmul %128, %133, %cst_68 {dimension_numbers = #tpu.dot_dimension_numbers<[1], [1], [0], [0], [0, 0, 1, 0], [], []>} : vector<8x8xbf16>, vector<16x8xbf16>, vector<8x16xf32> -> vector<8x16xf32>
    %137 = tpu.iota {dimensions = array<i32: 0>} : vector<8x16xi32>
    %138 = vector.broadcast %1 : i32 to vector<8x16xi32>
    %139 = arith.addi %138, %137 : vector<8x16xi32>
    %140 = tpu.iota {dimensions = array<i32: 1>} : vector<8x16xi32>
    %c0_i32_69 = arith.constant 0 : i32
    %141 = vector.broadcast %c0_i32_69 : i32 to vector<8x16xi32>
    %142 = arith.addi %141, %140 : vector<8x16xi32>
    %143 = arith.cmpi sle, %142, %139 : vector<8x16xi32>
    %cst_70 = arith.constant -1.000000e+09 : f32
    %144 = vector.broadcast %cst_70 : f32 to vector<8x16xf32>
    %145 = arith.select %143, %136, %144 : vector<8x16xi1>, vector<8x16xf32>
    %cst_71 = arith.constant dense<0xFF800000> : vector<8xf32>
    %146 = vector.multi_reduction <maximumf>, %145, %cst_71 [1] : vector<8x16xf32> to vector<8xf32>
    %147 = vector.shape_cast %146 : vector<8xf32> to vector<8x1xf32>
    %148 = arith.maximumf %129, %147 : vector<8x1xf32>
    %149 = vector.broadcast %148 : vector<8x1xf32> to vector<8x16xf32>
    %150 = arith.subf %145, %149 : vector<8x16xf32>
    %151 = math.exp %150 : vector<8x16xf32>
    %152 = arith.subf %129, %148 : vector<8x1xf32>
    %153 = math.exp %152 : vector<8x1xf32>
    %154 = arith.mulf %153, %130 : vector<8x1xf32>
    %cst_72 = arith.constant dense<0.000000e+00> : vector<8xf32>
    %155 = vector.multi_reduction <add>, %151, %cst_72 [1] : vector<8x16xf32> to vector<8xf32>
    %156 = vector.shape_cast %155 : vector<8xf32> to vector<8x1xf32>
    %157 = arith.addf %154, %156 : vector<8x1xf32>
    %158 = vector.broadcast %153 : vector<8x1xf32> to vector<8x8xf32>
    %159 = arith.mulf %158, %131 : vector<8x8xf32>
    %160 = arith.truncf %151 : vector<8x16xf32> to vector<8x16xbf16>
    %cst_73 = arith.constant dense<0.000000e+00> : vector<8x8xf32>
    %161 = tpu.matmul %160, %135, %cst_73 {dimension_numbers = #tpu.dot_dimension_numbers<[1], [0], [0], [1], [0, 0, 1, 1], [], []>} : vector<8x16xbf16>, vector<16x8xbf16>, vector<8x8xf32> -> vector<8x8xf32>
    %162 = arith.addf %159, %161 : vector<8x8xf32>
    %163 = vector.broadcast %157 : vector<8x1xf32> to vector<8x8xf32>
    %164 = arith.divf %162, %163 : vector<8x8xf32>
    %c0_74 = arith.constant 0 : index
    %c24 = arith.constant 24 : index
    %165 = vector.load %arg27[%c0_74, %c24] : memref<8x32xf32, #tpu.memory_space<vmem>>, vector<8x8xf32>
    tpu.vector_store %arg27[%c0_74, %c24], %164 {strides = array<i32>} : memref<8x32xf32, #tpu.memory_space<vmem>>, vector<8x8xf32>,
    %c0_75 = arith.constant 0 : index
    %c0_76 = arith.constant 0 : index
    %166 = vector.load %arg27[%c0_75, %c0_76] : memref<8x32xf32, #tpu.memory_space<vmem>>, vector<8x32xf32>
    %167 = arith.truncf %166 : vector<8x32xf32> to vector<8x32xbf16>
    %c0_77 = arith.constant 0 : index
    %c0_78 = arith.constant 0 : index
    %168 = vector.load %arg10[%c0_77, %c0_78] : memref<32x32xbf16, #tpu.memory_space<vmem>>, vector<32x32xbf16>
    %cst_79 = arith.constant dense<0.000000e+00> : vector<8x32xf32>
    %169 = tpu.matmul %167, %168, %cst_79 {dimension_numbers = #tpu.dot_dimension_numbers<[1], [0], [0], [1], [0, 0, 1, 1], [], []>} : vector<8x32xbf16>, vector<32x32xbf16>, vector<8x32xf32> -> vector<8x32xf32>
    %c0_80 = arith.constant 0 : index
    %c0_81 = arith.constant 0 : index
    %170 = vector.load %arg11[%c0_80, %c0_81] : memref<1x32xf32, #tpu.memory_space<vmem>>, vector<1x32xf32>
    %171 = vector.broadcast %170 : vector<1x32xf32> to vector<8x32xf32>
    %172 = arith.addf %169, %171 : vector<8x32xf32>
    %173 = arith.addf %172, %3 : vector<8x32xf32>
    %c0_82 = arith.constant 0 : index
    %c0_83 = arith.constant 0 : index
    %174 = vector.load %arg12[%c0_82, %c0_83] : memref<1x32xf32, #tpu.memory_space<vmem>>, vector<1x32xf32>
    %c0_84 = arith.constant 0 : index
    %c0_85 = arith.constant 0 : index
    %175 = vector.load %arg13[%c0_84, %c0_85] : memref<1x32xf32, #tpu.memory_space<vmem>>, vector<1x32xf32>
    %cst_86 = arith.constant dense<0.000000e+00> : vector<8xf32>
    %176 = vector.multi_reduction <add>, %173, %cst_86 [1] : vector<8x32xf32> to vector<8xf32>
    %177 = vector.shape_cast %176 : vector<8xf32> to vector<8x1xf32>
    %cst_87 = arith.constant 3.200000e+01 : f32
    %178 = vector.broadcast %cst_87 : f32 to vector<8x1xf32>
    %179 = arith.divf %177, %178 : vector<8x1xf32>
    %180 = vector.broadcast %179 : vector<8x1xf32> to vector<8x32xf32>
    %181 = arith.subf %173, %180 : vector<8x32xf32>
    %182 = arith.mulf %181, %181 : vector<8x32xf32>
    %cst_88 = arith.constant dense<0.000000e+00> : vector<8xf32>
    %183 = vector.multi_reduction <add>, %182, %cst_88 [1] : vector<8x32xf32> to vector<8xf32>
    %184 = vector.shape_cast %183 : vector<8xf32> to vector<8x1xf32>
    %cst_89 = arith.constant 3.200000e+01 : f32
    %185 = vector.broadcast %cst_89 : f32 to vector<8x1xf32>
    %186 = arith.divf %184, %185 : vector<8x1xf32>
    %cst_90 = arith.constant 9.99999974E-6 : f32
    %187 = vector.broadcast %cst_90 : f32 to vector<8x1xf32>
    %188 = arith.addf %186, %187 : vector<8x1xf32>
    %189 = math.rsqrt %188 : vector<8x1xf32>
    %190 = vector.broadcast %189 : vector<8x1xf32> to vector<8x32xf32>
    %191 = arith.mulf %181, %190 : vector<8x32xf32>
    %192 = vector.broadcast %174 : vector<1x32xf32> to vector<8x32xf32>
    %193 = arith.mulf %191, %192 : vector<8x32xf32>
    %194 = vector.broadcast %175 : vector<1x32xf32> to vector<8x32xf32>
    %195 = arith.addf %193, %194 : vector<8x32xf32>
    %196 = arith.truncf %195 : vector<8x32xf32> to vector<8x32xbf16>
    %c0_91 = arith.constant 0 : index
    %c0_92 = arith.constant 0 : index
    %197 = vector.load %arg14[%c0_91, %c0_92] : memref<32x32xbf16, #tpu.memory_space<vmem>>, vector<32x32xbf16>
    %cst_93 = arith.constant dense<0.000000e+00> : vector<8x32xf32>
    %198 = tpu.matmul %196, %197, %cst_93 {dimension_numbers = #tpu.dot_dimension_numbers<[1], [0], [0], [1], [0, 0, 1, 1], [], []>} : vector<8x32xbf16>, vector<32x32xbf16>, vector<8x32xf32> -> vector<8x32xf32>
    %c0_94 = arith.constant 0 : index
    %c0_95 = arith.constant 0 : index
    %199 = vector.load %arg15[%c0_94, %c0_95] : memref<1x32xf32, #tpu.memory_space<vmem>>, vector<1x32xf32>
    %200 = vector.broadcast %199 : vector<1x32xf32> to vector<8x32xf32>
    %201 = arith.addf %198, %200 : vector<8x32xf32>
    %202 = vector.extract_strided_slice %201 {offsets = [0, 0], sizes = [8, 8], strides = [1, 1]} : vector<8x32xf32> to vector<8x8xf32>
    %203 = arith.truncf %202 : vector<8x8xf32> to vector<8x8xbf16>
    %cst_96 = arith.constant -1.000000e+30 : f32
    %204 = vector.broadcast %cst_96 : f32 to vector<8x1xf32>
    %cst_97 = arith.constant 0.000000e+00 : f32
    %205 = vector.broadcast %cst_97 : f32 to vector<8x1xf32>
    %cst_98 = arith.constant 0.000000e+00 : f32
    %206 = vector.broadcast %cst_98 : f32 to vector<8x8xf32>
    %c0_99 = arith.constant 0 : index
    %c0_100 = arith.constant 0 : index
    %c0_101 = arith.constant 0 : index
    %c0_102 = arith.constant 0 : index
    %207 = vector.load %arg6[%c0_99, %c0_100, %c0_101, %c0_102] : memref<1x4x16x8xbf16, #tpu.memory_space<vmem>>, vector<1x1x16x8xbf16>
    %208 = vector.shape_cast %207 : vector<1x1x16x8xbf16> to vector<16x8xbf16>
    %c0_103 = arith.constant 0 : index
    %c0_104 = arith.constant 0 : index
    %c0_105 = arith.constant 0 : index
    %c0_106 = arith.constant 0 : index
    %209 = vector.load %arg7[%c0_103, %c0_104, %c0_105, %c0_106] : memref<1x4x16x8xbf16, #tpu.memory_space<vmem>>, vector<1x1x16x8xbf16>
    %210 = vector.shape_cast %209 : vector<1x1x16x8xbf16> to vector<16x8xbf16>
    %cst_107 = arith.constant dense<0.000000e+00> : vector<8x16xf32>
    %211 = tpu.matmul %203, %208, %cst_107 {dimension_numbers = #tpu.dot_dimension_numbers<[1], [1], [0], [0], [0, 0, 1, 0], [], []>} : vector<8x8xbf16>, vector<16x8xbf16>, vector<8x16xf32> -> vector<8x16xf32>
    %c0_108 = arith.constant 0 : index
    %c0_109 = arith.constant 0 : index
    %c0_110 = arith.constant 0 : index
    %212 = vector.load %arg3[%c0_108, %c0_109, %c0_110] : memref<1x1x16xf32, #tpu.memory_space<vmem>>, vector<1x1x16xf32>
    %213 = vector.shape_cast %212 : vector<1x1x16xf32> to vector<1x16xf32>
    %cst_111 = arith.constant 5.000000e-01 : f32
    %214 = vector.broadcast %cst_111 : f32 to vector<1x16xf32>
    %215 = arith.cmpf ogt, %213, %214 : vector<1x16xf32>
    %cst_112 = arith.constant -1.000000e+09 : f32
    %216 = vector.shape_cast %215 : vector<1x16xi1> to vector<1x16xi1>
    %217 = vector.broadcast %216 : vector<1x16xi1> to vector<8x16xi1>
    %218 = vector.broadcast %cst_112 : f32 to vector<8x16xf32>
    %219 = arith.select %217, %211, %218 : vector<8x16xi1>, vector<8x16xf32>
    %cst_113 = arith.constant dense<0xFF800000> : vector<8xf32>
    %220 = vector.multi_reduction <maximumf>, %219, %cst_113 [1] : vector<8x16xf32> to vector<8xf32>
    %221 = vector.shape_cast %220 : vector<8xf32> to vector<8x1xf32>
    %222 = arith.maximumf %204, %221 : vector<8x1xf32>
    %223 = vector.broadcast %222 : vector<8x1xf32> to vector<8x16xf32>
    %224 = arith.subf %219, %223 : vector<8x16xf32>
    %225 = math.exp %224 : vector<8x16xf32>
    %226 = arith.subf %204, %222 : vector<8x1xf32>
    %227 = math.exp %226 : vector<8x1xf32>
    %228 = arith.mulf %227, %205 : vector<8x1xf32>
    %cst_114 = arith.constant dense<0.000000e+00> : vector<8xf32>
    %229 = vector.multi_reduction <add>, %225, %cst_114 [1] : vector<8x16xf32> to vector<8xf32>
    %230 = vector.shape_cast %229 : vector<8xf32> to vector<8x1xf32>
    %231 = arith.addf %228, %230 : vector<8x1xf32>
    %232 = vector.broadcast %227 : vector<8x1xf32> to vector<8x8xf32>
    %233 = arith.mulf %232, %206 : vector<8x8xf32>
    %234 = arith.truncf %225 : vector<8x16xf32> to vector<8x16xbf16>
    %cst_115 = arith.constant dense<0.000000e+00> : vector<8x8xf32>
    %235 = tpu.matmul %234, %210, %cst_115 {dimension_numbers = #tpu.dot_dimension_numbers<[1], [0], [0], [1], [0, 0, 1, 1], [], []>} : vector<8x16xbf16>, vector<16x8xbf16>, vector<8x8xf32> -> vector<8x8xf32>
    %236 = arith.addf %233, %235 : vector<8x8xf32>
    %237 = vector.broadcast %231 : vector<8x1xf32> to vector<8x8xf32>
    %238 = arith.divf %236, %237 : vector<8x8xf32>
    %c0_116 = arith.constant 0 : index
    %c0_117 = arith.constant 0 : index
    %239 = vector.load %arg27[%c0_116, %c0_117] : memref<8x32xf32, #tpu.memory_space<vmem>>, vector<8x8xf32>
    tpu.vector_store %arg27[%c0_116, %c0_117], %238 {strides = array<i32>} : memref<8x32xf32, #tpu.memory_space<vmem>>, vector<8x8xf32>,
    %240 = vector.extract_strided_slice %201 {offsets = [0, 8], sizes = [8, 8], strides = [1, 1]} : vector<8x32xf32> to vector<8x8xf32>
    %241 = arith.truncf %240 : vector<8x8xf32> to vector<8x8xbf16>
    %cst_118 = arith.constant -1.000000e+30 : f32
    %242 = vector.broadcast %cst_118 : f32 to vector<8x1xf32>
    %cst_119 = arith.constant 0.000000e+00 : f32
    %243 = vector.broadcast %cst_119 : f32 to vector<8x1xf32>
    %cst_120 = arith.constant 0.000000e+00 : f32
    %244 = vector.broadcast %cst_120 : f32 to vector<8x8xf32>
    %c0_121 = arith.constant 0 : index
    %c1_122 = arith.constant 1 : index
    %c0_123 = arith.constant 0 : index
    %c0_124 = arith.constant 0 : index
    %245 = vector.load %arg6[%c0_121, %c1_122, %c0_123, %c0_124] : memref<1x4x16x8xbf16, #tpu.memory_space<vmem>>, vector<1x1x16x8xbf16>
    %246 = vector.shape_cast %245 : vector<1x1x16x8xbf16> to vector<16x8xbf16>
    %c0_125 = arith.constant 0 : index
    %c1_126 = arith.constant 1 : index
    %c0_127 = arith.constant 0 : index
    %c0_128 = arith.constant 0 : index
    %247 = vector.load %arg7[%c0_125, %c1_126, %c0_127, %c0_128] : memref<1x4x16x8xbf16, #tpu.memory_space<vmem>>, vector<1x1x16x8xbf16>
    %248 = vector.shape_cast %247 : vector<1x1x16x8xbf16> to vector<16x8xbf16>
    %cst_129 = arith.constant dense<0.000000e+00> : vector<8x16xf32>
    %249 = tpu.matmul %241, %246, %cst_129 {dimension_numbers = #tpu.dot_dimension_numbers<[1], [1], [0], [0], [0, 0, 1, 0], [], []>} : vector<8x8xbf16>, vector<16x8xbf16>, vector<8x16xf32> -> vector<8x16xf32>
    %c0_130 = arith.constant 0 : index
    %c0_131 = arith.constant 0 : index
    %c0_132 = arith.constant 0 : index
    %250 = vector.load %arg3[%c0_130, %c0_131, %c0_132] : memref<1x1x16xf32, #tpu.memory_space<vmem>>, vector<1x1x16xf32>
    %251 = vector.shape_cast %250 : vector<1x1x16xf32> to vector<1x16xf32>
    %cst_133 = arith.constant 5.000000e-01 : f32
    %252 = vector.broadcast %cst_133 : f32 to vector<1x16xf32>
    %253 = arith.cmpf ogt, %251, %252 : vector<1x16xf32>
    %cst_134 = arith.constant -1.000000e+09 : f32
    %254 = vector.shape_cast %253 : vector<1x16xi1> to vector<1x16xi1>
    %255 = vector.broadcast %254 : vector<1x16xi1> to vector<8x16xi1>
    %256 = vector.broadcast %cst_134 : f32 to vector<8x16xf32>
    %257 = arith.select %255, %249, %256 : vector<8x16xi1>, vector<8x16xf32>
    %cst_135 = arith.constant dense<0xFF800000> : vector<8xf32>
    %258 = vector.multi_reduction <maximumf>, %257, %cst_135 [1] : vector<8x16xf32> to vector<8xf32>
    %259 = vector.shape_cast %258 : vector<8xf32> to vector<8x1xf32>
    %260 = arith.maximumf %242, %259 : vector<8x1xf32>
    %261 = vector.broadcast %260 : vector<8x1xf32> to vector<8x16xf32>
    %262 = arith.subf %257, %261 : vector<8x16xf32>
    %263 = math.exp %262 : vector<8x16xf32>
    %264 = arith.subf %242, %260 : vector<8x1xf32>
    %265 = math.exp %264 : vector<8x1xf32>
    %266 = arith.mulf %265, %243 : vector<8x1xf32>
    %cst_136 = arith.constant dense<0.000000e+00> : vector<8xf32>
    %267 = vector.multi_reduction <add>, %263, %cst_136 [1] : vector<8x16xf32> to vector<8xf32>
    %268 = vector.shape_cast %267 : vector<8xf32> to vector<8x1xf32>
    %269 = arith.addf %266, %268 : vector<8x1xf32>
    %270 = vector.broadcast %265 : vector<8x1xf32> to vector<8x8xf32>
    %271 = arith.mulf %270, %244 : vector<8x8xf32>
    %272 = arith.truncf %263 : vector<8x16xf32> to vector<8x16xbf16>
    %cst_137 = arith.constant dense<0.000000e+00> : vector<8x8xf32>
    %273 = tpu.matmul %272, %248, %cst_137 {dimension_numbers = #tpu.dot_dimension_numbers<[1], [0], [0], [1], [0, 0, 1, 1], [], []>} : vector<8x16xbf16>, vector<16x8xbf16>, vector<8x8xf32> -> vector<8x8xf32>
    %274 = arith.addf %271, %273 : vector<8x8xf32>
    %275 = vector.broadcast %269 : vector<8x1xf32> to vector<8x8xf32>
    %276 = arith.divf %274, %275 : vector<8x8xf32>
    %c0_138 = arith.constant 0 : index
    %c8_139 = arith.constant 8 : index
    %277 = vector.load %arg27[%c0_138, %c8_139] : memref<8x32xf32, #tpu.memory_space<vmem>>, vector<8x8xf32>
    tpu.vector_store %arg27[%c0_138, %c8_139], %276 {strides = array<i32>} : memref<8x32xf32, #tpu.memory_space<vmem>>, vector<8x8xf32>,
    %278 = vector.extract_strided_slice %201 {offsets = [0, 16], sizes = [8, 8], strides = [1, 1]} : vector<8x32xf32> to vector<8x8xf32>
    %279 = arith.truncf %278 : vector<8x8xf32> to vector<8x8xbf16>
    %cst_140 = arith.constant -1.000000e+30 : f32
    %280 = vector.broadcast %cst_140 : f32 to vector<8x1xf32>
    %cst_141 = arith.constant 0.000000e+00 : f32
    %281 = vector.broadcast %cst_141 : f32 to vector<8x1xf32>
    %cst_142 = arith.constant 0.000000e+00 : f32
    %282 = vector.broadcast %cst_142 : f32 to vector<8x8xf32>
    %c0_143 = arith.constant 0 : index
    %c2_144 = arith.constant 2 : index
    %c0_145 = arith.constant 0 : index
    %c0_146 = arith.constant 0 : index
    %283 = vector.load %arg6[%c0_143, %c2_144, %c0_145, %c0_146] : memref<1x4x16x8xbf16, #tpu.memory_space<vmem>>, vector<1x1x16x8xbf16>
    %284 = vector.shape_cast %283 : vector<1x1x16x8xbf16> to vector<16x8xbf16>
    %c0_147 = arith.constant 0 : index
    %c2_148 = arith.constant 2 : index
    %c0_149 = arith.constant 0 : index
    %c0_150 = arith.constant 0 : index
    %285 = vector.load %arg7[%c0_147, %c2_148, %c0_149, %c0_150] : memref<1x4x16x8xbf16, #tpu.memory_space<vmem>>, vector<1x1x16x8xbf16>
    %286 = vector.shape_cast %285 : vector<1x1x16x8xbf16> to vector<16x8xbf16>
    %cst_151 = arith.constant dense<0.000000e+00> : vector<8x16xf32>
    %287 = tpu.matmul %279, %284, %cst_151 {dimension_numbers = #tpu.dot_dimension_numbers<[1], [1], [0], [0], [0, 0, 1, 0], [], []>} : vector<8x8xbf16>, vector<16x8xbf16>, vector<8x16xf32> -> vector<8x16xf32>
    %c0_152 = arith.constant 0 : index
    %c0_153 = arith.constant 0 : index
    %c0_154 = arith.constant 0 : index
    %288 = vector.load %arg3[%c0_152, %c0_153, %c0_154] : memref<1x1x16xf32, #tpu.memory_space<vmem>>, vector<1x1x16xf32>
    %289 = vector.shape_cast %288 : vector<1x1x16xf32> to vector<1x16xf32>
    %cst_155 = arith.constant 5.000000e-01 : f32
    %290 = vector.broadcast %cst_155 : f32 to vector<1x16xf32>
    %291 = arith.cmpf ogt, %289, %290 : vector<1x16xf32>
    %cst_156 = arith.constant -1.000000e+09 : f32
    %292 = vector.shape_cast %291 : vector<1x16xi1> to vector<1x16xi1>
    %293 = vector.broadcast %292 : vector<1x16xi1> to vector<8x16xi1>
    %294 = vector.broadcast %cst_156 : f32 to vector<8x16xf32>
    %295 = arith.select %293, %287, %294 : vector<8x16xi1>, vector<8x16xf32>
    %cst_157 = arith.constant dense<0xFF800000> : vector<8xf32>
    %296 = vector.multi_reduction <maximumf>, %295, %cst_157 [1] : vector<8x16xf32> to vector<8xf32>
    %297 = vector.shape_cast %296 : vector<8xf32> to vector<8x1xf32>
    %298 = arith.maximumf %280, %297 : vector<8x1xf32>
    %299 = vector.broadcast %298 : vector<8x1xf32> to vector<8x16xf32>
    %300 = arith.subf %295, %299 : vector<8x16xf32>
    %301 = math.exp %300 : vector<8x16xf32>
    %302 = arith.subf %280, %298 : vector<8x1xf32>
    %303 = math.exp %302 : vector<8x1xf32>
    %304 = arith.mulf %303, %281 : vector<8x1xf32>
    %cst_158 = arith.constant dense<0.000000e+00> : vector<8xf32>
    %305 = vector.multi_reduction <add>, %301, %cst_158 [1] : vector<8x16xf32> to vector<8xf32>
    %306 = vector.shape_cast %305 : vector<8xf32> to vector<8x1xf32>
    %307 = arith.addf %304, %306 : vector<8x1xf32>
    %308 = vector.broadcast %303 : vector<8x1xf32> to vector<8x8xf32>
    %309 = arith.mulf %308, %282 : vector<8x8xf32>
    %310 = arith.truncf %301 : vector<8x16xf32> to vector<8x16xbf16>
    %cst_159 = arith.constant dense<0.000000e+00> : vector<8x8xf32>
    %311 = tpu.matmul %310, %286, %cst_159 {dimension_numbers = #tpu.dot_dimension_numbers<[1], [0], [0], [1], [0, 0, 1, 1], [], []>} : vector<8x16xbf16>, vector<16x8xbf16>, vector<8x8xf32> -> vector<8x8xf32>
    %312 = arith.addf %309, %311 : vector<8x8xf32>
    %313 = vector.broadcast %307 : vector<8x1xf32> to vector<8x8xf32>
    %314 = arith.divf %312, %313 : vector<8x8xf32>
    %c0_160 = arith.constant 0 : index
    %c16_161 = arith.constant 16 : index
    %315 = vector.load %arg27[%c0_160, %c16_161] : memref<8x32xf32, #tpu.memory_space<vmem>>, vector<8x8xf32>
    tpu.vector_store %arg27[%c0_160, %c16_161], %314 {strides = array<i32>} : memref<8x32xf32, #tpu.memory_space<vmem>>, vector<8x8xf32>,
    %316 = vector.extract_strided_slice %201 {offsets = [0, 24], sizes = [8, 8], strides = [1, 1]} : vector<8x32xf32> to vector<8x8xf32>
    %317 = arith.truncf %316 : vector<8x8xf32> to vector<8x8xbf16>
    %cst_162 = arith.constant -1.000000e+30 : f32
    %318 = vector.broadcast %cst_162 : f32 to vector<8x1xf32>
    %cst_163 = arith.constant 0.000000e+00 : f32
    %319 = vector.broadcast %cst_163 : f32 to vector<8x1xf32>
    %cst_164 = arith.constant 0.000000e+00 : f32
    %320 = vector.broadcast %cst_164 : f32 to vector<8x8xf32>
    %c0_165 = arith.constant 0 : index
    %c3_166 = arith.constant 3 : index
    %c0_167 = arith.constant 0 : index
    %c0_168 = arith.constant 0 : index
    %321 = vector.load %arg6[%c0_165, %c3_166, %c0_167, %c0_168] : memref<1x4x16x8xbf16, #tpu.memory_space<vmem>>, vector<1x1x16x8xbf16>
    %322 = vector.shape_cast %321 : vector<1x1x16x8xbf16> to vector<16x8xbf16>
    %c0_169 = arith.constant 0 : index
    %c3_170 = arith.constant 3 : index
    %c0_171 = arith.constant 0 : index
    %c0_172 = arith.constant 0 : index
    %323 = vector.load %arg7[%c0_169, %c3_170, %c0_171, %c0_172] : memref<1x4x16x8xbf16, #tpu.memory_space<vmem>>, vector<1x1x16x8xbf16>
    %324 = vector.shape_cast %323 : vector<1x1x16x8xbf16> to vector<16x8xbf16>
    %cst_173 = arith.constant dense<0.000000e+00> : vector<8x16xf32>
    %325 = tpu.matmul %317, %322, %cst_173 {dimension_numbers = #tpu.dot_dimension_numbers<[1], [1], [0], [0], [0, 0, 1, 0], [], []>} : vector<8x8xbf16>, vector<16x8xbf16>, vector<8x16xf32> -> vector<8x16xf32>
    %c0_174 = arith.constant 0 : index
    %c0_175 = arith.constant 0 : index
    %c0_176 = arith.constant 0 : index
    %326 = vector.load %arg3[%c0_174, %c0_175, %c0_176] : memref<1x1x16xf32, #tpu.memory_space<vmem>>, vector<1x1x16xf32>
    %327 = vector.shape_cast %326 : vector<1x1x16xf32> to vector<1x16xf32>
    %cst_177 = arith.constant 5.000000e-01 : f32
    %328 = vector.broadcast %cst_177 : f32 to vector<1x16xf32>
    %329 = arith.cmpf ogt, %327, %328 : vector<1x16xf32>
    %cst_178 = arith.constant -1.000000e+09 : f32
    %330 = vector.shape_cast %329 : vector<1x16xi1> to vector<1x16xi1>
    %331 = vector.broadcast %330 : vector<1x16xi1> to vector<8x16xi1>
    %332 = vector.broadcast %cst_178 : f32 to vector<8x16xf32>
    %333 = arith.select %331, %325, %332 : vector<8x16xi1>, vector<8x16xf32>
    %cst_179 = arith.constant dense<0xFF800000> : vector<8xf32>
    %334 = vector.multi_reduction <maximumf>, %333, %cst_179 [1] : vector<8x16xf32> to vector<8xf32>
    %335 = vector.shape_cast %334 : vector<8xf32> to vector<8x1xf32>
    %336 = arith.maximumf %318, %335 : vector<8x1xf32>
    %337 = vector.broadcast %336 : vector<8x1xf32> to vector<8x16xf32>
    %338 = arith.subf %333, %337 : vector<8x16xf32>
    %339 = math.exp %338 : vector<8x16xf32>
    %340 = arith.subf %318, %336 : vector<8x1xf32>
    %341 = math.exp %340 : vector<8x1xf32>
    %342 = arith.mulf %341, %319 : vector<8x1xf32>
    %cst_180 = arith.constant dense<0.000000e+00> : vector<8xf32>
    %343 = vector.multi_reduction <add>, %339, %cst_180 [1] : vector<8x16xf32> to vector<8xf32>
    %344 = vector.shape_cast %343 : vector<8xf32> to vector<8x1xf32>
    %345 = arith.addf %342, %344 : vector<8x1xf32>
    %346 = vector.broadcast %341 : vector<8x1xf32> to vector<8x8xf32>
    %347 = arith.mulf %346, %320 : vector<8x8xf32>
    %348 = arith.truncf %339 : vector<8x16xf32> to vector<8x16xbf16>
    %cst_181 = arith.constant dense<0.000000e+00> : vector<8x8xf32>
    %349 = tpu.matmul %348, %324, %cst_181 {dimension_numbers = #tpu.dot_dimension_numbers<[1], [0], [0], [1], [0, 0, 1, 1], [], []>} : vector<8x16xbf16>, vector<16x8xbf16>, vector<8x8xf32> -> vector<8x8xf32>
    %350 = arith.addf %347, %349 : vector<8x8xf32>
    %351 = vector.broadcast %345 : vector<8x1xf32> to vector<8x8xf32>
    %352 = arith.divf %350, %351 : vector<8x8xf32>
    %c0_182 = arith.constant 0 : index
    %c24_183 = arith.constant 24 : index
    %353 = vector.load %arg27[%c0_182, %c24_183] : memref<8x32xf32, #tpu.memory_space<vmem>>, vector<8x8xf32>
    tpu.vector_store %arg27[%c0_182, %c24_183], %352 {strides = array<i32>} : memref<8x32xf32, #tpu.memory_space<vmem>>, vector<8x8xf32>,
    %c0_184 = arith.constant 0 : index
    %c0_185 = arith.constant 0 : index
    %354 = vector.load %arg27[%c0_184, %c0_185] : memref<8x32xf32, #tpu.memory_space<vmem>>, vector<8x32xf32>
    %355 = arith.truncf %354 : vector<8x32xf32> to vector<8x32xbf16>
    %c0_186 = arith.constant 0 : index
    %c0_187 = arith.constant 0 : index
    %356 = vector.load %arg16[%c0_186, %c0_187] : memref<32x32xbf16, #tpu.memory_space<vmem>>, vector<32x32xbf16>
    %cst_188 = arith.constant dense<0.000000e+00> : vector<8x32xf32>
    %357 = tpu.matmul %355, %356, %cst_188 {dimension_numbers = #tpu.dot_dimension_numbers<[1], [0], [0], [1], [0, 0, 1, 1], [], []>} : vector<8x32xbf16>, vector<32x32xbf16>, vector<8x32xf32> -> vector<8x32xf32>
    %c0_189 = arith.constant 0 : index
    %c0_190 = arith.constant 0 : index
    %358 = vector.load %arg17[%c0_189, %c0_190] : memref<1x32xf32, #tpu.memory_space<vmem>>, vector<1x32xf32>
    %359 = vector.broadcast %358 : vector<1x32xf32> to vector<8x32xf32>
    %360 = arith.addf %357, %359 : vector<8x32xf32>
    %361 = arith.addf %360, %195 : vector<8x32xf32>
    %c0_191 = arith.constant 0 : index
    %c0_192 = arith.constant 0 : index
    %362 = vector.load %arg18[%c0_191, %c0_192] : memref<1x32xf32, #tpu.memory_space<vmem>>, vector<1x32xf32>
    %c0_193 = arith.constant 0 : index
    %c0_194 = arith.constant 0 : index
    %363 = vector.load %arg19[%c0_193, %c0_194] : memref<1x32xf32, #tpu.memory_space<vmem>>, vector<1x32xf32>
    %cst_195 = arith.constant dense<0.000000e+00> : vector<8xf32>
    %364 = vector.multi_reduction <add>, %361, %cst_195 [1] : vector<8x32xf32> to vector<8xf32>
    %365 = vector.shape_cast %364 : vector<8xf32> to vector<8x1xf32>
    %cst_196 = arith.constant 3.200000e+01 : f32
    %366 = vector.broadcast %cst_196 : f32 to vector<8x1xf32>
    %367 = arith.divf %365, %366 : vector<8x1xf32>
    %368 = vector.broadcast %367 : vector<8x1xf32> to vector<8x32xf32>
    %369 = arith.subf %361, %368 : vector<8x32xf32>
    %370 = arith.mulf %369, %369 : vector<8x32xf32>
    %cst_197 = arith.constant dense<0.000000e+00> : vector<8xf32>
    %371 = vector.multi_reduction <add>, %370, %cst_197 [1] : vector<8x32xf32> to vector<8xf32>
    %372 = vector.shape_cast %371 : vector<8xf32> to vector<8x1xf32>
    %cst_198 = arith.constant 3.200000e+01 : f32
    %373 = vector.broadcast %cst_198 : f32 to vector<8x1xf32>
    %374 = arith.divf %372, %373 : vector<8x1xf32>
    %cst_199 = arith.constant 9.99999974E-6 : f32
    %375 = vector.broadcast %cst_199 : f32 to vector<8x1xf32>
    %376 = arith.addf %374, %375 : vector<8x1xf32>
    %377 = math.rsqrt %376 : vector<8x1xf32>
    %378 = vector.broadcast %377 : vector<8x1xf32> to vector<8x32xf32>
    %379 = arith.mulf %369, %378 : vector<8x32xf32>
    %380 = vector.broadcast %362 : vector<1x32xf32> to vector<8x32xf32>
    %381 = arith.mulf %379, %380 : vector<8x32xf32>
    %382 = vector.broadcast %363 : vector<1x32xf32> to vector<8x32xf32>
    %383 = arith.addf %381, %382 : vector<8x32xf32>
    %384 = arith.truncf %383 : vector<8x32xf32> to vector<8x32xbf16>
    %c0_200 = arith.constant 0 : index
    %c0_201 = arith.constant 0 : index
    %385 = vector.load %arg20[%c0_200, %c0_201] : memref<32x64xbf16, #tpu.memory_space<vmem>>, vector<32x64xbf16>
    %cst_202 = arith.constant dense<0.000000e+00> : vector<8x64xf32>
    %386 = tpu.matmul %384, %385, %cst_202 {dimension_numbers = #tpu.dot_dimension_numbers<[1], [0], [0], [1], [0, 0, 1, 1], [], []>} : vector<8x32xbf16>, vector<32x64xbf16>, vector<8x64xf32> -> vector<8x64xf32>
    %c0_203 = arith.constant 0 : index
    %c0_204 = arith.constant 0 : index
    %387 = vector.load %arg21[%c0_203, %c0_204] : memref<1x64xf32, #tpu.memory_space<vmem>>, vector<1x64xf32>
    %388 = vector.broadcast %387 : vector<1x64xf32> to vector<8x64xf32>
    %389 = arith.addf %386, %388 : vector<8x64xf32>
    %cst_205 = arith.constant 0.000000e+00 : f32
    %390 = vector.broadcast %cst_205 : f32 to vector<8x64xf32>
    %391 = arith.maximumf %389, %390 : vector<8x64xf32>
    %392 = arith.truncf %391 : vector<8x64xf32> to vector<8x64xbf16>
    %c0_206 = arith.constant 0 : index
    %c0_207 = arith.constant 0 : index
    %393 = vector.load %arg22[%c0_206, %c0_207] : memref<64x32xbf16, #tpu.memory_space<vmem>>, vector<64x32xbf16>
    %cst_208 = arith.constant dense<0.000000e+00> : vector<8x32xf32>
    %394 = tpu.matmul %392, %393, %cst_208 {dimension_numbers = #tpu.dot_dimension_numbers<[1], [0], [0], [1], [0, 0, 1, 1], [], []>} : vector<8x64xbf16>, vector<64x32xbf16>, vector<8x32xf32> -> vector<8x32xf32>
    %c0_209 = arith.constant 0 : index
    %c0_210 = arith.constant 0 : index
    %395 = vector.load %arg23[%c0_209, %c0_210] : memref<1x32xf32, #tpu.memory_space<vmem>>, vector<1x32xf32>
    %396 = vector.broadcast %395 : vector<1x32xf32> to vector<8x32xf32>
    %397 = arith.addf %394, %396 : vector<8x32xf32>
    %398 = arith.addf %397, %383 : vector<8x32xf32>
    %c0_211 = arith.constant 0 : index
    %c0_212 = arith.constant 0 : index
    %399 = vector.load %arg24[%c0_211, %c0_212] : memref<1x32xf32, #tpu.memory_space<vmem>>, vector<1x32xf32>
    %c0_213 = arith.constant 0 : index
    %c0_214 = arith.constant 0 : index
    %400 = vector.load %arg25[%c0_213, %c0_214] : memref<1x32xf32, #tpu.memory_space<vmem>>, vector<1x32xf32>
    %cst_215 = arith.constant dense<0.000000e+00> : vector<8xf32>
    %401 = vector.multi_reduction <add>, %398, %cst_215 [1] : vector<8x32xf32> to vector<8xf32>
    %402 = vector.shape_cast %401 : vector<8xf32> to vector<8x1xf32>
    %cst_216 = arith.constant 3.200000e+01 : f32
    %403 = vector.broadcast %cst_216 : f32 to vector<8x1xf32>
    %404 = arith.divf %402, %403 : vector<8x1xf32>
    %405 = vector.broadcast %404 : vector<8x1xf32> to vector<8x32xf32>
    %406 = arith.subf %398, %405 : vector<8x32xf32>
    %407 = arith.mulf %406, %406 : vector<8x32xf32>
    %cst_217 = arith.constant dense<0.000000e+00> : vector<8xf32>
    %408 = vector.multi_reduction <add>, %407, %cst_217 [1] : vector<8x32xf32> to vector<8xf32>
    %409 = vector.shape_cast %408 : vector<8xf32> to vector<8x1xf32>
    %cst_218 = arith.constant 3.200000e+01 : f32
    %410 = vector.broadcast %cst_218 : f32 to vector<8x1xf32>
    %411 = arith.divf %409, %410 : vector<8x1xf32>
    %cst_219 = arith.constant 9.99999974E-6 : f32
    %412 = vector.broadcast %cst_219 : f32 to vector<8x1xf32>
    %413 = arith.addf %411, %412 : vector<8x1xf32>
    %414 = math.rsqrt %413 : vector<8x1xf32>
    %415 = vector.broadcast %414 : vector<8x1xf32> to vector<8x32xf32>
    %416 = arith.mulf %406, %415 : vector<8x32xf32>
    %417 = vector.broadcast %399 : vector<1x32xf32> to vector<8x32xf32>
    %418 = arith.mulf %416, %417 : vector<8x32xf32>
    %419 = vector.broadcast %400 : vector<1x32xf32> to vector<8x32xf32>
    %420 = arith.addf %418, %419 : vector<8x32xf32>
    %c0_220 = arith.constant 0 : index
    %c0_221 = arith.constant 0 : index
    %c0_222 = arith.constant 0 : index
    %421 = vector.load %arg26[%c0_220, %c0_221, %c0_222] : memref<1x8x32xf32, #tpu.memory_space<vmem>>, vector<1x8x32xf32>
    %422 = vector.shape_cast %421 : vector<1x8x32xf32> to vector<8x32xf32>
    %423 = vector.shape_cast %420 : vector<8x32xf32> to vector<1x8x32xf32>
    tpu.vector_store %arg26[%c0_220, %c0_221, %c0_222], %423 {strides = array<i32>} : memref<1x8x32xf32, #tpu.memory_space<vmem>>, vector<1x8x32xf32>,
    return
  }
  func.func @transform_0(%arg0: i32, %arg1: i32) -> (i32, i32, i32) {
    %c0_i32 = arith.constant 0 : i32
    %c0_i32_0 = arith.constant 0 : i32
    return %arg0, %arg1, %c0_i32 : i32, i32, i32
  }
  func.func @transform_1(%arg0: i32, %arg1: i32) -> (i32, i32, i32) {
    %c0_i32 = arith.constant 0 : i32
    %c0_i32_0 = arith.constant 0 : i32
    %c0_i32_1 = arith.constant 0 : i32
    return %arg0, %c0_i32, %c0_i32_0 : i32, i32, i32
  }
  func.func @transform_2(%arg0: i32, %arg1: i32) -> (i32, i32, i32, i32) {
    %c0_i32 = arith.constant 0 : i32
    %c0_i32_0 = arith.constant 0 : i32
    %c0_i32_1 = arith.constant 0 : i32
    %c0_i32_2 = arith.constant 0 : i32
    return %arg0, %c0_i32, %c0_i32_0, %c0_i32_1 : i32, i32, i32, i32
  }
  func.func @transform_3(%arg0: i32, %arg1: i32) -> (i32, i32, i32, i32) {
    %c0_i32 = arith.constant 0 : i32
    %c0_i32_0 = arith.constant 0 : i32
    %c0_i32_1 = arith.constant 0 : i32
    %c0_i32_2 = arith.constant 0 : i32
    return %arg0, %c0_i32, %c0_i32_0, %c0_i32_1 : i32, i32, i32, i32
  }
  func.func @transform_4(%arg0: i32, %arg1: i32) -> (i32, i32, i32, i32) {
    %c0_i32 = arith.constant 0 : i32
    %c0_i32_0 = arith.constant 0 : i32
    %c0_i32_1 = arith.constant 0 : i32
    %c0_i32_2 = arith.constant 0 : i32
    return %arg0, %c0_i32, %c0_i32_0, %c0_i32_1 : i32, i32, i32, i32
  }
  func.func @transform_5(%arg0: i32, %arg1: i32) -> (i32, i32, i32, i32) {
    %c0_i32 = arith.constant 0 : i32
    %c0_i32_0 = arith.constant 0 : i32
    %c0_i32_1 = arith.constant 0 : i32
    %c0_i32_2 = arith.constant 0 : i32
    return %arg0, %c0_i32, %c0_i32_0, %c0_i32_1 : i32, i32, i32, i32
  }
  func.func @transform_6(%arg0: i32, %arg1: i32) -> (i32, i32) {
    %c0_i32 = arith.constant 0 : i32
    %c0_i32_0 = arith.constant 0 : i32
    %c0_i32_1 = arith.constant 0 : i32
    return %c0_i32, %c0_i32_0 : i32, i32
  }
  func.func @transform_7(%arg0: i32, %arg1: i32) -> (i32, i32) {
    %c0_i32 = arith.constant 0 : i32
    %c0_i32_0 = arith.constant 0 : i32
    %c0_i32_1 = arith.constant 0 : i32
    return %c0_i32, %c0_i32_0 : i32, i32
  }
  func.func @transform_8(%arg0: i32, %arg1: i32) -> (i32, i32) {
    %c0_i32 = arith.constant 0 : i32
    %c0_i32_0 = arith.constant 0 : i32
    %c0_i32_1 = arith.constant 0 : i32
    return %c0_i32, %c0_i32_0 : i32, i32
  }
  func.func @transform_9(%arg0: i32, %arg1: i32) -> (i32, i32) {
    %c0_i32 = arith.constant 0 : i32
    %c0_i32_0 = arith.constant 0 : i32
    %c0_i32_1 = arith.constant 0 : i32
    return %c0_i32, %c0_i32_0 : i32, i32
  }
  func.func @transform_10(%arg0: i32, %arg1: i32) -> (i32, i32) {
    %c0_i32 = arith.constant 0 : i32
    %c0_i32_0 = arith.constant 0 : i32
    %c0_i32_1 = arith.constant 0 : i32
    return %c0_i32, %c0_i32_0 : i32, i32
  }
  func.func @transform_11(%arg0: i32, %arg1: i32) -> (i32, i32) {
    %c0_i32 = arith.constant 0 : i32
    %c0_i32_0 = arith.constant 0 : i32
    %c0_i32_1 = arith.constant 0 : i32
    return %c0_i32, %c0_i32_0 : i32, i32
  }
  func.func @transform_12(%arg0: i32, %arg1: i32) -> (i32, i32) {
    %c0_i32 = arith.constant 0 : i32
    %c0_i32_0 = arith.constant 0 : i32
    %c0_i32_1 = arith.constant 0 : i32
    return %c0_i32, %c0_i32_0 : i32, i32
  }
  func.func @transform_13(%arg0: i32, %arg1: i32) -> (i32, i32) {
    %c0_i32 = arith.constant 0 : i32
    %c0_i32_0 = arith.constant 0 : i32
    %c0_i32_1 = arith.constant 0 : i32
    return %c0_i32, %c0_i32_0 : i32, i32
  }
  func.func @transform_14(%arg0: i32, %arg1: i32) -> (i32, i32) {
    %c0_i32 = arith.constant 0 : i32
    %c0_i32_0 = arith.constant 0 : i32
    %c0_i32_1 = arith.constant 0 : i32
    return %c0_i32, %c0_i32_0 : i32, i32
  }
  func.func @transform_15(%arg0: i32, %arg1: i32) -> (i32, i32) {
    %c0_i32 = arith.constant 0 : i32
    %c0_i32_0 = arith.constant 0 : i32
    %c0_i32_1 = arith.constant 0 : i32
    return %c0_i32, %c0_i32_0 : i32, i32
  }
  func.func @transform_16(%arg0: i32, %arg1: i32) -> (i32, i32) {
    %c0_i32 = arith.constant 0 : i32
    %c0_i32_0 = arith.constant 0 : i32
    %c0_i32_1 = arith.constant 0 : i32
    return %c0_i32, %c0_i32_0 : i32, i32
  }
  func.func @transform_17(%arg0: i32, %arg1: i32) -> (i32, i32) {
    %c0_i32 = arith.constant 0 : i32
    %c0_i32_0 = arith.constant 0 : i32
    %c0_i32_1 = arith.constant 0 : i32
    return %c0_i32, %c0_i32_0 : i32, i32
  }
  func.func @transform_18(%arg0: i32, %arg1: i32) -> (i32, i32) {
    %c0_i32 = arith.constant 0 : i32
    %c0_i32_0 = arith.constant 0 : i32
    %c0_i32_1 = arith.constant 0 : i32
    return %c0_i32, %c0_i32_0 : i32, i32
  }
  func.func @transform_19(%arg0: i32, %arg1: i32) -> (i32, i32) {
    %c0_i32 = arith.constant 0 : i32
    %c0_i32_0 = arith.constant 0 : i32
    %c0_i32_1 = arith.constant 0 : i32
    return %c0_i32, %c0_i32_0 : i32, i32
  }
  func.func @transform_20(%arg0: i32, %arg1: i32) -> (i32, i32) {
    %c0_i32 = arith.constant 0 : i32
    %c0_i32_0 = arith.constant 0 : i32
    %c0_i32_1 = arith.constant 0 : i32
    return %c0_i32, %c0_i32_0 : i32, i32
  }
  func.func @transform_21(%arg0: i32, %arg1: i32) -> (i32, i32) {
    %c0_i32 = arith.constant 0 : i32
    %c0_i32_0 = arith.constant 0 : i32
    %c0_i32_1 = arith.constant 0 : i32
    return %c0_i32, %c0_i32_0 : i32, i32
  }
  func.func @transform_22(%arg0: i32, %arg1: i32) -> (i32, i32) {
    %c0_i32 = arith.constant 0 : i32
    %c0_i32_0 = arith.constant 0 : i32
    %c0_i32_1 = arith.constant 0 : i32
    return %c0_i32, %c0_i32_0 : i32, i32
  }
  func.func @transform_23(%arg0: i32, %arg1: i32) -> (i32, i32) {
    %c0_i32 = arith.constant 0 : i32
    %c0_i32_0 = arith.constant 0 : i32
    %c0_i32_1 = arith.constant 0 : i32
    return %c0_i32, %c0_i32_0 : i32, i32
  }
  func.func @transform_24(%arg0: i32, %arg1: i32) -> (i32, i32, i32) {
    %c0_i32 = arith.constant 0 : i32
    %c0_i32_0 = arith.constant 0 : i32
    return %arg0, %arg1, %c0_i32 : i32, i32, i32
  }
}

</mosaic_0001>

<llo_original>
// kernel: tpu_custom_call.1
$region0: #{tpu_custom_call.1}
  #allocation0 [shape = 'u32[]', space=smem, size = 0x4, offset = 0x4, fixed_abs, tag = 'smem constant byte address 0x4 - core index']
  #allocation1 [shape = 'u32[144,128]{1,0:T(1,128)}', space=vmem, size = 0x12000, scoped, tag = 'internal scratch']
  #allocation2 [shape = 'f32[8,32]{1,0:T(8,128)}', space=vmem, size = 0x1000, scoped, tag = 'scratch operand']
  %s0 = inlined_call_operand.vmem [shape: f32[2,16,32], index: 0, kind: input, shape index: {}]
  %s1 = inlined_call_operand.vmem [shape: f32[2,1,16], index: 1, kind: input, shape index: {}]
  %s2 = inlined_call_operand.vmem [shape: bf16[2,4,16,8], index: 2, kind: input, shape index: {}]
  %s3 = inlined_call_operand.vmem [shape: bf16[2,4,16,8], index: 3, kind: input, shape index: {}]
  %s4 = inlined_call_operand.vmem [shape: bf16[2,4,16,8], index: 4, kind: input, shape index: {}]
  %s5 = inlined_call_operand.vmem [shape: bf16[2,4,16,8], index: 5, kind: input, shape index: {}]
  %s6 = inlined_call_operand.vmem [shape: bf16[32,32], index: 6, kind: input, shape index: {}]
  %s7 = inlined_call_operand.vmem [shape: f32[1,32], index: 7, kind: input, shape index: {}]
  %s8 = inlined_call_operand.vmem [shape: bf16[32,32], index: 8, kind: input, shape index: {}]
  %s9 = inlined_call_operand.vmem [shape: f32[1,32], index: 9, kind: input, shape index: {}]
  %s10 = inlined_call_operand.vmem [shape: f32[1,32], index: 10, kind: input, shape index: {}]
  %s11 = inlined_call_operand.vmem [shape: f32[1,32], index: 11, kind: input, shape index: {}]
  %s12 = inlined_call_operand.vmem [shape: bf16[32,32], index: 12, kind: input, shape index: {}]
  %s13 = inlined_call_operand.vmem [shape: f32[1,32], index: 13, kind: input, shape index: {}]
  %s14 = inlined_call_operand.vmem [shape: bf16[32,32], index: 14, kind: input, shape index: {}]
  %s15 = inlined_call_operand.vmem [shape: f32[1,32], index: 15, kind: input, shape index: {}]
  %s16 = inlined_call_operand.vmem [shape: f32[1,32], index: 16, kind: input, shape index: {}]
  %s17 = inlined_call_operand.vmem [shape: f32[1,32], index: 17, kind: input, shape index: {}]
  %s18 = inlined_call_operand.vmem [shape: bf16[32,64], index: 18, kind: input, shape index: {}]
  %s19 = inlined_call_operand.vmem [shape: f32[1,64], index: 19, kind: input, shape index: {}]
  %s20 = inlined_call_operand.vmem [shape: bf16[64,32], index: 20, kind: input, shape index: {}]
  %s21 = inlined_call_operand.vmem [shape: f32[1,32], index: 21, kind: input, shape index: {}]
  %s22 = inlined_call_operand.vmem [shape: f32[1,32], index: 22, kind: input, shape index: {}]
  %s23 = inlined_call_operand.vmem [shape: f32[1,32], index: 23, kind: input, shape index: {}]
  %s24 = inlined_call_operand.hbm [shape: f32[2,16,32], index: 24, kind: output, shape index: {}]
  %s25 = sld [smem:[#allocation0]]
  $region129: #{tpu_custom_call.1} parent=0
    _
  %s27 = ssub.s32 1, %s25
  %s28 = scalar_select 0, %s27, %s25
  $region1: #{tpu_custom_call.1} parent=0
    #allocation3 [shape = 'u8[8192]{0}', space=vmem, size = 0x2000, scoped, tag = 'output window, operand 0']
    #allocation4 [shape = 's32[2]{0}', space=sflag, size = 0x8, scoped, tag = 'scoped memory for tpu_custom_call.1']
    %29 = vsyncpa [#allocation4], 0
    %s30 = scalar_lea.sflag [#allocation4], 1
    %31 = vsyncpa %s30, 0
    loop: start=0, step=1, limit=6
    $region2: #{tpu_custom_call.1} parent=1 // loop_pre_header
      _
    $region3: #{tpu_custom_call.1} parent=1 // loop_header
      %s33 = sphi 0, %s37
      %p34 = scmp.ge.s32.totalorder %s33, 6
      %s40 = sphi 0, %s52
      %s41 = sphi 0, %s48
      %s42 = sphi 0, %s40
      %s43 = sphi 0, %s41
      %s44 = sphi 0, %s42
      %s45 = sphi 0, %s43
      %s57 = sphi 0, %s59
      %s60 = sphi 0, %s57
      %s61 = sphi 0, %s60
      %s77 = sphi 0, %s61
      %s83 = sphi 0, %s85
      %s86 = sphi 0, %s83
      %s87 = sphi 0, %s86
      %s103 = sphi 0, %s87
      %s109 = sphi 0, %s111
      %s112 = sphi 0, %s109
      %s113 = sphi 0, %s112
      %s129 = sphi 0, %s113
      %s135 = sphi 0, %s137
      %s138 = sphi 0, %s135
      %s139 = sphi 0, %s138
      %s155 = sphi 0, %s139
      %s161 = sphi 0, %s163
      %s164 = sphi 0, %s161
      %s165 = sphi 0, %s164
      %s181 = sphi 0, %s165
      %s187 = sphi 0, %s189
      %s190 = sphi 0, %s187
      %s191 = sphi 0, %s190
      %s207 = sphi 0, %s191
      %s211 = sphi 0, %s211
      %s213 = sphi 0, %s211
      %s214 = sphi 0, %s213
      %s228 = sphi 0, %s214
      %s232 = sphi 0, %s232
      %s234 = sphi 0, %s232
      %s235 = sphi 0, %s234
      %s249 = sphi 0, %s235
      %s253 = sphi 0, %s253
      %s255 = sphi 0, %s253
      %s256 = sphi 0, %s255
      %s270 = sphi 0, %s256
      %s274 = sphi 0, %s274
      %s276 = sphi 0, %s274
      %s277 = sphi 0, %s276
      %s291 = sphi 0, %s277
      %s295 = sphi 0, %s295
      %s297 = sphi 0, %s295
      %s298 = sphi 0, %s297
      %s312 = sphi 0, %s298
      %s316 = sphi 0, %s316
      %s318 = sphi 0, %s316
      %s319 = sphi 0, %s318
      %s333 = sphi 0, %s319
      %s337 = sphi 0, %s337
      %s339 = sphi 0, %s337
      %s340 = sphi 0, %s339
      %s354 = sphi 0, %s340
      %s358 = sphi 0, %s358
      %s360 = sphi 0, %s358
      %s361 = sphi 0, %s360
      %s375 = sphi 0, %s361
      %s379 = sphi 0, %s379
      %s381 = sphi 0, %s379
      %s382 = sphi 0, %s381
      %s396 = sphi 0, %s382
      %s400 = sphi 0, %s400
      %s402 = sphi 0, %s400
      %s403 = sphi 0, %s402
      %s417 = sphi 0, %s403
      %s421 = sphi 0, %s421
      %s423 = sphi 0, %s421
      %s424 = sphi 0, %s423
      %s438 = sphi 0, %s424
      %s442 = sphi 0, %s442
      %s444 = sphi 0, %s442
      %s445 = sphi 0, %s444
      %s459 = sphi 0, %s445
      %s463 = sphi 0, %s463
      %s465 = sphi 0, %s463
      %s466 = sphi 0, %s465
      %s480 = sphi 0, %s466
      %s484 = sphi 0, %s484
      %s486 = sphi 0, %s484
      %s487 = sphi 0, %s486
      %s501 = sphi 0, %s487
      %s505 = sphi 0, %s505
      %s507 = sphi 0, %s505
      %s508 = sphi 0, %s507
      %s522 = sphi 0, %s508
      %s526 = sphi 0, %s526
      %s528 = sphi 0, %s526
      %s529 = sphi 0, %s528
      %s543 = sphi 0, %s529
      %s547 = sphi 0, %s547
      %s549 = sphi 0, %s547
      %s550 = sphi 0, %s549
      %s564 = sphi 0, %s550
      %s568 = sphi 0, %s568
      %s570 = sphi 0, %s568
      %s571 = sphi 0, %s570
      %s585 = sphi 0, %s571
      %s593 = sphi 0, %s595
      %s596 = sphi 0, %s593
      %s597 = sphi 0, %s596
      %s613 = sphi 0, %s597
    $region4: #{tpu_custom_call.1} parent=1 // loop_header_branch
      %36 = sbr.rel (%p34) target = $region8
    $region5: #{tpu_custom_call.1} parent=1 // loop_body
      %s38 = ssub.s32 %s33, 1
      %s39 = ssub.s32 %s33, 2
      %s46 = sadd.s32 1, %s41
      %p47 = scmp.ge.s32.totalorder %s46, 2
      %s48 = scalar_select %p47, 0, %s46
      %s49 = sadd.s32 1, %s40
      %s50 = scalar_select %p47, %s49, %s40
      %p51 = scmp.ge.s32.totalorder %s50, 2
      %s52 = scalar_select %p51, 0, %s50
      %s53 = ssub.s32 %s40, %s52
      %s54 = ssub.s32 %s41, %s48
      %s55 = sor.u32 %s53, %s54
      %p56 = scmp.eq.s32.totalorder %s55, 0
      %s58 = sadd.s32 %s57, 1
      %s59 = scalar_select %p56, %s57, %s58
      %p62 = pneg %p56
      %p63 = scmp.eq.s32.totalorder %s33, 3
      %p64 = por %p62, %p63
      %p65 = scmp.ne.s32.totalorder %s57, %s60
      %p66 = scmp.eq.s32.totalorder %s33, 0
      %p67 = por %p65, %p66
      %p68 = scmp.ne.s32.totalorder %s57, %s60
      %p69 = scmp.eq.s32.totalorder %s38, 3
      %p70 = por %p68, %p69
      %p71 = scmp.ne.s32.totalorder %s60, %s61
      %p72 = scmp.eq.s32.totalorder %s38, 0
      %p73 = por %p71, %p72
      %p74 = scmp.ne.s32.totalorder %s60, %s61
      %p75 = scmp.eq.s32.totalorder %s39, 3
      %p76 = por %p74, %p75
      %p78 = scmp.ne.s32.totalorder %s61, %s77
      %p79 = scmp.eq.s32.totalorder %s39, 0
      %p80 = por %p78, %p79
      %s81 = ssub.s32 %s40, %s52
      %p82 = scmp.eq.s32.totalorder %s81, 0
      %s84 = sadd.s32 %s83, 1
      %s85 = scalar_select %p82, %s83, %s84
      %p88 = pneg %p82
      %p89 = scmp.eq.s32.totalorder %s33, 3
      %p90 = por %p88, %p89
      %p91 = scmp.ne.s32.totalorder %s83, %s86
      %p92 = scmp.eq.s32.totalorder %s33, 0
      %p93 = por %p91, %p92
      %p94 = scmp.ne.s32.totalorder %s83, %s86
      %p95 = scmp.eq.s32.totalorder %s38, 3
      %p96 = por %p94, %p95
      %p97 = scmp.ne.s32.totalorder %s86, %s87
      %p98 = scmp.eq.s32.totalorder %s38, 0
      %p99 = por %p97, %p98
      %p100 = scmp.ne.s32.totalorder %s86, %s87
      %p101 = scmp.eq.s32.totalorder %s39, 3
      %p102 = por %p100, %p101
      %p104 = scmp.ne.s32.totalorder %s87, %s103
      %p105 = scmp.eq.s32.totalorder %s39, 0
      %p106 = por %p104, %p105
      %s107 = ssub.s32 %s40, %s52
      %p108 = scmp.eq.s32.totalorder %s107, 0
      %s110 = sadd.s32 %s109, 1
      %s111 = scalar_select %p108, %s109, %s110
      %p114 = pneg %p108
      %p115 = scmp.eq.s32.totalorder %s33, 3
      %p116 = por %p114, %p115
      %p117 = scmp.ne.s32.totalorder %s109, %s112
      %p118 = scmp.eq.s32.totalorder %s33, 0
      %p119 = por %p117, %p118
      %p120 = scmp.ne.s32.totalorder %s109, %s112
      %p121 = scmp.eq.s32.totalorder %s38, 3
      %p122 = por %p120, %p121
      %p123 = scmp.ne.s32.totalorder %s112, %s113
      %p124 = scmp.eq.s32.totalorder %s38, 0
      %p125 = por %p123, %p124
      %p126 = scmp.ne.s32.totalorder %s112, %s113
      %p127 = scmp.eq.s32.totalorder %s39, 3
      %p128 = por %p126, %p127
      %p130 = scmp.ne.s32.totalorder %s113, %s129
      %p131 = scmp.eq.s32.totalorder %s39, 0
      %p132 = por %p130, %p131
      %s133 = ssub.s32 %s40, %s52
      %p134 = scmp.eq.s32.totalorder %s133, 0
      %s136 = sadd.s32 %s135, 1
      %s137 = scalar_select %p134, %s135, %s136
      %p140 = pneg %p134
      %p141 = scmp.eq.s32.totalorder %s33, 3
      %p142 = por %p140, %p141
      %p143 = scmp.ne.s32.totalorder %s135, %s138
      %p144 = scmp.eq.s32.totalorder %s33, 0
      %p145 = por %p143, %p144
      %p146 = scmp.ne.s32.totalorder %s135, %s138
      %p147 = scmp.eq.s32.totalorder %s38, 3
      %p148 = por %p146, %p147
      %p149 = scmp.ne.s32.totalorder %s138, %s139
      %p150 = scmp.eq.s32.totalorder %s38, 0
      %p151 = por %p149, %p150
      %p152 = scmp.ne.s32.totalorder %s138, %s139
      %p153 = scmp.eq.s32.totalorder %s39, 3
      %p154 = por %p152, %p153
      %p156 = scmp.ne.s32.totalorder %s139, %s155
      %p157 = scmp.eq.s32.totalorder %s39, 0
      %p158 = por %p156, %p157
      %s159 = ssub.s32 %s40, %s52
      %p160 = scmp.eq.s32.totalorder %s159, 0
      %s162 = sadd.s32 %s161, 1
      %s163 = scalar_select %p160, %s161, %s162
      %p166 = pneg %p160
      %p167 = scmp.eq.s32.totalorder %s33, 3
      %p168 = por %p166, %p167
      %p169 = scmp.ne.s32.totalorder %s161, %s164
      %p170 = scmp.eq.s32.totalorder %s33, 0
      %p171 = por %p169, %p170
      %p172 = scmp.ne.s32.totalorder %s161, %s164
      %p173 = scmp.eq.s32.totalorder %s38, 3
      %p174 = por %p172, %p173
      %p175 = scmp.ne.s32.totalorder %s164, %s165
      %p176 = scmp.eq.s32.totalorder %s38, 0
      %p177 = por %p175, %p176
      %p178 = scmp.ne.s32.totalorder %s164, %s165
      %p179 = scmp.eq.s32.totalorder %s39, 3
      %p180 = por %p178, %p179
      %p182 = scmp.ne.s32.totalorder %s165, %s181
      %p183 = scmp.eq.s32.totalorder %s39, 0
      %p184 = por %p182, %p183
      %s185 = ssub.s32 %s40, %s52
      %p186 = scmp.eq.s32.totalorder %s185, 0
      %s188 = sadd.s32 %s187, 1
      %s189 = scalar_select %p186, %s187, %s188
      %p192 = pneg %p186
      %p193 = scmp.eq.s32.totalorder %s33, 3
      %p194 = por %p192, %p193
      %p195 = scmp.ne.s32.totalorder %s187, %s190
      %p196 = scmp.eq.s32.totalorder %s33, 0
      %p197 = por %p195, %p196
      %p198 = scmp.ne.s32.totalorder %s187, %s190
      %p199 = scmp.eq.s32.totalorder %s38, 3
      %p200 = por %p198, %p199
      %p201 = scmp.ne.s32.totalorder %s190, %s191
      %p202 = scmp.eq.s32.totalorder %s38, 0
      %p203 = por %p201, %p202
      %p204 = scmp.ne.s32.totalorder %s190, %s191
      %p205 = scmp.eq.s32.totalorder %s39, 3
      %p206 = por %p204, %p205
      %p208 = scmp.ne.s32.totalorder %s191, %s207
      %p209 = scmp.eq.s32.totalorder %s39, 0
      %p210 = por %p208, %p209
      %s212 = sadd.s32 %s211, 1
      %p215 = scmp.eq.s32.totalorder %s33, 3
      %p216 = scmp.ne.s32.totalorder %s211, %s213
      %p217 = scmp.eq.s32.totalorder %s33, 0
      %p218 = por %p216, %p217
      %p219 = scmp.ne.s32.totalorder %s211, %s213
      %p220 = scmp.eq.s32.totalorder %s38, 3
      %p221 = por %p219, %p220
      %p222 = scmp.ne.s32.totalorder %s213, %s214
      %p223 = scmp.eq.s32.totalorder %s38, 0
      %p224 = por %p222, %p223
      %p225 = scmp.ne.s32.totalorder %s213, %s214
      %p226 = scmp.eq.s32.totalorder %s39, 3
      %p227 = por %p225, %p226
      %p229 = scmp.ne.s32.totalorder %s214, %s228
      %p230 = scmp.eq.s32.totalorder %s39, 0
      %p231 = por %p229, %p230
      %s233 = sadd.s32 %s232, 1
      %p236 = scmp.eq.s32.totalorder %s33, 3
      %p237 = scmp.ne.s32.totalorder %s232, %s234
      %p238 = scmp.eq.s32.totalorder %s33, 0
      %p239 = por %p237, %p238
      %p240 = scmp.ne.s32.totalorder %s232, %s234
      %p241 = scmp.eq.s32.totalorder %s38, 3
      %p242 = por %p240, %p241
      %p243 = scmp.ne.s32.totalorder %s234, %s235
      %p244 = scmp.eq.s32.totalorder %s38, 0
      %p245 = por %p243, %p244
      %p246 = scmp.ne.s32.totalorder %s234, %s235
      %p247 = scmp.eq.s32.totalorder %s39, 3
      %p248 = por %p246, %p247
      %p250 = scmp.ne.s32.totalorder %s235, %s249
      %p251 = scmp.eq.s32.totalorder %s39, 0
      %p252 = por %p250, %p251
      %s254 = sadd.s32 %s253, 1
      %p257 = scmp.eq.s32.totalorder %s33, 3
      %p258 = scmp.ne.s32.totalorder %s253, %s255
      %p259 = scmp.eq.s32.totalorder %s33, 0
      %p260 = por %p258, %p259
      %p261 = scmp.ne.s32.totalorder %s253, %s255
      %p262 = scmp.eq.s32.totalorder %s38, 3
      %p263 = por %p261, %p262
      %p264 = scmp.ne.s32.totalorder %s255, %s256
      %p265 = scmp.eq.s32.totalorder %s38, 0
      %p266 = por %p264, %p265
      %p267 = scmp.ne.s32.totalorder %s255, %s256
      %p268 = scmp.eq.s32.totalorder %s39, 3
      %p269 = por %p267, %p268
      %p271 = scmp.ne.s32.totalorder %s256, %s270
      %p272 = scmp.eq.s32.totalorder %s39, 0
      %p273 = por %p271, %p272
      %s275 = sadd.s32 %s274, 1
      %p278 = scmp.eq.s32.totalorder %s33, 3
      %p279 = scmp.ne.s32.totalorder %s274, %s276
      %p280 = scmp.eq.s32.totalorder %s33, 0
      %p281 = por %p279, %p280
      %p282 = scmp.ne.s32.totalorder %s274, %s276
      %p283 = scmp.eq.s32.totalorder %s38, 3
      %p284 = por %p282, %p283
      %p285 = scmp.ne.s32.totalorder %s276, %s277
      %p286 = scmp.eq.s32.totalorder %s38, 0
      %p287 = por %p285, %p286
      %p288 = scmp.ne.s32.totalorder %s276, %s277
      %p289 = scmp.eq.s32.totalorder %s39, 3
      %p290 = por %p288, %p289
      %p292 = scmp.ne.s32.totalorder %s277, %s291
      %p293 = scmp.eq.s32.totalorder %s39, 0
      %p294 = por %p292, %p293
      %s296 = sadd.s32 %s295, 1
      %p299 = scmp.eq.s32.totalorder %s33, 3
      %p300 = scmp.ne.s32.totalorder %s295, %s297
      %p301 = scmp.eq.s32.totalorder %s33, 0
      %p302 = por %p300, %p301
      %p303 = scmp.ne.s32.totalorder %s295, %s297
      %p304 = scmp.eq.s32.totalorder %s38, 3
      %p305 = por %p303, %p304
      %p306 = scmp.ne.s32.totalorder %s297, %s298
      %p307 = scmp.eq.s32.totalorder %s38, 0
      %p308 = por %p306, %p307
      %p309 = scmp.ne.s32.totalorder %s297, %s298
      %p310 = scmp.eq.s32.totalorder %s39, 3
      %p311 = por %p309, %p310
      %p313 = scmp.ne.s32.totalorder %s298, %s312
      %p314 = scmp.eq.s32.totalorder %s39, 0
      %p315 = por %p313, %p314
      %s317 = sadd.s32 %s316, 1
      %p320 = scmp.eq.s32.totalorder %s33, 3
      %p321 = scmp.ne.s32.totalorder %s316, %s318
      %p322 = scmp.eq.s32.totalorder %s33, 0
      %p323 = por %p321, %p322
      %p324 = scmp.ne.s32.totalorder %s316, %s318
      %p325 = scmp.eq.s32.totalorder %s38, 3
      %p326 = por %p324, %p325
      %p327 = scmp.ne.s32.totalorder %s318, %s319
      %p328 = scmp.eq.s32.totalorder %s38, 0
      %p329 = por %p327, %p328
      %p330 = scmp.ne.s32.totalorder %s318, %s319
      %p331 = scmp.eq.s32.totalorder %s39, 3
      %p332 = por %p330, %p331
      %p334 = scmp.ne.s32.totalorder %s319, %s333
      %p335 = scmp.eq.s32.totalorder %s39, 0
      %p336 = por %p334, %p335
      %s338 = sadd.s32 %s337, 1
      %p341 = scmp.eq.s32.totalorder %s33, 3
      %p342 = scmp.ne.s32.totalorder %s337, %s339
      %p343 = scmp.eq.s32.totalorder %s33, 0
      %p344 = por %p342, %p343
      %p345 = scmp.ne.s32.totalorder %s337, %s339
      %p346 = scmp.eq.s32.totalorder %s38, 3
      %p347 = por %p345, %p346
      %p348 = scmp.ne.s32.totalorder %s339, %s340
      %p349 = scmp.eq.s32.totalorder %s38, 0
      %p350 = por %p348, %p349
      %p351 = scmp.ne.s32.totalorder %s339, %s340
      %p352 = scmp.eq.s32.totalorder %s39, 3
      %p353 = por %p351, %p352
      %p355 = scmp.ne.s32.totalorder %s340, %s354
      %p356 = scmp.eq.s32.totalorder %s39, 0
      %p357 = por %p355, %p356
      %s359 = sadd.s32 %s358, 1
      %p362 = scmp.eq.s32.totalorder %s33, 3
      %p363 = scmp.ne.s32.totalorder %s358, %s360
      %p364 = scmp.eq.s32.totalorder %s33, 0
      %p365 = por %p363, %p364
      %p366 = scmp.ne.s32.totalorder %s358, %s360
      %p367 = scmp.eq.s32.totalorder %s38, 3
      %p368 = por %p366, %p367
      %p369 = scmp.ne.s32.totalorder %s360, %s361
      %p370 = scmp.eq.s32.totalorder %s38, 0
      %p371 = por %p369, %p370
      %p372 = scmp.ne.s32.totalorder %s360, %s361
      %p373 = scmp.eq.s32.totalorder %s39, 3
      %p374 = por %p372, %p373
      %p376 = scmp.ne.s32.totalorder %s361, %s375
      %p377 = scmp.eq.s32.totalorder %s39, 0
      %p378 = por %p376, %p377
      %s380 = sadd.s32 %s379, 1
      %p383 = scmp.eq.s32.totalorder %s33, 3
      %p384 = scmp.ne.s32.totalorder %s379, %s381
      %p385 = scmp.eq.s32.totalorder %s33, 0
      %p386 = por %p384, %p385
      %p387 = scmp.ne.s32.totalorder %s379, %s381
      %p388 = scmp.eq.s32.totalorder %s38, 3
      %p389 = por %p387, %p388
      %p390 = scmp.ne.s32.totalorder %s381, %s382
      %p391 = scmp.eq.s32.totalorder %s38, 0
      %p392 = por %p390, %p391
      %p393 = scmp.ne.s32.totalorder %s381, %s382
      %p394 = scmp.eq.s32.totalorder %s39, 3
      %p395 = por %p393, %p394
      %p397 = scmp.ne.s32.totalorder %s382, %s396
      %p398 = scmp.eq.s32.totalorder %s39, 0
      %p399 = por %p397, %p398
      %s401 = sadd.s32 %s400, 1
      %p404 = scmp.eq.s32.totalorder %s33, 3
      %p405 = scmp.ne.s32.totalorder %s400, %s402
      %p406 = scmp.eq.s32.totalorder %s33, 0
      %p407 = por %p405, %p406
      %p408 = scmp.ne.s32.totalorder %s400, %s402
      %p409 = scmp.eq.s32.totalorder %s38, 3
      %p410 = por %p408, %p409
      %p411 = scmp.ne.s32.totalorder %s402, %s403
      %p412 = scmp.eq.s32.totalorder %s38, 0
      %p413 = por %p411, %p412
      %p414 = scmp.ne.s32.totalorder %s402, %s403
      %p415 = scmp.eq.s32.totalorder %s39, 3
      %p416 = por %p414, %p415
      %p418 = scmp.ne.s32.totalorder %s403, %s417
      %p419 = scmp.eq.s32.totalorder %s39, 0
      %p420 = por %p418, %p419
      %s422 = sadd.s32 %s421, 1
      %p425 = scmp.eq.s32.totalorder %s33, 3
      %p426 = scmp.ne.s32.totalorder %s421, %s423
      %p427 = scmp.eq.s32.totalorder %s33, 0
      %p428 = por %p426, %p427
      %p429 = scmp.ne.s32.totalorder %s421, %s423
      %p430 = scmp.eq.s32.totalorder %s38, 3
      %p431 = por %p429, %p430
      %p432 = scmp.ne.s32.totalorder %s423, %s424
      %p433 = scmp.eq.s32.totalorder %s38, 0
      %p434 = por %p432, %p433
      %p435 = scmp.ne.s32.totalorder %s423, %s424
      %p436 = scmp.eq.s32.totalorder %s39, 3
      %p437 = por %p435, %p436
      %p439 = scmp.ne.s32.totalorder %s424, %s438
      %p440 = scmp.eq.s32.totalorder %s39, 0
      %p441 = por %p439, %p440
      %s443 = sadd.s32 %s442, 1
      %p446 = scmp.eq.s32.totalorder %s33, 3
      %p447 = scmp.ne.s32.totalorder %s442, %s444
      %p448 = scmp.eq.s32.totalorder %s33, 0
      %p449 = por %p447, %p448
      %p450 = scmp.ne.s32.totalorder %s442, %s444
      %p451 = scmp.eq.s32.totalorder %s38, 3
      %p452 = por %p450, %p451
      %p453 = scmp.ne.s32.totalorder %s444, %s445
      %p454 = scmp.eq.s32.totalorder %s38, 0
      %p455 = por %p453, %p454
      %p456 = scmp.ne.s32.totalorder %s444, %s445
      %p457 = scmp.eq.s32.totalorder %s39, 3
      %p458 = por %p456, %p457
      %p460 = scmp.ne.s32.totalorder %s445, %s459
      %p461 = scmp.eq.s32.totalorder %s39, 0
      %p462 = por %p460, %p461
      %s464 = sadd.s32 %s463, 1
      %p467 = scmp.eq.s32.totalorder %s33, 3
      %p468 = scmp.ne.s32.totalorder %s463, %s465
      %p469 = scmp.eq.s32.totalorder %s33, 0
      %p470 = por %p468, %p469
      %p471 = scmp.ne.s32.totalorder %s463, %s465
      %p472 = scmp.eq.s32.totalorder %s38, 3
      %p473 = por %p471, %p472
      %p474 = scmp.ne.s32.totalorder %s465, %s466
      %p475 = scmp.eq.s32.totalorder %s38, 0
      %p476 = por %p474, %p475
      %p477 = scmp.ne.s32.totalorder %s465, %s466
      %p478 = scmp.eq.s32.totalorder %s39, 3
      %p479 = por %p477, %p478
      %p481 = scmp.ne.s32.totalorder %s466, %s480
      %p482 = scmp.eq.s32.totalorder %s39, 0
      %p483 = por %p481, %p482
      %s485 = sadd.s32 %s484, 1
      %p488 = scmp.eq.s32.totalorder %s33, 3
      %p489 = scmp.ne.s32.totalorder %s484, %s486
      %p490 = scmp.eq.s32.totalorder %s33, 0
      %p491 = por %p489, %p490
      %p492 = scmp.ne.s32.totalorder %s484, %s486
      %p493 = scmp.eq.s32.totalorder %s38, 3
      %p494 = por %p492, %p493
      %p495 = scmp.ne.s32.totalorder %s486, %s487
      %p496 = scmp.eq.s32.totalorder %s38, 0
      %p497 = por %p495, %p496
      %p498 = scmp.ne.s32.totalorder %s486, %s487
      %p499 = scmp.eq.s32.totalorder %s39, 3
      %p500 = por %p498, %p499
      %p502 = scmp.ne.s32.totalorder %s487, %s501
      %p503 = scmp.eq.s32.totalorder %s39, 0
      %p504 = por %p502, %p503
      %s506 = sadd.s32 %s505, 1
      %p509 = scmp.eq.s32.totalorder %s33, 3
      %p510 = scmp.ne.s32.totalorder %s505, %s507
      %p511 = scmp.eq.s32.totalorder %s33, 0
      %p512 = por %p510, %p511
      %p513 = scmp.ne.s32.totalorder %s505, %s507
      %p514 = scmp.eq.s32.totalorder %s38, 3
      %p515 = por %p513, %p514
      %p516 = scmp.ne.s32.totalorder %s507, %s508
      %p517 = scmp.eq.s32.totalorder %s38, 0
      %p518 = por %p516, %p517
      %p519 = scmp.ne.s32.totalorder %s507, %s508
      %p520 = scmp.eq.s32.totalorder %s39, 3
      %p521 = por %p519, %p520
      %p523 = scmp.ne.s32.totalorder %s508, %s522
      %p524 = scmp.eq.s32.totalorder %s39, 0
      %p525 = por %p523, %p524
      %s527 = sadd.s32 %s526, 1
      %p530 = scmp.eq.s32.totalorder %s33, 3
      %p531 = scmp.ne.s32.totalorder %s526, %s528
      %p532 = scmp.eq.s32.totalorder %s33, 0
      %p533 = por %p531, %p532
      %p534 = scmp.ne.s32.totalorder %s526, %s528
      %p535 = scmp.eq.s32.totalorder %s38, 3
      %p536 = por %p534, %p535
      %p537 = scmp.ne.s32.totalorder %s528, %s529
      %p538 = scmp.eq.s32.totalorder %s38, 0
      %p539 = por %p537, %p538
      %p540 = scmp.ne.s32.totalorder %s528, %s529
      %p541 = scmp.eq.s32.totalorder %s39, 3
      %p542 = por %p540, %p541
      %p544 = scmp.ne.s32.totalorder %s529, %s543
      %p545 = scmp.eq.s32.totalorder %s39, 0
      %p546 = por %p544, %p545
      %s548 = sadd.s32 %s547, 1
      %p551 = scmp.eq.s32.totalorder %s33, 3
      %p552 = scmp.ne.s32.totalorder %s547, %s549
      %p553 = scmp.eq.s32.totalorder %s33, 0
      %p554 = por %p552, %p553
      %p555 = scmp.ne.s32.totalorder %s547, %s549
      %p556 = scmp.eq.s32.totalorder %s38, 3
      %p557 = por %p555, %p556
      %p558 = scmp.ne.s32.totalorder %s549, %s550
      %p559 = scmp.eq.s32.totalorder %s38, 0
      %p560 = por %p558, %p559
      %p561 = scmp.ne.s32.totalorder %s549, %s550
      %p562 = scmp.eq.s32.totalorder %s39, 3
      %p563 = por %p561, %p562
      %p565 = scmp.ne.s32.totalorder %s550, %s564
      %p566 = scmp.eq.s32.totalorder %s39, 0
      %p567 = por %p565, %p566
      %s569 = sadd.s32 %s568, 1
      %p572 = scmp.eq.s32.totalorder %s33, 3
      %p573 = scmp.ne.s32.totalorder %s568, %s570
      %p574 = scmp.eq.s32.totalorder %s33, 0
      %p575 = por %p573, %p574
      %p576 = scmp.ne.s32.totalorder %s568, %s570
      %p577 = scmp.eq.s32.totalorder %s38, 3
      %p578 = por %p576, %p577
      %p579 = scmp.ne.s32.totalorder %s570, %s571
      %p580 = scmp.eq.s32.totalorder %s38, 0
      %p581 = por %p579, %p580
      %p582 = scmp.ne.s32.totalorder %s570, %s571
      %p583 = scmp.eq.s32.totalorder %s39, 3
      %p584 = por %p582, %p583
      %p586 = scmp.ne.s32.totalorder %s571, %s585
      %p587 = scmp.eq.s32.totalorder %s39, 0
      %p588 = por %p586, %p587
      %s589 = ssub.s32 %s40, %s52
      %s590 = ssub.s32 %s41, %s48
      %s591 = sor.u32 %s589, %s590
      %p592 = scmp.eq.s32.totalorder %s591, 0
      %s594 = sadd.s32 %s593, 1
      %s595 = scalar_select %p592, %s593, %s594
      %p598 = pneg %p592
      %p599 = scmp.eq.s32.totalorder %s33, 3
      %p600 = por %p598, %p599
      %p601 = scmp.ne.s32.totalorder %s593, %s596
      %p602 = scmp.eq.s32.totalorder %s33, 0
      %p603 = por %p601, %p602
      %p604 = scmp.ne.s32.totalorder %s593, %s596
      %p605 = scmp.eq.s32.totalorder %s38, 3
      %p606 = por %p604, %p605
      %p607 = scmp.ne.s32.totalorder %s596, %s597
      %p608 = scmp.eq.s32.totalorder %s38, 0
      %p609 = por %p607, %p608
      %p610 = scmp.ne.s32.totalorder %s596, %s597
      %p611 = scmp.eq.s32.totalorder %s39, 3
      %p612 = por %p610, %p611
      %p614 = scmp.ne.s32.totalorder %s597, %s613
      %p615 = scmp.eq.s32.totalorder %s39, 0
      %p616 = por %p614, %p615
      %p617 = scmp.le.s32.totalorder 1, %s33
      %p618 = scmp.lt.s32.totalorder %s33, 5
      %p619 = pnand %p617, %p618
      %p620 = pneg %p619
      // Predicated region
      $region9: #{tpu_custom_call.1} parent=5 // pred_check
        _
      $region10: #{tpu_custom_call.1} parent=5 // pred_check_branch
        %622 = sbr.rel (%p619) target = $region12
      $region11: #{tpu_custom_call.1} parent=5 // pred_region
        %s623 = ssub.s32 %s33, 1
        // Predicated region
        $region13: #{tpu_custom_call.1} parent=11 // pred_check
          %p624 = pneg %p224
        $region14: #{tpu_custom_call.1} parent=11 // pred_check_branch
          %626 = sbr.rel (%p624) target = $region16
        $region15: #{tpu_custom_call.1} parent=11 // pred_region
          _
        $region16: #{tpu_custom_call.1} parent=11 // pred_fallthru
          _
        // Predicated region
        $region17: #{tpu_custom_call.1} parent=11 // pred_check
          %p627 = pneg %p245
        $region18: #{tpu_custom_call.1} parent=11 // pred_check_branch
          %629 = sbr.rel (%p627) target = $region20
        $region19: #{tpu_custom_call.1} parent=11 // pred_region
          _
        $region20: #{tpu_custom_call.1} parent=11 // pred_fallthru
          _
        // Predicated region
        $region21: #{tpu_custom_call.1} parent=11 // pred_check
          %p630 = pneg %p266
        $region22: #{tpu_custom_call.1} parent=11 // pred_check_branch
          %632 = sbr.rel (%p630) target = $region24
        $region23: #{tpu_custom_call.1} parent=11 // pred_region
          _
        $region24: #{tpu_custom_call.1} parent=11 // pred_fallthru
          _
        // Predicated region
        $region25: #{tpu_custom_call.1} parent=11 // pred_check
          %p633 = pneg %p287
        $region26: #{tpu_custom_call.1} parent=11 // pred_check_branch
          %635 = sbr.rel (%p633) target = $region28
        $region27: #{tpu_custom_call.1} parent=11 // pred_region
          _
        $region28: #{tpu_custom_call.1} parent=11 // pred_fallthru
          _
        // Predicated region
        $region29: #{tpu_custom_call.1} parent=11 // pred_check
          %p636 = pneg %p308
        $region30: #{tpu_custom_call.1} parent=11 // pred_check_branch
          %638 = sbr.rel (%p636) target = $region32
        $region31: #{tpu_custom_call.1} parent=11 // pred_region
          _
        $region32: #{tpu_custom_call.1} parent=11 // pred_fallthru
          _
        // Predicated region
        $region33: #{tpu_custom_call.1} parent=11 // pred_check
          %p639 = pneg %p329
        $region34: #{tpu_custom_call.1} parent=11 // pred_check_branch
          %641 = sbr.rel (%p639) target = $region36
        $region35: #{tpu_custom_call.1} parent=11 // pred_region
          _
        $region36: #{tpu_custom_call.1} parent=11 // pred_fallthru
          _
        // Predicated region
        $region37: #{tpu_custom_call.1} parent=11 // pred_check
          %p642 = pneg %p350
        $region38: #{tpu_custom_call.1} parent=11 // pred_check_branch
          %644 = sbr.rel (%p642) target = $region40
        $region39: #{tpu_custom_call.1} parent=11 // pred_region
          _
        $region40: #{tpu_custom_call.1} parent=11 // pred_fallthru
          _
        // Predicated region
        $region41: #{tpu_custom_call.1} parent=11 // pred_check
          %p645 = pneg %p371
        $region42: #{tpu_custom_call.1} parent=11 // pred_check_branch
          %647 = sbr.rel (%p645) target = $region44
        $region43: #{tpu_custom_call.1} parent=11 // pred_region
          _
        $region44: #{tpu_custom_call.1} parent=11 // pred_fallthru
          _
        // Predicated region
        $region45: #{tpu_custom_call.1} parent=11 // pred_check
          %p648 = pneg %p392
        $region46: #{tpu_custom_call.1} parent=11 // pred_check_branch
          %650 = sbr.rel (%p648) target = $region48
        $region47: #{tpu_custom_call.1} parent=11 // pred_region
          _
        $region48: #{tpu_custom_call.1} parent=11 // pred_fallthru
          _
        // Predicated region
        $region49: #{tpu_custom_call.1} parent=11 // pred_check
          %p651 = pneg %p413
        $region50: #{tpu_custom_call.1} parent=11 // pred_check_branch
          %653 = sbr.rel (%p651) target = $region52
        $region51: #{tpu_custom_call.1} parent=11 // pred_region
          _
        $region52: #{tpu_custom_call.1} parent=11 // pred_fallthru
          _
        // Predicated region
        $region53: #{tpu_custom_call.1} parent=11 // pred_check
          %p654 = pneg %p434
        $region54: #{tpu_custom_call.1} parent=11 // pred_check_branch
          %656 = sbr.rel (%p654) target = $region56
        $region55: #{tpu_custom_call.1} parent=11 // pred_region
          _
        $region56: #{tpu_custom_call.1} parent=11 // pred_fallthru
          _
        // Predicated region
        $region57: #{tpu_custom_call.1} parent=11 // pred_check
          %p657 = pneg %p455
        $region58: #{tpu_custom_call.1} parent=11 // pred_check_branch
          %659 = sbr.rel (%p657) target = $region60
        $region59: #{tpu_custom_call.1} parent=11 // pred_region
          _
        $region60: #{tpu_custom_call.1} parent=11 // pred_fallthru
          _
        // Predicated region
        $region61: #{tpu_custom_call.1} parent=11 // pred_check
          %p660 = pneg %p476
        $region62: #{tpu_custom_call.1} parent=11 // pred_check_branch
          %662 = sbr.rel (%p660) target = $region64
        $region63: #{tpu_custom_call.1} parent=11 // pred_region
          _
        $region64: #{tpu_custom_call.1} parent=11 // pred_fallthru
          _
        // Predicated region
        $region65: #{tpu_custom_call.1} parent=11 // pred_check
          %p663 = pneg %p497
        $region66: #{tpu_custom_call.1} parent=11 // pred_check_branch
          %665 = sbr.rel (%p663) target = $region68
        $region67: #{tpu_custom_call.1} parent=11 // pred_region
          _
        $region68: #{tpu_custom_call.1} parent=11 // pred_fallthru
          _
        // Predicated region
        $region69: #{tpu_custom_call.1} parent=11 // pred_check
          %p666 = pneg %p518
        $region70: #{tpu_custom_call.1} parent=11 // pred_check_branch
          %668 = sbr.rel (%p666) target = $region72
        $region71: #{tpu_custom_call.1} parent=11 // pred_region
          _
        $region72: #{tpu_custom_call.1} parent=11 // pred_fallthru
          _
        // Predicated region
        $region73: #{tpu_custom_call.1} parent=11 // pred_check
          %p669 = pneg %p539
        $region74: #{tpu_custom_call.1} parent=11 // pred_check_branch
          %671 = sbr.rel (%p669) target = $region76
        $region75: #{tpu_custom_call.1} parent=11 // pred_region
          _
        $region76: #{tpu_custom_call.1} parent=11 // pred_fallthru
          _
        // Predicated region
        $region77: #{tpu_custom_call.1} parent=11 // pred_check
          %p672 = pneg %p560
        $region78: #{tpu_custom_call.1} parent=11 // pred_check_branch
          %674 = sbr.rel (%p672) target = $region80
        $region79: #{tpu_custom_call.1} parent=11 // pred_region
          _
        $region80: #{tpu_custom_call.1} parent=11 // pred_fallthru
          _
        // Predicated region
        $region81: #{tpu_custom_call.1} parent=11 // pred_check
          %p675 = pneg %p581
        $region82: #{tpu_custom_call.1} parent=11 // pred_check_branch
          %677 = sbr.rel (%p675) target = $region84
        $region83: #{tpu_custom_call.1} parent=11 // pred_region
          _
        $region84: #{tpu_custom_call.1} parent=11 // pred_fallthru
          _
      $region12: #{tpu_custom_call.1} parent=5 // pred_fallthru
        _
      %p678 = scmp.lt.s32.totalorder %s33, 4
      // Predicated region
      $region85: #{tpu_custom_call.1} parent=5 // pred_check
        %p679 = pneg %p678
      $region86: #{tpu_custom_call.1} parent=5 // pred_check_branch
        %681 = sbr.rel (%p679) target = $region88
      $region87: #{tpu_custom_call.1} parent=5 // pred_region
        // Predicated region
        $region89: #{tpu_custom_call.1} parent=87 // pred_check
          %p682 = pneg %p67
        $region90: #{tpu_custom_call.1} parent=87 // pred_check_branch
          %684 = sbr.rel (%p682) target = $region92
        $region91: #{tpu_custom_call.1} parent=87 // pred_region
          %p685 = scmp.lt.s32.totalorder %s40, 1
          %s686 = scalar_select %p685, %s40, 1
          %p687 = scmp.lt.s32.totalorder %s41, 1
          %s688 = scalar_select %p687, %s41, 1
          %s689 = smul.addr %s686, 2
          %s690 = sadd.s32 %s688, %s689
          %s691 = smul.addr %s690, 8
          %s692 = scalar_lea.vmem %s0, %s691
        $region92: #{tpu_custom_call.1} parent=87 // pred_fallthru
          _
        // Predicated region
        $region93: #{tpu_custom_call.1} parent=87 // pred_check
          %p693 = pneg %p93
        $region94: #{tpu_custom_call.1} parent=87 // pred_check_branch
          %695 = sbr.rel (%p693) target = $region96
        $region95: #{tpu_custom_call.1} parent=87 // pred_region
          %p696 = scmp.lt.s32.totalorder %s40, 1
          %s697 = scalar_select %p696, %s40, 1
          %s698 = scalar_lea.vmem %s1, %s697
        $region96: #{tpu_custom_call.1} parent=87 // pred_fallthru
          _
        // Predicated region
        $region97: #{tpu_custom_call.1} parent=87 // pred_check
          %p699 = pneg %p119
        $region98: #{tpu_custom_call.1} parent=87 // pred_check_branch
          %701 = sbr.rel (%p699) target = $region100
        $region99: #{tpu_custom_call.1} parent=87 // pred_region
          %p702 = scmp.lt.s32.totalorder %s40, 1
          %s703 = scalar_select %p702, %s40, 1
          %s704 = smul.addr %s703, 8
          %s705 = smul.addr %s704, 4
          %s706 = scalar_lea.vmem %s2, %s705
        $region100: #{tpu_custom_call.1} parent=87 // pred_fallthru
          _
        // Predicated region
        $region101: #{tpu_custom_call.1} parent=87 // pred_check
          %p707 = pneg %p145
        $region102: #{tpu_custom_call.1} parent=87 // pred_check_branch
          %709 = sbr.rel (%p707) target = $region104
        $region103: #{tpu_custom_call.1} parent=87 // pred_region
          %p710 = scmp.lt.s32.totalorder %s40, 1
          %s711 = scalar_select %p710, %s40, 1
          %s712 = smul.addr %s711, 8
          %s713 = smul.addr %s712, 4
          %s714 = scalar_lea.vmem %s3, %s713
        $region104: #{tpu_custom_call.1} parent=87 // pred_fallthru
          _
        // Predicated region
        $region105: #{tpu_custom_call.1} parent=87 // pred_check
          %p715 = pneg %p171
        $region106: #{tpu_custom_call.1} parent=87 // pred_check_branch
          %717 = sbr.rel (%p715) target = $region108
        $region107: #{tpu_custom_call.1} parent=87 // pred_region
          %p718 = scmp.lt.s32.totalorder %s40, 1
          %s719 = scalar_select %p718, %s40, 1
          %s720 = smul.addr %s719, 8
          %s721 = smul.addr %s720, 4
          %s722 = scalar_lea.vmem %s4, %s721
        $region108: #{tpu_custom_call.1} parent=87 // pred_fallthru
          _
        // Predicated region
        $region109: #{tpu_custom_call.1} parent=87 // pred_check
          %p723 = pneg %p197
        $region110: #{tpu_custom_call.1} parent=87 // pred_check_branch
          %725 = sbr.rel (%p723) target = $region112
        $region111: #{tpu_custom_call.1} parent=87 // pred_region
          %p726 = scmp.lt.s32.totalorder %s40, 1
          %s727 = scalar_select %p726, %s40, 1
          %s728 = smul.addr %s727, 8
          %s729 = smul.addr %s728, 4
          %s730 = scalar_lea.vmem %s5, %s729
        $region112: #{tpu_custom_call.1} parent=87 // pred_fallthru
          _
      $region88: #{tpu_custom_call.1} parent=5 // pred_fallthru
        _
      %p731 = scmp.le.s32.totalorder 1, %s33
      %p732 = scmp.lt.s32.totalorder %s33, 5
      %p733 = pnand %p731, %p732
      %p734 = pneg %p733
      // Predicated region
      $region113: #{tpu_custom_call.1} parent=5 // pred_check
        _
      $region114: #{tpu_custom_call.1} parent=5 // pred_check_branch
        %736 = sbr.rel (%p733) target = $region116
      $region115: #{tpu_custom_call.1} parent=5 // pred_region
        %s737 = ssub.s32 %s33, 1
        %p738 = scmp.lt.s32.totalorder %s42, 1
        %s739 = scalar_select %p738, %s42, 1
        %p740 = scmp.lt.s32.totalorder %s43, 1
        %s741 = scalar_select %p740, %s43, 1
        %s742 = smul.addr %s739, 2
        %s743 = sadd.s32 %s741, %s742
        %s744 = smul.addr %s743, 8
        %s745 = scalar_lea.vmem %s0, %s744
        %p746 = pneg %p73
        %p747 = pneg %p70
        %p748 = scmp.lt.s32.totalorder %s42, 1
        %s749 = scalar_select %p748, %s42, 1
        %s750 = scalar_lea.vmem %s1, %s749
        %p751 = pneg %p99
        %p752 = pneg %p96
        %p753 = scmp.lt.s32.totalorder %s42, 1
        %s754 = scalar_select %p753, %s42, 1
        %s755 = smul.addr %s754, 8
        %s756 = smul.addr %s755, 4
        %s757 = scalar_lea.vmem %s2, %s756
        %p758 = pneg %p125
        %p759 = pneg %p122
        %p760 = scmp.lt.s32.totalorder %s42, 1
        %s761 = scalar_select %p760, %s42, 1
        %s762 = smul.addr %s761, 8
        %s763 = smul.addr %s762, 4
        %s764 = scalar_lea.vmem %s3, %s763
        %p765 = pneg %p151
        %p766 = pneg %p148
        %p767 = scmp.lt.s32.totalorder %s42, 1
        %s768 = scalar_select %p767, %s42, 1
        %s769 = smul.addr %s768, 8
        %s770 = smul.addr %s769, 4
        %s771 = scalar_lea.vmem %s4, %s770
        %p772 = pneg %p177
        %p773 = pneg %p174
        %p774 = scmp.lt.s32.totalorder %s42, 1
        %s775 = scalar_select %p774, %s42, 1
        %s776 = smul.addr %s775, 8
        %s777 = smul.addr %s776, 4
        %s778 = scalar_lea.vmem %s5, %s777
        %p779 = pneg %p203
        %p780 = pneg %p200
        %p781 = pneg %p224
        %p782 = pneg %p221
        %p783 = pneg %p245
        %p784 = pneg %p242
        %p785 = pneg %p266
        %p786 = pneg %p263
        %p787 = pneg %p287
        %p788 = pneg %p284
        %p789 = pneg %p308
        %p790 = pneg %p305
        %p791 = pneg %p329
        %p792 = pneg %p326
        %p793 = pneg %p350
        %p794 = pneg %p347
        %p795 = pneg %p371
        %p796 = pneg %p368
        %p797 = pneg %p392
        %p798 = pneg %p389
        %p799 = pneg %p413
        %p800 = pneg %p410
        %p801 = pneg %p434
        %p802 = pneg %p431
        %p803 = pneg %p455
        %p804 = pneg %p452
        %p805 = pneg %p476
        %p806 = pneg %p473
        %p807 = pneg %p497
        %p808 = pneg %p494
        %p809 = pneg %p518
        %p810 = pneg %p515
        %p811 = pneg %p539
        %p812 = pneg %p536
        %p813 = pneg %p560
        %p814 = pneg %p557
        %p815 = pneg %p581
        %p816 = pneg %p578
        %p817 = pneg %p609
        %p818 = pneg %p606
        %s819 = sand.u32 %s596, 1
        %s820 = scalar_lea.sflag [#allocation4], %s819
        %s821 = sand.u32 %s596, 1
        %s822 = smul.addr %s821, 8
        %s823 = scalar_lea.vmem [#allocation3], %s822
        %p824 = scmp.lt.s32.totalorder %s42, 1
        %s825 = scalar_select %p824, %s42, 1
        %p826 = scmp.lt.s32.totalorder %s43, 1
        %s827 = scalar_select %p826, %s43, 1
        %s828 = smul.addr %s825, 2
        %s829 = sadd.s32 %s827, %s828
        %s830 = smul.addr %s829, 8
        %s831 = scalar_lea.vmem %s0, %s830
        %p832 = scmp.lt.s32.totalorder %s42, 1
        %s833 = scalar_select %p832, %s42, 1
        %s834 = scalar_lea.vmem %s1, %s833
        %p835 = scmp.lt.s32.totalorder %s42, 1
        %s836 = scalar_select %p835, %s42, 1
        %s837 = smul.addr %s836, 8
        %s838 = smul.addr %s837, 4
        %s839 = scalar_lea.vmem %s2, %s838
        %p840 = scmp.lt.s32.totalorder %s42, 1
        %s841 = scalar_select %p840, %s42, 1
        %s842 = smul.addr %s841, 8
        %s843 = smul.addr %s842, 4
        %s844 = scalar_lea.vmem %s3, %s843
        %p845 = scmp.lt.s32.totalorder %s42, 1
        %s846 = scalar_select %p845, %s42, 1
        %s847 = smul.addr %s846, 8
        %s848 = smul.addr %s847, 4
        %s849 = scalar_lea.vmem %s4, %s848
        %p850 = scmp.lt.s32.totalorder %s42, 1
        %s851 = scalar_select %p850, %s42, 1
        %s852 = smul.addr %s851, 8
        %s853 = smul.addr %s852, 4
        %s854 = scalar_lea.vmem %s5, %s853
        %s856 = smul.u32 %s43, 8
        %v857 = vld [vmem:[%s831] sm:$0xff]
        %v858 = vpack.c.bf16 %v857, %v857
        %v859 = vld [vmem:[%s6] sm:$0xf]
        %v860 = vld [vmem:[%s6 + $0x4] sm:$0xf]
        %v861 = vld [vmem:[%s6 + $0x8] sm:$0xf]
        %v862 = vld [vmem:[%s6 + $0xc] sm:$0xf]
        %v863 = vld [vmem:[%s7] sm:$0x1]
        %v865 = vlaneseq
        %v866 = vshrl.u32 %v865, 7
        %v867 = vsub.s32 0, %v866
        %v868 = vrot.slane %v863, %v867
        %v874 = vunpack.c.l.b16 %v859
        %v875 = vunpack.c.l.b16 %v860
        %v876 = vunpack.c.l.b16 %v861
        %v877 = vunpack.c.l.b16 %v862
        %v878 = vpack.c.b16 %v875, %v874
        %v879 = vpack.c.b16 %v877, %v876
        %vm882 = vcmask 261120
        %v884 = vsel %vm882, %v858, 0
        %886 = vmatprep.subr.bf16.mxu0 0
        %887 = vmatpush1.bf16.msra.mxu0 %v878
        %888 = vmatprep.subr.bf16.mxu0 0
        %889 = vmatpush1.bf16.msra.mxu0 %v879
        %890 = vmatprep.subr.bf16.mxu0 0
        %891 = vmatpush1.bf16.msra.mxu0 0
        %892 = vmatprep.subr.bf16.mxu0 0
        %893 = vmatpush1.bf16.msra.mxu0 0
        %894 = vmatprep.subr.bf16.mxu0 0
        %895 = vmatpush1.bf16.msra.mxu0 0
        %896 = vmatprep.subr.bf16.mxu0 0
        %897 = vmatpush1.bf16.msra.mxu0 0
        %898 = vmatprep.subr.bf16.mxu0 0
        %899 = vmatpush1.bf16.msra.mxu0 0
        %900 = vmatprep.subr.bf16.mxu0 0
        %901 = vmatpush1.bf16.msra.mxu0 0
        %902 = vmatprep.subr.bf16.mxu0 0
        %903 = vmatpush1.bf16.msra.mxu0 0
        %904 = vmatprep.subr.bf16.mxu0 0
        %905 = vmatpush1.bf16.msra.mxu0 0
        %906 = vmatprep.subr.bf16.mxu0 0
        %907 = vmatpush1.bf16.msra.mxu0 0
        %908 = vmatprep.subr.bf16.mxu0 0
        %909 = vmatpush1.bf16.msra.mxu0 0
        %910 = vmatprep.subr.bf16.mxu0 0
        %911 = vmatpush1.bf16.msra.mxu0 0
        %912 = vmatprep.subr.bf16.mxu0 0
        %913 = vmatpush1.bf16.msra.mxu0 0
        %914 = vmatprep.subr.bf16.mxu0 0
        %915 = vmatpush1.bf16.msra.mxu0 0
        %916 = vmatprep.subr.bf16.mxu0 0
        %917 = vmatpush1.bf16.msra.mxu0 0
        %918 = vmatprep.mubr.bf16.mxu0 0
        %919 = vmatmul.mubr.bf16.gmra.mrb[0].mxu0 %v884
        %v920 = vpop.f32.mrb[0].mxu0
        %v921 = vadd.f32 %v868, %v920
        %v922 = vpop.f32.mrb[0].mxu0
        %v923 = vpop.f32.mrb[0].mxu0
        %v924 = vpop.f32.mrb[0].mxu0
        %925 = vdwg.mxu0
        %v926 = vpack.c.bf16 %v921, %v921
        %v927 = vld [vmem:[%s839] sm:$0xf]
        %v928 = vld [vmem:[%s839 + $0x4] sm:$0xf]
        %v929 = vld [vmem:[%s844] sm:$0xf]
        %v930 = vld [vmem:[%s844 + $0x4] sm:$0xf]
        %v933 = vunpack.c.l.b16 %v927
        %v934 = vunpack.c.l.b16 %v928
        %v935 = vpack.c.b16 %v934, %v933
        %vm936 = vcmask 64512
        %v938 = vsel %vm936, %v926, 0
        %v941 = vsel %vm936, %v935, 0
        %943 = vmatprep.subr.bf16.mxu0 0
        %944 = vmatpush1.bf16.xpose.msra.mxu0 %v941
        %945 = vmatprep.subr.bf16.mxu0 0
        %946 = vmatpush1.bf16.xpose.msra.mxu0 0
        %947 = vmatprep.subr.bf16.mxu0 0
        %948 = vmatpush1.bf16.xpose.msra.mxu0 0
        %949 = vmatprep.subr.bf16.mxu0 0
        %950 = vmatpush1.bf16.xpose.msra.mxu0 0
        %951 = vmatprep.subr.bf16.mxu0 0
        %952 = vmatpush1.bf16.xpose.msra.mxu0 0
        %953 = vmatprep.subr.bf16.mxu0 0
        %954 = vmatpush1.bf16.xpose.msra.mxu0 0
        %955 = vmatprep.subr.bf16.mxu0 0
        %956 = vmatpush1.bf16.xpose.msra.mxu0 0
        %957 = vmatprep.subr.bf16.mxu0 0
        %958 = vmatpush1.bf16.xpose.msra.mxu0 0
        %959 = vmatprep.subr.bf16.mxu0 0
        %960 = vmatpush1.bf16.xpose.msra.mxu0 0
        %961 = vmatprep.subr.bf16.mxu0 0
        %962 = vmatpush1.bf16.xpose.msra.mxu0 0
        %963 = vmatprep.subr.bf16.mxu0 0
        %964 = vmatpush1.bf16.xpose.msra.mxu0 0
        %965 = vmatprep.subr.bf16.mxu0 0
        %966 = vmatpush1.bf16.xpose.msra.mxu0 0
        %967 = vmatprep.subr.bf16.mxu0 0
        %968 = vmatpush1.bf16.xpose.msra.mxu0 0
        %969 = vmatprep.subr.bf16.mxu0 0
        %970 = vmatpush1.bf16.xpose.msra.mxu0 0
        %971 = vmatprep.subr.bf16.mxu0 0
        %972 = vmatpush1.bf16.xpose.msra.mxu0 0
        %973 = vmatprep.subr.bf16.mxu0 0
        %974 = vmatpush1.bf16.xpose.msra.mxu0 0
        %975 = vmatprep.mubr.bf16.mxu0 0
        %976 = vmatmul.mubr.bf16.gmra.mrb[0].mxu0 %v938
        %v977 = vpop.f32.mrb[0].mxu0
        %v978 = vadd.f32 0.0, %v977
        %v979 = vpop.f32.mrb[0].mxu0
        %v980 = vpop.f32.mrb[0].mxu0
        %v981 = vpop.f32.mrb[0].mxu0
        %982 = vdwg.mxu0
        %v983 = vlaneseq
        %v984 = vshrl.u32 %v983, 7
        %v985 = vstv %s856
        %v986 = vadd.s32 %v985, %v984
        %v987 = vlaneseq
        %v988 = vand.u32 %v987, 127
        %vm989 = vcmp.le.s32.totalorder %v988, %v986
        %v990 = vsel %vm989, %v978, -1e+09
        %vm991 = vcmask 130048
        %v992 = vsel %vm991, %v990, -inf
        %993 = vmax.xlane.f32.xlu0 %v992
        %v994 = vpop.xlane.xlu0 %993
        %v995 = vmax.f32 %v994, -1e+30
        %v996 = vsub.f32 %v990, %v995
        %v997 = vmul.f32 %v996, 1.442695
        %v998 = vpow.pop %v997
        %v999 = vsub.f32 -1e+30, %v995
        %v1000 = vmul.f32 %v999, 1.442695
        %v1001 = vpow.pop %v1000
        %v1002 = vmul.f32 %v1001, 0.0
        %v1003 = vsel %vm991, %v998, 0.0
        %1004 = vadd.xlane.f32.xlu0 %v1003
        %v1005 = vpop.xlane.xlu0 %1004
        %v1006 = vadd.f32 %v1002, %v1005
        %v1007 = vpack.c.bf16 %v998, %v998
        %v1010 = vunpack.c.l.b16 %v929
        %v1011 = vunpack.c.l.b16 %v930
        %v1012 = vpack.c.b16 %v1011, %v1010
        %v1015 = vsel %vm991, %v1007, 0
        %1017 = vmatprep.subr.bf16.mxu0 0
        %1018 = vmatpush1.bf16.msra.mxu0 %v1012
        %1019 = vmatprep.subr.bf16.mxu0 0
        %1020 = vmatpush1.bf16.msra.mxu0 0
        %1021 = vmatprep.subr.bf16.mxu0 0
        %1022 = vmatpush1.bf16.msra.mxu0 0
        %1023 = vmatprep.subr.bf16.mxu0 0
        %1024 = vmatpush1.bf16.msra.mxu0 0
        %1025 = vmatprep.subr.bf16.mxu0 0
        %1026 = vmatpush1.bf16.msra.mxu0 0
        %1027 = vmatprep.subr.bf16.mxu0 0
        %1028 = vmatpush1.bf16.msra.mxu0 0
        %1029 = vmatprep.subr.bf16.mxu0 0
        %1030 = vmatpush1.bf16.msra.mxu0 0
        %1031 = vmatprep.subr.bf16.mxu0 0
        %1032 = vmatpush1.bf16.msra.mxu0 0
        %1033 = vmatprep.subr.bf16.mxu0 0
        %1034 = vmatpush1.bf16.msra.mxu0 0
        %1035 = vmatprep.subr.bf16.mxu0 0
        %1036 = vmatpush1.bf16.msra.mxu0 0
        %1037 = vmatprep.subr.bf16.mxu0 0
        %1038 = vmatpush1.bf16.msra.mxu0 0
        %1039 = vmatprep.subr.bf16.mxu0 0
        %1040 = vmatpush1.bf16.msra.mxu0 0
        %1041 = vmatprep.subr.bf16.mxu0 0
        %1042 = vmatpush1.bf16.msra.mxu0 0
        %1043 = vmatprep.subr.bf16.mxu0 0
        %1044 = vmatpush1.bf16.msra.mxu0 0
        %1045 = vmatprep.subr.bf16.mxu0 0
        %1046 = vmatpush1.bf16.msra.mxu0 0
        %1047 = vmatprep.subr.bf16.mxu0 0
        %1048 = vmatpush1.bf16.msra.mxu0 0
        %1049 = vmatprep.mubr.bf16.mxu0 0
        %1050 = vmatmul.mubr.bf16.gmra.mrb[0].mxu0 %v1015
        %v1051 = vpop.f32.mrb[0].mxu0
        %v1052 = vadd.f32 0.0, %v1051
        %v1053 = vpop.f32.mrb[0].mxu0
        %v1054 = vpop.f32.mrb[0].mxu0
        %v1055 = vpop.f32.mrb[0].mxu0
        %1056 = vdwg.mxu0
        %v1057 = vadd.f32 %v1002, %v1052
        %v1058 = vrcp.pop %v1006
        %v1059 = vmul.f32 %v1057, %v1058
        %1060 = vst.msk [vmem:[#allocation2] sm:$0xff] %vm936, %v1059
        %s1061 = scalar_lea.vmem %s839, 8
        %v1062 = vld [vmem:[%s1061] sm:$0xf]
        %v1063 = vld [vmem:[%s1061 + $0x4] sm:$0xf]
        %s1064 = scalar_lea.vmem %s844, 8
        %v1065 = vld [vmem:[%s1064] sm:$0xf]
        %v1066 = vld [vmem:[%s1064 + $0x4] sm:$0xf]
        %1068 = vrot.lane.b32.xlu0 %v926, 120
        %v1069 = vpop.permute.xlu0 %1068
        %v1072 = vunpack.c.l.b16 %v1062
        %v1073 = vunpack.c.l.b16 %v1063
        %v1074 = vpack.c.b16 %v1073, %v1072
        %v1076 = vsel %vm936, %v1069, 0
        %v1079 = vsel %vm936, %v1074, 0
        %1081 = vmatprep.subr.bf16.mxu0 0
        %1082 = vmatpush1.bf16.xpose.msra.mxu0 %v1079
        %1083 = vmatprep.subr.bf16.mxu0 0
        %1084 = vmatpush1.bf16.xpose.msra.mxu0 0
        %1085 = vmatprep.subr.bf16.mxu0 0
        %1086 = vmatpush1.bf16.xpose.msra.mxu0 0
        %1087 = vmatprep.subr.bf16.mxu0 0
        %1088 = vmatpush1.bf16.xpose.msra.mxu0 0
        %1089 = vmatprep.subr.bf16.mxu0 0
        %1090 = vmatpush1.bf16.xpose.msra.mxu0 0
        %1091 = vmatprep.subr.bf16.mxu0 0
        %1092 = vmatpush1.bf16.xpose.msra.mxu0 0
        %1093 = vmatprep.subr.bf16.mxu0 0
        %1094 = vmatpush1.bf16.xpose.msra.mxu0 0
        %1095 = vmatprep.subr.bf16.mxu0 0
        %1096 = vmatpush1.bf16.xpose.msra.mxu0 0
        %1097 = vmatprep.subr.bf16.mxu0 0
        %1098 = vmatpush1.bf16.xpose.msra.mxu0 0
        %1099 = vmatprep.subr.bf16.mxu0 0
        %1100 = vmatpush1.bf16.xpose.msra.mxu0 0
        %1101 = vmatprep.subr.bf16.mxu0 0
        %1102 = vmatpush1.bf16.xpose.msra.mxu0 0
        %1103 = vmatprep.subr.bf16.mxu0 0
        %1104 = vmatpush1.bf16.xpose.msra.mxu0 0
        %1105 = vmatprep.subr.bf16.mxu0 0
        %1106 = vmatpush1.bf16.xpose.msra.mxu0 0
        %1107 = vmatprep.subr.bf16.mxu0 0
        %1108 = vmatpush1.bf16.xpose.msra.mxu0 0
        %1109 = vmatprep.subr.bf16.mxu0 0
        %1110 = vmatpush1.bf16.xpose.msra.mxu0 0
        %1111 = vmatprep.subr.bf16.mxu0 0
        %1112 = vmatpush1.bf16.xpose.msra.mxu0 0
        %1113 = vmatprep.mubr.bf16.mxu0 0
        %1114 = vmatmul.mubr.bf16.gmra.mrb[0].mxu0 %v1076
        %v1115 = vpop.f32.mrb[0].mxu0
        %v1116 = vadd.f32 0.0, %v1115
        %v1117 = vpop.f32.mrb[0].mxu0
        %v1118 = vpop.f32.mrb[0].mxu0
        %v1119 = vpop.f32.mrb[0].mxu0
        %1120 = vdwg.mxu0
        %v1121 = vsel %vm989, %v1116, -1e+09
        %v1122 = vsel %vm991, %v1121, -inf
        %1123 = vmax.xlane.f32.xlu0 %v1122
        %v1124 = vpop.xlane.xlu0 %1123
        %v1125 = vmax.f32 %v1124, -1e+30
        %v1126 = vsub.f32 %v1121, %v1125
        %v1127 = vmul.f32 %v1126, 1.442695
        %v1128 = vpow.pop %v1127
        %v1129 = vsub.f32 -1e+30, %v1125
        %v1130 = vmul.f32 %v1129, 1.442695
        %v1131 = vpow.pop %v1130
        %v1132 = vmul.f32 %v1131, 0.0
        %v1133 = vsel %vm991, %v1128, 0.0
        %1134 = vadd.xlane.f32.xlu0 %v1133
        %v1135 = vpop.xlane.xlu0 %1134
        %v1136 = vadd.f32 %v1132, %v1135
        %v1137 = vpack.c.bf16 %v1128, %v1128
        %v1140 = vunpack.c.l.b16 %v1065
        %v1141 = vunpack.c.l.b16 %v1066
        %v1142 = vpack.c.b16 %v1141, %v1140
        %v1145 = vsel %vm991, %v1137, 0
        %1147 = vmatprep.subr.bf16.mxu0 0
        %1148 = vmatpush1.bf16.msra.mxu0 %v1142
        %1149 = vmatprep.subr.bf16.mxu0 0
        %1150 = vmatpush1.bf16.msra.mxu0 0
        %1151 = vmatprep.subr.bf16.mxu0 0
        %1152 = vmatpush1.bf16.msra.mxu0 0
        %1153 = vmatprep.subr.bf16.mxu0 0
        %1154 = vmatpush1.bf16.msra.mxu0 0
        %1155 = vmatprep.subr.bf16.mxu0 0
        %1156 = vmatpush1.bf16.msra.mxu0 0
        %1157 = vmatprep.subr.bf16.mxu0 0
        %1158 = vmatpush1.bf16.msra.mxu0 0
        %1159 = vmatprep.subr.bf16.mxu0 0
        %1160 = vmatpush1.bf16.msra.mxu0 0
        %1161 = vmatprep.subr.bf16.mxu0 0
        %1162 = vmatpush1.bf16.msra.mxu0 0
        %1163 = vmatprep.subr.bf16.mxu0 0
        %1164 = vmatpush1.bf16.msra.mxu0 0
        %1165 = vmatprep.subr.bf16.mxu0 0
        %1166 = vmatpush1.bf16.msra.mxu0 0
        %1167 = vmatprep.subr.bf16.mxu0 0
        %1168 = vmatpush1.bf16.msra.mxu0 0
        %1169 = vmatprep.subr.bf16.mxu0 0
        %1170 = vmatpush1.bf16.msra.mxu0 0
        %1171 = vmatprep.subr.bf16.mxu0 0
        %1172 = vmatpush1.bf16.msra.mxu0 0
        %1173 = vmatprep.subr.bf16.mxu0 0
        %1174 = vmatpush1.bf16.msra.mxu0 0
        %1175 = vmatprep.subr.bf16.mxu0 0
        %1176 = vmatpush1.bf16.msra.mxu0 0
        %1177 = vmatprep.subr.bf16.mxu0 0
        %1178 = vmatpush1.bf16.msra.mxu0 0
        %1179 = vmatprep.mubr.bf16.mxu0 0
        %1180 = vmatmul.mubr.bf16.gmra.mrb[0].mxu0 %v1145
        %v1181 = vpop.f32.mrb[0].mxu0
        %v1182 = vadd.f32 0.0, %v1181
        %v1183 = vpop.f32.mrb[0].mxu0
        %v1184 = vpop.f32.mrb[0].mxu0
        %v1185 = vpop.f32.mrb[0].mxu0
        %1186 = vdwg.mxu0
        %v1187 = vadd.f32 %v1132, %v1182
        %v1188 = vrcp.pop %v1136
        %v1189 = vmul.f32 %v1187, %v1188
        %1191 = vrot.lane.b32.xlu0 %v1189, 8
        %v1192 = vpop.permute.xlu0 %1191
        %vm1194 = vcmask 130112
        %1195 = vst.msk [vmem:[#allocation2] sm:$0xff] %vm1194, %v1192
        %s1196 = scalar_lea.vmem %s839, 16
        %v1197 = vld [vmem:[%s1196] sm:$0xf]
        %v1198 = vld [vmem:[%s1196 + $0x4] sm:$0xf]
        %s1199 = scalar_lea.vmem %s844, 16
        %v1200 = vld [vmem:[%s1199] sm:$0xf]
        %v1201 = vld [vmem:[%s1199 + $0x4] sm:$0xf]
        %1202 = vrot.lane.b32.xlu0 %v926, 112
        %v1203 = vpop.permute.xlu0 %1202
        %v1206 = vunpack.c.l.b16 %v1197
        %v1207 = vunpack.c.l.b16 %v1198
        %v1208 = vpack.c.b16 %v1207, %v1206
        %v1210 = vsel %vm936, %v1203, 0
        %v1213 = vsel %vm936, %v1208, 0
        %1215 = vmatprep.subr.bf16.mxu0 0
        %1216 = vmatpush1.bf16.xpose.msra.mxu0 %v1213
        %1217 = vmatprep.subr.bf16.mxu0 0
        %1218 = vmatpush1.bf16.xpose.msra.mxu0 0
        %1219 = vmatprep.subr.bf16.mxu0 0
        %1220 = vmatpush1.bf16.xpose.msra.mxu0 0
        %1221 = vmatprep.subr.bf16.mxu0 0
        %1222 = vmatpush1.bf16.xpose.msra.mxu0 0
        %1223 = vmatprep.subr.bf16.mxu0 0
        %1224 = vmatpush1.bf16.xpose.msra.mxu0 0
        %1225 = vmatprep.subr.bf16.mxu0 0
        %1226 = vmatpush1.bf16.xpose.msra.mxu0 0
        %1227 = vmatprep.subr.bf16.mxu0 0
        %1228 = vmatpush1.bf16.xpose.msra.mxu0 0
        %1229 = vmatprep.subr.bf16.mxu0 0
        %1230 = vmatpush1.bf16.xpose.msra.mxu0 0
        %1231 = vmatprep.subr.bf16.mxu0 0
        %1232 = vmatpush1.bf16.xpose.msra.mxu0 0
        %1233 = vmatprep.subr.bf16.mxu0 0
        %1234 = vmatpush1.bf16.xpose.msra.mxu0 0
        %1235 = vmatprep.subr.bf16.mxu0 0
        %1236 = vmatpush1.bf16.xpose.msra.mxu0 0
        %1237 = vmatprep.subr.bf16.mxu0 0
        %1238 = vmatpush1.bf16.xpose.msra.mxu0 0
        %1239 = vmatprep.subr.bf16.mxu0 0
        %1240 = vmatpush1.bf16.xpose.msra.mxu0 0
        %1241 = vmatprep.subr.bf16.mxu0 0
        %1242 = vmatpush1.bf16.xpose.msra.mxu0 0
        %1243 = vmatprep.subr.bf16.mxu0 0
        %1244 = vmatpush1.bf16.xpose.msra.mxu0 0
        %1245 = vmatprep.subr.bf16.mxu0 0
        %1246 = vmatpush1.bf16.xpose.msra.mxu0 0
        %1247 = vmatprep.mubr.bf16.mxu0 0
        %1248 = vmatmul.mubr.bf16.gmra.mrb[0].mxu0 %v1210
        %v1249 = vpop.f32.mrb[0].mxu0
        %v1250 = vadd.f32 0.0, %v1249
        %v1251 = vpop.f32.mrb[0].mxu0
        %v1252 = vpop.f32.mrb[0].mxu0
        %v1253 = vpop.f32.mrb[0].mxu0
        %1254 = vdwg.mxu0
        %v1255 = vsel %vm989, %v1250, -1e+09
        %v1256 = vsel %vm991, %v1255, -inf
        %1257 = vmax.xlane.f32.xlu0 %v1256
        %v1258 = vpop.xlane.xlu0 %1257
        %v1259 = vmax.f32 %v1258, -1e+30
        %v1260 = vsub.f32 %v1255, %v1259
        %v1261 = vmul.f32 %v1260, 1.442695
        %v1262 = vpow.pop %v1261
        %v1263 = vsub.f32 -1e+30, %v1259
        %v1264 = vmul.f32 %v1263, 1.442695
        %v1265 = vpow.pop %v1264
        %v1266 = vmul.f32 %v1265, 0.0
        %v1267 = vsel %vm991, %v1262, 0.0
        %1268 = vadd.xlane.f32.xlu0 %v1267
        %v1269 = vpop.xlane.xlu0 %1268
        %v1270 = vadd.f32 %v1266, %v1269
        %v1271 = vpack.c.bf16 %v1262, %v1262
        %v1274 = vunpack.c.l.b16 %v1200
        %v1275 = vunpack.c.l.b16 %v1201
        %v1276 = vpack.c.b16 %v1275, %v1274
        %v1279 = vsel %vm991, %v1271, 0
        %1281 = vmatprep.subr.bf16.mxu0 0
        %1282 = vmatpush1.bf16.msra.mxu0 %v1276
        %1283 = vmatprep.subr.bf16.mxu0 0
        %1284 = vmatpush1.bf16.msra.mxu0 0
        %1285 = vmatprep.subr.bf16.mxu0 0
        %1286 = vmatpush1.bf16.msra.mxu0 0
        %1287 = vmatprep.subr.bf16.mxu0 0
        %1288 = vmatpush1.bf16.msra.mxu0 0
        %1289 = vmatprep.subr.bf16.mxu0 0
        %1290 = vmatpush1.bf16.msra.mxu0 0
        %1291 = vmatprep.subr.bf16.mxu0 0
        %1292 = vmatpush1.bf16.msra.mxu0 0
        %1293 = vmatprep.subr.bf16.mxu0 0
        %1294 = vmatpush1.bf16.msra.mxu0 0
        %1295 = vmatprep.subr.bf16.mxu0 0
        %1296 = vmatpush1.bf16.msra.mxu0 0
        %1297 = vmatprep.subr.bf16.mxu0 0
        %1298 = vmatpush1.bf16.msra.mxu0 0
        %1299 = vmatprep.subr.bf16.mxu0 0
        %1300 = vmatpush1.bf16.msra.mxu0 0
        %1301 = vmatprep.subr.bf16.mxu0 0
        %1302 = vmatpush1.bf16.msra.mxu0 0
        %1303 = vmatprep.subr.bf16.mxu0 0
        %1304 = vmatpush1.bf16.msra.mxu0 0
        %1305 = vmatprep.subr.bf16.mxu0 0
        %1306 = vmatpush1.bf16.msra.mxu0 0
        %1307 = vmatprep.subr.bf16.mxu0 0
        %1308 = vmatpush1.bf16.msra.mxu0 0
        %1309 = vmatprep.subr.bf16.mxu0 0
        %1310 = vmatpush1.bf16.msra.mxu0 0
        %1311 = vmatprep.subr.bf16.mxu0 0
        %1312 = vmatpush1.bf16.msra.mxu0 0
        %1313 = vmatprep.mubr.bf16.mxu0 0
        %1314 = vmatmul.mubr.bf16.gmra.mrb[0].mxu0 %v1279
        %v1315 = vpop.f32.mrb[0].mxu0
        %v1316 = vadd.f32 0.0, %v1315
        %v1317 = vpop.f32.mrb[0].mxu0
        %v1318 = vpop.f32.mrb[0].mxu0
        %v1319 = vpop.f32.mrb[0].mxu0
        %1320 = vdwg.mxu0
        %v1321 = vadd.f32 %v1266, %v1316
        %v1322 = vrcp.pop %v1270
        %v1323 = vmul.f32 %v1321, %v1322
        %1325 = vrot.lane.b32.xlu0 %v1323, 16
        %v1326 = vpop.permute.xlu0 %1325
        %vm1328 = vcmask 195712
        %1329 = vst.msk [vmem:[#allocation2] sm:$0xff] %vm1328, %v1326
        %s1330 = scalar_lea.vmem %s839, 24
        %v1331 = vld [vmem:[%s1330] sm:$0xf]
        %v1332 = vld [vmem:[%s1330 + $0x4] sm:$0xf]
        %s1333 = scalar_lea.vmem %s844, 24
        %v1334 = vld [vmem:[%s1333] sm:$0xf]
        %v1335 = vld [vmem:[%s1333 + $0x4] sm:$0xf]
        %1336 = vrot.lane.b32.xlu0 %v926, 104
        %v1337 = vpop.permute.xlu0 %1336
        %v1340 = vunpack.c.l.b16 %v1331
        %v1341 = vunpack.c.l.b16 %v1332
        %v1342 = vpack.c.b16 %v1341, %v1340
        %v1344 = vsel %vm936, %v1337, 0
        %v1347 = vsel %vm936, %v1342, 0
        %1349 = vmatprep.subr.bf16.mxu0 0
        %1350 = vmatpush1.bf16.xpose.msra.mxu0 %v1347
        %1351 = vmatprep.subr.bf16.mxu0 0
        %1352 = vmatpush1.bf16.xpose.msra.mxu0 0
        %1353 = vmatprep.subr.bf16.mxu0 0
        %1354 = vmatpush1.bf16.xpose.msra.mxu0 0
        %1355 = vmatprep.subr.bf16.mxu0 0
        %1356 = vmatpush1.bf16.xpose.msra.mxu0 0
        %1357 = vmatprep.subr.bf16.mxu0 0
        %1358 = vmatpush1.bf16.xpose.msra.mxu0 0
        %1359 = vmatprep.subr.bf16.mxu0 0
        %1360 = vmatpush1.bf16.xpose.msra.mxu0 0
        %1361 = vmatprep.subr.bf16.mxu0 0
        %1362 = vmatpush1.bf16.xpose.msra.mxu0 0
        %1363 = vmatprep.subr.bf16.mxu0 0
        %1364 = vmatpush1.bf16.xpose.msra.mxu0 0
        %1365 = vmatprep.subr.bf16.mxu0 0
        %1366 = vmatpush1.bf16.xpose.msra.mxu0 0
        %1367 = vmatprep.subr.bf16.mxu0 0
        %1368 = vmatpush1.bf16.xpose.msra.mxu0 0
        %1369 = vmatprep.subr.bf16.mxu0 0
        %1370 = vmatpush1.bf16.xpose.msra.mxu0 0
        %1371 = vmatprep.subr.bf16.mxu0 0
        %1372 = vmatpush1.bf16.xpose.msra.mxu0 0
        %1373 = vmatprep.subr.bf16.mxu0 0
        %1374 = vmatpush1.bf16.xpose.msra.mxu0 0
        %1375 = vmatprep.subr.bf16.mxu0 0
        %1376 = vmatpush1.bf16.xpose.msra.mxu0 0
        %1377 = vmatprep.subr.bf16.mxu0 0
        %1378 = vmatpush1.bf16.xpose.msra.mxu0 0
        %1379 = vmatprep.subr.bf16.mxu0 0
        %1380 = vmatpush1.bf16.xpose.msra.mxu0 0
        %1381 = vmatprep.mubr.bf16.mxu0 0
        %1382 = vmatmul.mubr.bf16.gmra.mrb[0].mxu0 %v1344
        %v1383 = vpop.f32.mrb[0].mxu0
        %v1384 = vadd.f32 0.0, %v1383
        %v1385 = vpop.f32.mrb[0].mxu0
        %v1386 = vpop.f32.mrb[0].mxu0
        %v1387 = vpop.f32.mrb[0].mxu0
        %1388 = vdwg.mxu0
        %v1389 = vsel %vm989, %v1384, -1e+09
        %v1390 = vsel %vm991, %v1389, -inf
        %1391 = vmax.xlane.f32.xlu0 %v1390
        %v1392 = vpop.xlane.xlu0 %1391
        %v1393 = vmax.f32 %v1392, -1e+30
        %v1394 = vsub.f32 %v1389, %v1393
        %v1395 = vmul.f32 %v1394, 1.442695
        %v1396 = vpow.pop %v1395
        %v1397 = vsub.f32 -1e+30, %v1393
        %v1398 = vmul.f32 %v1397, 1.442695
        %v1399 = vpow.pop %v1398
        %v1400 = vmul.f32 %v1399, 0.0
        %v1401 = vsel %vm991, %v1396, 0.0
        %1402 = vadd.xlane.f32.xlu0 %v1401
        %v1403 = vpop.xlane.xlu0 %1402
        %v1404 = vadd.f32 %v1400, %v1403
        %v1405 = vpack.c.bf16 %v1396, %v1396
        %v1408 = vunpack.c.l.b16 %v1334
        %v1409 = vunpack.c.l.b16 %v1335
        %v1410 = vpack.c.b16 %v1409, %v1408
        %v1413 = vsel %vm991, %v1405, 0
        %1415 = vmatprep.subr.bf16.mxu0 0
        %1416 = vmatpush1.bf16.msra.mxu0 %v1410
        %1417 = vmatprep.subr.bf16.mxu0 0
        %1418 = vmatpush1.bf16.msra.mxu0 0
        %1419 = vmatprep.subr.bf16.mxu0 0
        %1420 = vmatpush1.bf16.msra.mxu0 0
        %1421 = vmatprep.subr.bf16.mxu0 0
        %1422 = vmatpush1.bf16.msra.mxu0 0
        %1423 = vmatprep.subr.bf16.mxu0 0
        %1424 = vmatpush1.bf16.msra.mxu0 0
        %1425 = vmatprep.subr.bf16.mxu0 0
        %1426 = vmatpush1.bf16.msra.mxu0 0
        %1427 = vmatprep.subr.bf16.mxu0 0
        %1428 = vmatpush1.bf16.msra.mxu0 0
        %1429 = vmatprep.subr.bf16.mxu0 0
        %1430 = vmatpush1.bf16.msra.mxu0 0
        %1431 = vmatprep.subr.bf16.mxu0 0
        %1432 = vmatpush1.bf16.msra.mxu0 0
        %1433 = vmatprep.subr.bf16.mxu0 0
        %1434 = vmatpush1.bf16.msra.mxu0 0
        %1435 = vmatprep.subr.bf16.mxu0 0
        %1436 = vmatpush1.bf16.msra.mxu0 0
        %1437 = vmatprep.subr.bf16.mxu0 0
        %1438 = vmatpush1.bf16.msra.mxu0 0
        %1439 = vmatprep.subr.bf16.mxu0 0
        %1440 = vmatpush1.bf16.msra.mxu0 0
        %1441 = vmatprep.subr.bf16.mxu0 0
        %1442 = vmatpush1.bf16.msra.mxu0 0
        %1443 = vmatprep.subr.bf16.mxu0 0
        %1444 = vmatpush1.bf16.msra.mxu0 0
        %1445 = vmatprep.subr.bf16.mxu0 0
        %1446 = vmatpush1.bf16.msra.mxu0 0
        %1447 = vmatprep.mubr.bf16.mxu0 0
        %1448 = vmatmul.mubr.bf16.gmra.mrb[0].mxu0 %v1413
        %v1449 = vpop.f32.mrb[0].mxu0
        %v1450 = vadd.f32 0.0, %v1449
        %v1451 = vpop.f32.mrb[0].mxu0
        %v1452 = vpop.f32.mrb[0].mxu0
        %v1453 = vpop.f32.mrb[0].mxu0
        %1454 = vdwg.mxu0
        %v1455 = vadd.f32 %v1400, %v1450
        %v1456 = vrcp.pop %v1404
        %v1457 = vmul.f32 %v1455, %v1456
        %1459 = vrot.lane.b32.xlu0 %v1457, 24
        %v1460 = vpop.permute.xlu0 %1459
        %vm1462 = vcmask 261312
        %1463 = vst.msk [vmem:[#allocation2] sm:$0xff] %vm1462, %v1460
        %v1464 = vld [vmem:[#allocation2] sm:$0xff]
        %v1465 = vpack.c.bf16 %v1464, %v1464
        %v1466 = vld [vmem:[%s8] sm:$0xf]
        %v1467 = vld [vmem:[%s8 + $0x4] sm:$0xf]
        %v1468 = vld [vmem:[%s8 + $0x8] sm:$0xf]
        %v1469 = vld [vmem:[%s8 + $0xc] sm:$0xf]
        %v1470 = vld [vmem:[%s9] sm:$0x1]
        %v1472 = vlaneseq
        %v1473 = vshrl.u32 %v1472, 7
        %v1474 = vsub.s32 0, %v1473
        %v1475 = vrot.slane %v1470, %v1474
        %v1481 = vunpack.c.l.b16 %v1466
        %v1482 = vunpack.c.l.b16 %v1467
        %v1483 = vunpack.c.l.b16 %v1468
        %v1484 = vunpack.c.l.b16 %v1469
        %v1485 = vpack.c.b16 %v1482, %v1481
        %v1486 = vpack.c.b16 %v1484, %v1483
        %v1490 = vsel %vm882, %v1465, 0
        %1492 = vmatprep.subr.bf16.mxu0 0
        %1493 = vmatpush1.bf16.msra.mxu0 %v1485
        %1494 = vmatprep.subr.bf16.mxu0 0
        %1495 = vmatpush1.bf16.msra.mxu0 %v1486
        %1496 = vmatprep.subr.bf16.mxu0 0
        %1497 = vmatpush1.bf16.msra.mxu0 0
        %1498 = vmatprep.subr.bf16.mxu0 0
        %1499 = vmatpush1.bf16.msra.mxu0 0
        %1500 = vmatprep.subr.bf16.mxu0 0
        %1501 = vmatpush1.bf16.msra.mxu0 0
        %1502 = vmatprep.subr.bf16.mxu0 0
        %1503 = vmatpush1.bf16.msra.mxu0 0
        %1504 = vmatprep.subr.bf16.mxu0 0
        %1505 = vmatpush1.bf16.msra.mxu0 0
        %1506 = vmatprep.subr.bf16.mxu0 0
        %1507 = vmatpush1.bf16.msra.mxu0 0
        %1508 = vmatprep.subr.bf16.mxu0 0
        %1509 = vmatpush1.bf16.msra.mxu0 0
        %1510 = vmatprep.subr.bf16.mxu0 0
        %1511 = vmatpush1.bf16.msra.mxu0 0
        %1512 = vmatprep.subr.bf16.mxu0 0
        %1513 = vmatpush1.bf16.msra.mxu0 0
        %1514 = vmatprep.subr.bf16.mxu0 0
        %1515 = vmatpush1.bf16.msra.mxu0 0
        %1516 = vmatprep.subr.bf16.mxu0 0
        %1517 = vmatpush1.bf16.msra.mxu0 0
        %1518 = vmatprep.subr.bf16.mxu0 0
        %1519 = vmatpush1.bf16.msra.mxu0 0
        %1520 = vmatprep.subr.bf16.mxu0 0
        %1521 = vmatpush1.bf16.msra.mxu0 0
        %1522 = vmatprep.subr.bf16.mxu0 0
        %1523 = vmatpush1.bf16.msra.mxu0 0
        %1524 = vmatprep.mubr.bf16.mxu0 0
        %1525 = vmatmul.mubr.bf16.gmra.mrb[0].mxu0 %v1490
        %v1526 = vpop.f32.mrb[0].mxu0
        %v1527 = vadd.f32 %v1475, %v1526
        %v1528 = vpop.f32.mrb[0].mxu0
        %v1529 = vpop.f32.mrb[0].mxu0
        %v1530 = vpop.f32.mrb[0].mxu0
        %1531 = vdwg.mxu0
        %v1532 = vadd.f32 %v1527, %v857
        %v1533 = vld [vmem:[%s10] sm:$0x1]
        %v1534 = vld [vmem:[%s11] sm:$0x1]
        %v1535 = vsel %vm882, %v1532, 0.0
        %1536 = vadd.xlane.f32.xlu0 %v1535
        %v1537 = vpop.xlane.xlu0 %1536
        %v1538 = vrcp.pop 32.0
        %v1539 = vmul.f32 %v1537, %v1538
        %v1540 = vsub.f32 %v1532, %v1539
        %v1541 = vmul.f32 %v1540, %v1540
        %v1542 = vsel %vm882, %v1541, 0.0
        %1543 = vadd.xlane.f32.xlu0 %v1542
        %v1544 = vpop.xlane.xlu0 %1543
        %v1545 = vmul.f32 %v1544, %v1538
        %v1546 = vadd.f32 %v1545, 1e-05
        %v1547 = vrsqrt.pop %v1546
        %v1548 = vmul.f32 %v1540, %v1547
        %v1550 = vlaneseq
        %v1551 = vshrl.u32 %v1550, 7
        %v1552 = vsub.s32 0, %v1551
        %v1553 = vrot.slane %v1533, %v1552
        %v1555 = vmul.f32 %v1548, %v1553
        %v1557 = vlaneseq
        %v1558 = vshrl.u32 %v1557, 7
        %v1559 = vsub.s32 0, %v1558
        %v1560 = vrot.slane %v1534, %v1559
        %v1562 = vadd.f32 %v1555, %v1560
        %v1563 = vpack.c.bf16 %v1562, %v1562
        %v1564 = vld [vmem:[%s12] sm:$0xf]
        %v1565 = vld [vmem:[%s12 + $0x4] sm:$0xf]
        %v1566 = vld [vmem:[%s12 + $0x8] sm:$0xf]
        %v1567 = vld [vmem:[%s12 + $0xc] sm:$0xf]
        %v1568 = vld [vmem:[%s13] sm:$0x1]
        %v1570 = vlaneseq
        %v1571 = vshrl.u32 %v1570, 7
        %v1572 = vsub.s32 0, %v1571
        %v1573 = vrot.slane %v1568, %v1572
        %v1579 = vunpack.c.l.b16 %v1564
        %v1580 = vunpack.c.l.b16 %v1565
        %v1581 = vunpack.c.l.b16 %v1566
        %v1582 = vunpack.c.l.b16 %v1567
        %v1583 = vpack.c.b16 %v1580, %v1579
        %v1584 = vpack.c.b16 %v1582, %v1581
        %v1588 = vsel %vm882, %v1563, 0
        %1590 = vmatprep.subr.bf16.mxu0 0
        %1591 = vmatpush1.bf16.msra.mxu0 %v1583
        %1592 = vmatprep.subr.bf16.mxu0 0
        %1593 = vmatpush1.bf16.msra.mxu0 %v1584
        %1594 = vmatprep.subr.bf16.mxu0 0
        %1595 = vmatpush1.bf16.msra.mxu0 0
        %1596 = vmatprep.subr.bf16.mxu0 0
        %1597 = vmatpush1.bf16.msra.mxu0 0
        %1598 = vmatprep.subr.bf16.mxu0 0
        %1599 = vmatpush1.bf16.msra.mxu0 0
        %1600 = vmatprep.subr.bf16.mxu0 0
        %1601 = vmatpush1.bf16.msra.mxu0 0
        %1602 = vmatprep.subr.bf16.mxu0 0
        %1603 = vmatpush1.bf16.msra.mxu0 0
        %1604 = vmatprep.subr.bf16.mxu0 0
        %1605 = vmatpush1.bf16.msra.mxu0 0
        %1606 = vmatprep.subr.bf16.mxu0 0
        %1607 = vmatpush1.bf16.msra.mxu0 0
        %1608 = vmatprep.subr.bf16.mxu0 0
        %1609 = vmatpush1.bf16.msra.mxu0 0
        %1610 = vmatprep.subr.bf16.mxu0 0
        %1611 = vmatpush1.bf16.msra.mxu0 0
        %1612 = vmatprep.subr.bf16.mxu0 0
        %1613 = vmatpush1.bf16.msra.mxu0 0
        %1614 = vmatprep.subr.bf16.mxu0 0
        %1615 = vmatpush1.bf16.msra.mxu0 0
        %1616 = vmatprep.subr.bf16.mxu0 0
        %1617 = vmatpush1.bf16.msra.mxu0 0
        %1618 = vmatprep.subr.bf16.mxu0 0
        %1619 = vmatpush1.bf16.msra.mxu0 0
        %1620 = vmatprep.subr.bf16.mxu0 0
        %1621 = vmatpush1.bf16.msra.mxu0 0
        %1622 = vmatprep.mubr.bf16.mxu0 0
        %1623 = vmatmul.mubr.bf16.gmra.mrb[0].mxu0 %v1588
        %v1624 = vpop.f32.mrb[0].mxu0
        %v1625 = vadd.f32 %v1573, %v1624
        %v1626 = vpop.f32.mrb[0].mxu0
        %v1627 = vpop.f32.mrb[0].mxu0
        %v1628 = vpop.f32.mrb[0].mxu0
        %1629 = vdwg.mxu0
        %v1630 = vpack.c.bf16 %v1625, %v1625
        %v1631 = vld [vmem:[%s849] sm:$0xf]
        %v1632 = vld [vmem:[%s849 + $0x4] sm:$0xf]
        %v1633 = vld [vmem:[%s854] sm:$0xf]
        %v1634 = vld [vmem:[%s854 + $0x4] sm:$0xf]
        %v1637 = vunpack.c.l.b16 %v1631
        %v1638 = vunpack.c.l.b16 %v1632
        %v1639 = vpack.c.b16 %v1638, %v1637
        %v1641 = vsel %vm936, %v1630, 0
        %v1644 = vsel %vm936, %v1639, 0
        %1646 = vmatprep.subr.bf16.mxu0 0
        %1647 = vmatpush1.bf16.xpose.msra.mxu0 %v1644
        %1648 = vmatprep.subr.bf16.mxu0 0
        %1649 = vmatpush1.bf16.xpose.msra.mxu0 0
        %1650 = vmatprep.subr.bf16.mxu0 0
        %1651 = vmatpush1.bf16.xpose.msra.mxu0 0
        %1652 = vmatprep.subr.bf16.mxu0 0
        %1653 = vmatpush1.bf16.xpose.msra.mxu0 0
        %1654 = vmatprep.subr.bf16.mxu0 0
        %1655 = vmatpush1.bf16.xpose.msra.mxu0 0
        %1656 = vmatprep.subr.bf16.mxu0 0
        %1657 = vmatpush1.bf16.xpose.msra.mxu0 0
        %1658 = vmatprep.subr.bf16.mxu0 0
        %1659 = vmatpush1.bf16.xpose.msra.mxu0 0
        %1660 = vmatprep.subr.bf16.mxu0 0
        %1661 = vmatpush1.bf16.xpose.msra.mxu0 0
        %1662 = vmatprep.subr.bf16.mxu0 0
        %1663 = vmatpush1.bf16.xpose.msra.mxu0 0
        %1664 = vmatprep.subr.bf16.mxu0 0
        %1665 = vmatpush1.bf16.xpose.msra.mxu0 0
        %1666 = vmatprep.subr.bf16.mxu0 0
        %1667 = vmatpush1.bf16.xpose.msra.mxu0 0
        %1668 = vmatprep.subr.bf16.mxu0 0
        %1669 = vmatpush1.bf16.xpose.msra.mxu0 0
        %1670 = vmatprep.subr.bf16.mxu0 0
        %1671 = vmatpush1.bf16.xpose.msra.mxu0 0
        %1672 = vmatprep.subr.bf16.mxu0 0
        %1673 = vmatpush1.bf16.xpose.msra.mxu0 0
        %1674 = vmatprep.subr.bf16.mxu0 0
        %1675 = vmatpush1.bf16.xpose.msra.mxu0 0
        %1676 = vmatprep.subr.bf16.mxu0 0
        %1677 = vmatpush1.bf16.xpose.msra.mxu0 0
        %1678 = vmatprep.mubr.bf16.mxu0 0
        %1679 = vmatmul.mubr.bf16.gmra.mrb[0].mxu0 %v1641
        %v1680 = vpop.f32.mrb[0].mxu0
        %v1681 = vadd.f32 0.0, %v1680
        %v1682 = vpop.f32.mrb[0].mxu0
        %v1683 = vpop.f32.mrb[0].mxu0
        %v1684 = vpop.f32.mrb[0].mxu0
        %1685 = vdwg.mxu0
        %v1686 = vld [vmem:[%s834] sm:$0x1]
        %vm1687 = vcmp.gt.f32.partialorder %v1686, 0.5
        %v1688 = vsel %vm1687, 1, 0
        %v1689 = vlaneseq
        %v1690 = vshrl.u32 %v1689, 7
        %v1691 = vsub.s32 0, %v1690
        %v1692 = vrot.slane %v1688, %v1691
        %vm1693 = vcmp.eq.s32.totalorder %v1692, 1
        %v1694 = vsel %vm1693, %v1681, -1e+09
        %v1695 = vsel %vm991, %v1694, -inf
        %1696 = vmax.xlane.f32.xlu0 %v1695
        %v1697 = vpop.xlane.xlu0 %1696
        %v1698 = vmax.f32 %v1697, -1e+30
        %v1699 = vsub.f32 %v1694, %v1698
        %v1700 = vmul.f32 %v1699, 1.442695
        %v1701 = vpow.pop %v1700
        %v1702 = vsub.f32 -1e+30, %v1698
        %v1703 = vmul.f32 %v1702, 1.442695
        %v1704 = vpow.pop %v1703
        %v1705 = vmul.f32 %v1704, 0.0
        %v1706 = vsel %vm991, %v1701, 0.0
        %1707 = vadd.xlane.f32.xlu0 %v1706
        %v1708 = vpop.xlane.xlu0 %1707
        %v1709 = vadd.f32 %v1705, %v1708
        %v1710 = vpack.c.bf16 %v1701, %v1701
        %v1713 = vunpack.c.l.b16 %v1633
        %v1714 = vunpack.c.l.b16 %v1634
        %v1715 = vpack.c.b16 %v1714, %v1713
        %v1718 = vsel %vm991, %v1710, 0
        %1720 = vmatprep.subr.bf16.mxu0 0
        %1721 = vmatpush1.bf16.msra.mxu0 %v1715
        %1722 = vmatprep.subr.bf16.mxu0 0
        %1723 = vmatpush1.bf16.msra.mxu0 0
        %1724 = vmatprep.subr.bf16.mxu0 0
        %1725 = vmatpush1.bf16.msra.mxu0 0
        %1726 = vmatprep.subr.bf16.mxu0 0
        %1727 = vmatpush1.bf16.msra.mxu0 0
        %1728 = vmatprep.subr.bf16.mxu0 0
        %1729 = vmatpush1.bf16.msra.mxu0 0
        %1730 = vmatprep.subr.bf16.mxu0 0
        %1731 = vmatpush1.bf16.msra.mxu0 0
        %1732 = vmatprep.subr.bf16.mxu0 0
        %1733 = vmatpush1.bf16.msra.mxu0 0
        %1734 = vmatprep.subr.bf16.mxu0 0
        %1735 = vmatpush1.bf16.msra.mxu0 0
        %1736 = vmatprep.subr.bf16.mxu0 0
        %1737 = vmatpush1.bf16.msra.mxu0 0
        %1738 = vmatprep.subr.bf16.mxu0 0
        %1739 = vmatpush1.bf16.msra.mxu0 0
        %1740 = vmatprep.subr.bf16.mxu0 0
        %1741 = vmatpush1.bf16.msra.mxu0 0
        %1742 = vmatprep.subr.bf16.mxu0 0
        %1743 = vmatpush1.bf16.msra.mxu0 0
        %1744 = vmatprep.subr.bf16.mxu0 0
        %1745 = vmatpush1.bf16.msra.mxu0 0
        %1746 = vmatprep.subr.bf16.mxu0 0
        %1747 = vmatpush1.bf16.msra.mxu0 0
        %1748 = vmatprep.subr.bf16.mxu0 0
        %1749 = vmatpush1.bf16.msra.mxu0 0
        %1750 = vmatprep.subr.bf16.mxu0 0
        %1751 = vmatpush1.bf16.msra.mxu0 0
        %1752 = vmatprep.mubr.bf16.mxu0 0
        %1753 = vmatmul.mubr.bf16.gmra.mrb[0].mxu0 %v1718
        %v1754 = vpop.f32.mrb[0].mxu0
        %v1755 = vadd.f32 0.0, %v1754
        %v1756 = vpop.f32.mrb[0].mxu0
        %v1757 = vpop.f32.mrb[0].mxu0
        %v1758 = vpop.f32.mrb[0].mxu0
        %1759 = vdwg.mxu0
        %v1760 = vadd.f32 %v1705, %v1755
        %v1761 = vrcp.pop %v1709
        %v1762 = vmul.f32 %v1760, %v1761
        %1763 = vst.msk [vmem:[#allocation2] sm:$0xff] %vm936, %v1762
        %s1764 = scalar_lea.vmem %s849, 8
        %v1765 = vld [vmem:[%s1764] sm:$0xf]
        %v1766 = vld [vmem:[%s1764 + $0x4] sm:$0xf]
        %s1767 = scalar_lea.vmem %s854, 8
        %v1768 = vld [vmem:[%s1767] sm:$0xf]
        %v1769 = vld [vmem:[%s1767 + $0x4] sm:$0xf]
        %1771 = vrot.lane.b32.xlu0 %v1630, 120
        %v1772 = vpop.permute.xlu0 %1771
        %v1775 = vunpack.c.l.b16 %v1765
        %v1776 = vunpack.c.l.b16 %v1766
        %v1777 = vpack.c.b16 %v1776, %v1775
        %v1779 = vsel %vm936, %v1772, 0
        %v1782 = vsel %vm936, %v1777, 0
        %1784 = vmatprep.subr.bf16.mxu0 0
        %1785 = vmatpush1.bf16.xpose.msra.mxu0 %v1782
        %1786 = vmatprep.subr.bf16.mxu0 0
        %1787 = vmatpush1.bf16.xpose.msra.mxu0 0
        %1788 = vmatprep.subr.bf16.mxu0 0
        %1789 = vmatpush1.bf16.xpose.msra.mxu0 0
        %1790 = vmatprep.subr.bf16.mxu0 0
        %1791 = vmatpush1.bf16.xpose.msra.mxu0 0
        %1792 = vmatprep.subr.bf16.mxu0 0
        %1793 = vmatpush1.bf16.xpose.msra.mxu0 0
        %1794 = vmatprep.subr.bf16.mxu0 0
        %1795 = vmatpush1.bf16.xpose.msra.mxu0 0
        %1796 = vmatprep.subr.bf16.mxu0 0
        %1797 = vmatpush1.bf16.xpose.msra.mxu0 0
        %1798 = vmatprep.subr.bf16.mxu0 0
        %1799 = vmatpush1.bf16.xpose.msra.mxu0 0
        %1800 = vmatprep.subr.bf16.mxu0 0
        %1801 = vmatpush1.bf16.xpose.msra.mxu0 0
        %1802 = vmatprep.subr.bf16.mxu0 0
        %1803 = vmatpush1.bf16.xpose.msra.mxu0 0
        %1804 = vmatprep.subr.bf16.mxu0 0
        %1805 = vmatpush1.bf16.xpose.msra.mxu0 0
        %1806 = vmatprep.subr.bf16.mxu0 0
        %1807 = vmatpush1.bf16.xpose.msra.mxu0 0
        %1808 = vmatprep.subr.bf16.mxu0 0
        %1809 = vmatpush1.bf16.xpose.msra.mxu0 0
        %1810 = vmatprep.subr.bf16.mxu0 0
        %1811 = vmatpush1.bf16.xpose.msra.mxu0 0
        %1812 = vmatprep.subr.bf16.mxu0 0
        %1813 = vmatpush1.bf16.xpose.msra.mxu0 0
        %1814 = vmatprep.subr.bf16.mxu0 0
        %1815 = vmatpush1.bf16.xpose.msra.mxu0 0
        %1816 = vmatprep.mubr.bf16.mxu0 0
        %1817 = vmatmul.mubr.bf16.gmra.mrb[0].mxu0 %v1779
        %v1818 = vpop.f32.mrb[0].mxu0
        %v1819 = vadd.f32 0.0, %v1818
        %v1820 = vpop.f32.mrb[0].mxu0
        %v1821 = vpop.f32.mrb[0].mxu0
        %v1822 = vpop.f32.mrb[0].mxu0
        %1823 = vdwg.mxu0
        %v1824 = vld [vmem:[%s834] sm:$0x1]
        %vm1825 = vcmp.gt.f32.partialorder %v1824, 0.5
        %v1826 = vsel %vm1825, 1, 0
        %v1827 = vlaneseq
        %v1828 = vshrl.u32 %v1827, 7
        %v1829 = vsub.s32 0, %v1828
        %v1830 = vrot.slane %v1826, %v1829
        %vm1831 = vcmp.eq.s32.totalorder %v1830, 1
        %v1832 = vsel %vm1831, %v1819, -1e+09
        %v1833 = vsel %vm991, %v1832, -inf
        %1834 = vmax.xlane.f32.xlu0 %v1833
        %v1835 = vpop.xlane.xlu0 %1834
        %v1836 = vmax.f32 %v1835, -1e+30
        %v1837 = vsub.f32 %v1832, %v1836
        %v1838 = vmul.f32 %v1837, 1.442695
        %v1839 = vpow.pop %v1838
        %v1840 = vsub.f32 -1e+30, %v1836
        %v1841 = vmul.f32 %v1840, 1.442695
        %v1842 = vpow.pop %v1841
        %v1843 = vmul.f32 %v1842, 0.0
        %v1844 = vsel %vm991, %v1839, 0.0
        %1845 = vadd.xlane.f32.xlu0 %v1844
        %v1846 = vpop.xlane.xlu0 %1845
        %v1847 = vadd.f32 %v1843, %v1846
        %v1848 = vpack.c.bf16 %v1839, %v1839
        %v1851 = vunpack.c.l.b16 %v1768
        %v1852 = vunpack.c.l.b16 %v1769
        %v1853 = vpack.c.b16 %v1852, %v1851
        %v1856 = vsel %vm991, %v1848, 0
        %1858 = vmatprep.subr.bf16.mxu0 0
        %1859 = vmatpush1.bf16.msra.mxu0 %v1853
        %1860 = vmatprep.subr.bf16.mxu0 0
        %1861 = vmatpush1.bf16.msra.mxu0 0
        %1862 = vmatprep.subr.bf16.mxu0 0
        %1863 = vmatpush1.bf16.msra.mxu0 0
        %1864 = vmatprep.subr.bf16.mxu0 0
        %1865 = vmatpush1.bf16.msra.mxu0 0
        %1866 = vmatprep.subr.bf16.mxu0 0
        %1867 = vmatpush1.bf16.msra.mxu0 0
        %1868 = vmatprep.subr.bf16.mxu0 0
        %1869 = vmatpush1.bf16.msra.mxu0 0
        %1870 = vmatprep.subr.bf16.mxu0 0
        %1871 = vmatpush1.bf16.msra.mxu0 0
        %1872 = vmatprep.subr.bf16.mxu0 0
        %1873 = vmatpush1.bf16.msra.mxu0 0
        %1874 = vmatprep.subr.bf16.mxu0 0
        %1875 = vmatpush1.bf16.msra.mxu0 0
        %1876 = vmatprep.subr.bf16.mxu0 0
        %1877 = vmatpush1.bf16.msra.mxu0 0
        %1878 = vmatprep.subr.bf16.mxu0 0
        %1879 = vmatpush1.bf16.msra.mxu0 0
        %1880 = vmatprep.subr.bf16.mxu0 0
        %1881 = vmatpush1.bf16.msra.mxu0 0
        %1882 = vmatprep.subr.bf16.mxu0 0
        %1883 = vmatpush1.bf16.msra.mxu0 0
        %1884 = vmatprep.subr.bf16.mxu0 0
        %1885 = vmatpush1.bf16.msra.mxu0 0
        %1886 = vmatprep.subr.bf16.mxu0 0
        %1887 = vmatpush1.bf16.msra.mxu0 0
        %1888 = vmatprep.subr.bf16.mxu0 0
        %1889 = vmatpush1.bf16.msra.mxu0 0
        %1890 = vmatprep.mubr.bf16.mxu0 0
        %1891 = vmatmul.mubr.bf16.gmra.mrb[0].mxu0 %v1856
        %v1892 = vpop.f32.mrb[0].mxu0
        %v1893 = vadd.f32 0.0, %v1892
        %v1894 = vpop.f32.mrb[0].mxu0
        %v1895 = vpop.f32.mrb[0].mxu0
        %v1896 = vpop.f32.mrb[0].mxu0
        %1897 = vdwg.mxu0
        %v1898 = vadd.f32 %v1843, %v1893
        %v1899 = vrcp.pop %v1847
        %v1900 = vmul.f32 %v1898, %v1899
        %1902 = vrot.lane.b32.xlu0 %v1900, 8
        %v1903 = vpop.permute.xlu0 %1902
        %1905 = vst.msk [vmem:[#allocation2] sm:$0xff] %vm1194, %v1903
        %s1906 = scalar_lea.vmem %s849, 16
        %v1907 = vld [vmem:[%s1906] sm:$0xf]
        %v1908 = vld [vmem:[%s1906 + $0x4] sm:$0xf]
        %s1909 = scalar_lea.vmem %s854, 16
        %v1910 = vld [vmem:[%s1909] sm:$0xf]
        %v1911 = vld [vmem:[%s1909 + $0x4] sm:$0xf]
        %1912 = vrot.lane.b32.xlu0 %v1630, 112
        %v1913 = vpop.permute.xlu0 %1912
        %v1916 = vunpack.c.l.b16 %v1907
        %v1917 = vunpack.c.l.b16 %v1908
        %v1918 = vpack.c.b16 %v1917, %v1916
        %v1920 = vsel %vm936, %v1913, 0
        %v1923 = vsel %vm936, %v1918, 0
        %1925 = vmatprep.subr.bf16.mxu0 0
        %1926 = vmatpush1.bf16.xpose.msra.mxu0 %v1923
        %1927 = vmatprep.subr.bf16.mxu0 0
        %1928 = vmatpush1.bf16.xpose.msra.mxu0 0
        %1929 = vmatprep.subr.bf16.mxu0 0
        %1930 = vmatpush1.bf16.xpose.msra.mxu0 0
        %1931 = vmatprep.subr.bf16.mxu0 0
        %1932 = vmatpush1.bf16.xpose.msra.mxu0 0
        %1933 = vmatprep.subr.bf16.mxu0 0
        %1934 = vmatpush1.bf16.xpose.msra.mxu0 0
        %1935 = vmatprep.subr.bf16.mxu0 0
        %1936 = vmatpush1.bf16.xpose.msra.mxu0 0
        %1937 = vmatprep.subr.bf16.mxu0 0
        %1938 = vmatpush1.bf16.xpose.msra.mxu0 0
        %1939 = vmatprep.subr.bf16.mxu0 0
        %1940 = vmatpush1.bf16.xpose.msra.mxu0 0
        %1941 = vmatprep.subr.bf16.mxu0 0
        %1942 = vmatpush1.bf16.xpose.msra.mxu0 0
        %1943 = vmatprep.subr.bf16.mxu0 0
        %1944 = vmatpush1.bf16.xpose.msra.mxu0 0
        %1945 = vmatprep.subr.bf16.mxu0 0
        %1946 = vmatpush1.bf16.xpose.msra.mxu0 0
        %1947 = vmatprep.subr.bf16.mxu0 0
        %1948 = vmatpush1.bf16.xpose.msra.mxu0 0
        %1949 = vmatprep.subr.bf16.mxu0 0
        %1950 = vmatpush1.bf16.xpose.msra.mxu0 0
        %1951 = vmatprep.subr.bf16.mxu0 0
        %1952 = vmatpush1.bf16.xpose.msra.mxu0 0
        %1953 = vmatprep.subr.bf16.mxu0 0
        %1954 = vmatpush1.bf16.xpose.msra.mxu0 0
        %1955 = vmatprep.subr.bf16.mxu0 0
        %1956 = vmatpush1.bf16.xpose.msra.mxu0 0
        %1957 = vmatprep.mubr.bf16.mxu0 0
        %1958 = vmatmul.mubr.bf16.gmra.mrb[0].mxu0 %v1920
        %v1959 = vpop.f32.mrb[0].mxu0
        %v1960 = vadd.f32 0.0, %v1959
        %v1961 = vpop.f32.mrb[0].mxu0
        %v1962 = vpop.f32.mrb[0].mxu0
        %v1963 = vpop.f32.mrb[0].mxu0
        %1964 = vdwg.mxu0
        %v1965 = vld [vmem:[%s834] sm:$0x1]
        %vm1966 = vcmp.gt.f32.partialorder %v1965, 0.5
        %v1967 = vsel %vm1966, 1, 0
        %v1968 = vlaneseq
        %v1969 = vshrl.u32 %v1968, 7
        %v1970 = vsub.s32 0, %v1969
        %v1971 = vrot.slane %v1967, %v1970
        %vm1972 = vcmp.eq.s32.totalorder %v1971, 1
        %v1973 = vsel %vm1972, %v1960, -1e+09
        %v1974 = vsel %vm991, %v1973, -inf
        %1975 = vmax.xlane.f32.xlu0 %v1974
        %v1976 = vpop.xlane.xlu0 %1975
        %v1977 = vmax.f32 %v1976, -1e+30
        %v1978 = vsub.f32 %v1973, %v1977
        %v1979 = vmul.f32 %v1978, 1.442695
        %v1980 = vpow.pop %v1979
        %v1981 = vsub.f32 -1e+30, %v1977
        %v1982 = vmul.f32 %v1981, 1.442695
        %v1983 = vpow.pop %v1982
        %v1984 = vmul.f32 %v1983, 0.0
        %v1985 = vsel %vm991, %v1980, 0.0
        %1986 = vadd.xlane.f32.xlu0 %v1985
        %v1987 = vpop.xlane.xlu0 %1986
        %v1988 = vadd.f32 %v1984, %v1987
        %v1989 = vpack.c.bf16 %v1980, %v1980
        %v1992 = vunpack.c.l.b16 %v1910
        %v1993 = vunpack.c.l.b16 %v1911
        %v1994 = vpack.c.b16 %v1993, %v1992
        %v1997 = vsel %vm991, %v1989, 0
        %1999 = vmatprep.subr.bf16.mxu0 0
        %2000 = vmatpush1.bf16.msra.mxu0 %v1994
        %2001 = vmatprep.subr.bf16.mxu0 0
        %2002 = vmatpush1.bf16.msra.mxu0 0
        %2003 = vmatprep.subr.bf16.mxu0 0
        %2004 = vmatpush1.bf16.msra.mxu0 0
        %2005 = vmatprep.subr.bf16.mxu0 0
        %2006 = vmatpush1.bf16.msra.mxu0 0
        %2007 = vmatprep.subr.bf16.mxu0 0
        %2008 = vmatpush1.bf16.msra.mxu0 0
        %2009 = vmatprep.subr.bf16.mxu0 0
        %2010 = vmatpush1.bf16.msra.mxu0 0
        %2011 = vmatprep.subr.bf16.mxu0 0
        %2012 = vmatpush1.bf16.msra.mxu0 0
        %2013 = vmatprep.subr.bf16.mxu0 0
        %2014 = vmatpush1.bf16.msra.mxu0 0
        %2015 = vmatprep.subr.bf16.mxu0 0
        %2016 = vmatpush1.bf16.msra.mxu0 0
        %2017 = vmatprep.subr.bf16.mxu0 0
        %2018 = vmatpush1.bf16.msra.mxu0 0
        %2019 = vmatprep.subr.bf16.mxu0 0
        %2020 = vmatpush1.bf16.msra.mxu0 0
        %2021 = vmatprep.subr.bf16.mxu0 0
        %2022 = vmatpush1.bf16.msra.mxu0 0
        %2023 = vmatprep.subr.bf16.mxu0 0
        %2024 = vmatpush1.bf16.msra.mxu0 0
        %2025 = vmatprep.subr.bf16.mxu0 0
        %2026 = vmatpush1.bf16.msra.mxu0 0
        %2027 = vmatprep.subr.bf16.mxu0 0
        %2028 = vmatpush1.bf16.msra.mxu0 0
        %2029 = vmatprep.subr.bf16.mxu0 0
        %2030 = vmatpush1.bf16.msra.mxu0 0
        %2031 = vmatprep.mubr.bf16.mxu0 0
        %2032 = vmatmul.mubr.bf16.gmra.mrb[0].mxu0 %v1997
        %v2033 = vpop.f32.mrb[0].mxu0
        %v2034 = vadd.f32 0.0, %v2033
        %v2035 = vpop.f32.mrb[0].mxu0
        %v2036 = vpop.f32.mrb[0].mxu0
        %v2037 = vpop.f32.mrb[0].mxu0
        %2038 = vdwg.mxu0
        %v2039 = vadd.f32 %v1984, %v2034
        %v2040 = vrcp.pop %v1988
        %v2041 = vmul.f32 %v2039, %v2040
        %2043 = vrot.lane.b32.xlu0 %v2041, 16
        %v2044 = vpop.permute.xlu0 %2043
        %2046 = vst.msk [vmem:[#allocation2] sm:$0xff] %vm1328, %v2044
        %s2047 = scalar_lea.vmem %s849, 24
        %v2048 = vld [vmem:[%s2047] sm:$0xf]
        %v2049 = vld [vmem:[%s2047 + $0x4] sm:$0xf]
        %s2050 = scalar_lea.vmem %s854, 24
        %v2051 = vld [vmem:[%s2050] sm:$0xf]
        %v2052 = vld [vmem:[%s2050 + $0x4] sm:$0xf]
        %2053 = vrot.lane.b32.xlu0 %v1630, 104
        %v2054 = vpop.permute.xlu0 %2053
        %v2057 = vunpack.c.l.b16 %v2048
        %v2058 = vunpack.c.l.b16 %v2049
        %v2059 = vpack.c.b16 %v2058, %v2057
        %v2061 = vsel %vm936, %v2054, 0
        %v2064 = vsel %vm936, %v2059, 0
        %2066 = vmatprep.subr.bf16.mxu0 0
        %2067 = vmatpush1.bf16.xpose.msra.mxu0 %v2064
        %2068 = vmatprep.subr.bf16.mxu0 0
        %2069 = vmatpush1.bf16.xpose.msra.mxu0 0
        %2070 = vmatprep.subr.bf16.mxu0 0
        %2071 = vmatpush1.bf16.xpose.msra.mxu0 0
        %2072 = vmatprep.subr.bf16.mxu0 0
        %2073 = vmatpush1.bf16.xpose.msra.mxu0 0
        %2074 = vmatprep.subr.bf16.mxu0 0
        %2075 = vmatpush1.bf16.xpose.msra.mxu0 0
        %2076 = vmatprep.subr.bf16.mxu0 0
        %2077 = vmatpush1.bf16.xpose.msra.mxu0 0
        %2078 = vmatprep.subr.bf16.mxu0 0
        %2079 = vmatpush1.bf16.xpose.msra.mxu0 0
        %2080 = vmatprep.subr.bf16.mxu0 0
        %2081 = vmatpush1.bf16.xpose.msra.mxu0 0
        %2082 = vmatprep.subr.bf16.mxu0 0
        %2083 = vmatpush1.bf16.xpose.msra.mxu0 0
        %2084 = vmatprep.subr.bf16.mxu0 0
        %2085 = vmatpush1.bf16.xpose.msra.mxu0 0
        %2086 = vmatprep.subr.bf16.mxu0 0
        %2087 = vmatpush1.bf16.xpose.msra.mxu0 0
        %2088 = vmatprep.subr.bf16.mxu0 0
        %2089 = vmatpush1.bf16.xpose.msra.mxu0 0
        %2090 = vmatprep.subr.bf16.mxu0 0
        %2091 = vmatpush1.bf16.xpose.msra.mxu0 0
        %2092 = vmatprep.subr.bf16.mxu0 0
        %2093 = vmatpush1.bf16.xpose.msra.mxu0 0
        %2094 = vmatprep.subr.bf16.mxu0 0
        %2095 = vmatpush1.bf16.xpose.msra.mxu0 0
        %2096 = vmatprep.subr.bf16.mxu0 0
        %2097 = vmatpush1.bf16.xpose.msra.mxu0 0
        %2098 = vmatprep.mubr.bf16.mxu0 0
        %2099 = vmatmul.mubr.bf16.gmra.mrb[0].mxu0 %v2061
        %v2100 = vpop.f32.mrb[0].mxu0
        %v2101 = vadd.f32 0.0, %v2100
        %v2102 = vpop.f32.mrb[0].mxu0
        %v2103 = vpop.f32.mrb[0].mxu0
        %v2104 = vpop.f32.mrb[0].mxu0
        %2105 = vdwg.mxu0
        %v2106 = vld [vmem:[%s834] sm:$0x1]
        %vm2107 = vcmp.gt.f32.partialorder %v2106, 0.5
        %v2108 = vsel %vm2107, 1, 0
        %v2109 = vlaneseq
        %v2110 = vshrl.u32 %v2109, 7
        %v2111 = vsub.s32 0, %v2110
        %v2112 = vrot.slane %v2108, %v2111
        %vm2113 = vcmp.eq.s32.totalorder %v2112, 1
        %v2114 = vsel %vm2113, %v2101, -1e+09
        %v2115 = vsel %vm991, %v2114, -inf
        %2116 = vmax.xlane.f32.xlu0 %v2115
        %v2117 = vpop.xlane.xlu0 %2116
        %v2118 = vmax.f32 %v2117, -1e+30
        %v2119 = vsub.f32 %v2114, %v2118
        %v2120 = vmul.f32 %v2119, 1.442695
        %v2121 = vpow.pop %v2120
        %v2122 = vsub.f32 -1e+30, %v2118
        %v2123 = vmul.f32 %v2122, 1.442695
        %v2124 = vpow.pop %v2123
        %v2125 = vmul.f32 %v2124, 0.0
        %v2126 = vsel %vm991, %v2121, 0.0
        %2127 = vadd.xlane.f32.xlu0 %v2126
        %v2128 = vpop.xlane.xlu0 %2127
        %v2129 = vadd.f32 %v2125, %v2128
        %v2130 = vpack.c.bf16 %v2121, %v2121
        %v2133 = vunpack.c.l.b16 %v2051
        %v2134 = vunpack.c.l.b16 %v2052
        %v2135 = vpack.c.b16 %v2134, %v2133
        %v2138 = vsel %vm991, %v2130, 0
        %2140 = vmatprep.subr.bf16.mxu0 0
        %2141 = vmatpush1.bf16.msra.mxu0 %v2135
        %2142 = vmatprep.subr.bf16.mxu0 0
        %2143 = vmatpush1.bf16.msra.mxu0 0
        %2144 = vmatprep.subr.bf16.mxu0 0
        %2145 = vmatpush1.bf16.msra.mxu0 0
        %2146 = vmatprep.subr.bf16.mxu0 0
        %2147 = vmatpush1.bf16.msra.mxu0 0
        %2148 = vmatprep.subr.bf16.mxu0 0
        %2149 = vmatpush1.bf16.msra.mxu0 0
        %2150 = vmatprep.subr.bf16.mxu0 0
        %2151 = vmatpush1.bf16.msra.mxu0 0
        %2152 = vmatprep.subr.bf16.mxu0 0
        %2153 = vmatpush1.bf16.msra.mxu0 0
        %2154 = vmatprep.subr.bf16.mxu0 0
        %2155 = vmatpush1.bf16.msra.mxu0 0
        %2156 = vmatprep.subr.bf16.mxu0 0
        %2157 = vmatpush1.bf16.msra.mxu0 0
        %2158 = vmatprep.subr.bf16.mxu0 0
        %2159 = vmatpush1.bf16.msra.mxu0 0
        %2160 = vmatprep.subr.bf16.mxu0 0
        %2161 = vmatpush1.bf16.msra.mxu0 0
        %2162 = vmatprep.subr.bf16.mxu0 0
        %2163 = vmatpush1.bf16.msra.mxu0 0
        %2164 = vmatprep.subr.bf16.mxu0 0
        %2165 = vmatpush1.bf16.msra.mxu0 0
        %2166 = vmatprep.subr.bf16.mxu0 0
        %2167 = vmatpush1.bf16.msra.mxu0 0
        %2168 = vmatprep.subr.bf16.mxu0 0
        %2169 = vmatpush1.bf16.msra.mxu0 0
        %2170 = vmatprep.subr.bf16.mxu0 0
        %2171 = vmatpush1.bf16.msra.mxu0 0
        %2172 = vmatprep.mubr.bf16.mxu0 0
        %2173 = vmatmul.mubr.bf16.gmra.mrb[0].mxu0 %v2138
        %v2174 = vpop.f32.mrb[0].mxu0
        %v2175 = vadd.f32 0.0, %v2174
        %v2176 = vpop.f32.mrb[0].mxu0
        %v2177 = vpop.f32.mrb[0].mxu0
        %v2178 = vpop.f32.mrb[0].mxu0
        %2179 = vdwg.mxu0
        %v2180 = vadd.f32 %v2125, %v2175
        %v2181 = vrcp.pop %v2129
        %v2182 = vmul.f32 %v2180, %v2181
        %2184 = vrot.lane.b32.xlu0 %v2182, 24
        %v2185 = vpop.permute.xlu0 %2184
        %2187 = vst.msk [vmem:[#allocation2] sm:$0xff] %vm1462, %v2185
        %v2188 = vld [vmem:[#allocation2] sm:$0xff]
        %v2189 = vpack.c.bf16 %v2188, %v2188
        %v2190 = vld [vmem:[%s14] sm:$0xf]
        %v2191 = vld [vmem:[%s14 + $0x4] sm:$0xf]
        %v2192 = vld [vmem:[%s14 + $0x8] sm:$0xf]
        %v2193 = vld [vmem:[%s14 + $0xc] sm:$0xf]
        %v2194 = vld [vmem:[%s15] sm:$0x1]
        %v2196 = vlaneseq
        %v2197 = vshrl.u32 %v2196, 7
        %v2198 = vsub.s32 0, %v2197
        %v2199 = vrot.slane %v2194, %v2198
        %v2205 = vunpack.c.l.b16 %v2190
        %v2206 = vunpack.c.l.b16 %v2191
        %v2207 = vunpack.c.l.b16 %v2192
        %v2208 = vunpack.c.l.b16 %v2193
        %v2209 = vpack.c.b16 %v2206, %v2205
        %v2210 = vpack.c.b16 %v2208, %v2207
        %v2214 = vsel %vm882, %v2189, 0
        %2216 = vmatprep.subr.bf16.mxu0 0
        %2217 = vmatpush1.bf16.msra.mxu0 %v2209
        %2218 = vmatprep.subr.bf16.mxu0 0
        %2219 = vmatpush1.bf16.msra.mxu0 %v2210
        %2220 = vmatprep.subr.bf16.mxu0 0
        %2221 = vmatpush1.bf16.msra.mxu0 0
        %2222 = vmatprep.subr.bf16.mxu0 0
        %2223 = vmatpush1.bf16.msra.mxu0 0
        %2224 = vmatprep.subr.bf16.mxu0 0
        %2225 = vmatpush1.bf16.msra.mxu0 0
        %2226 = vmatprep.subr.bf16.mxu0 0
        %2227 = vmatpush1.bf16.msra.mxu0 0
        %2228 = vmatprep.subr.bf16.mxu0 0
        %2229 = vmatpush1.bf16.msra.mxu0 0
        %2230 = vmatprep.subr.bf16.mxu0 0
        %2231 = vmatpush1.bf16.msra.mxu0 0
        %2232 = vmatprep.subr.bf16.mxu0 0
        %2233 = vmatpush1.bf16.msra.mxu0 0
        %2234 = vmatprep.subr.bf16.mxu0 0
        %2235 = vmatpush1.bf16.msra.mxu0 0
        %2236 = vmatprep.subr.bf16.mxu0 0
        %2237 = vmatpush1.bf16.msra.mxu0 0
        %2238 = vmatprep.subr.bf16.mxu0 0
        %2239 = vmatpush1.bf16.msra.mxu0 0
        %2240 = vmatprep.subr.bf16.mxu0 0
        %2241 = vmatpush1.bf16.msra.mxu0 0
        %2242 = vmatprep.subr.bf16.mxu0 0
        %2243 = vmatpush1.bf16.msra.mxu0 0
        %2244 = vmatprep.subr.bf16.mxu0 0
        %2245 = vmatpush1.bf16.msra.mxu0 0
        %2246 = vmatprep.subr.bf16.mxu0 0
        %2247 = vmatpush1.bf16.msra.mxu0 0
        %2248 = vmatprep.mubr.bf16.mxu0 0
        %2249 = vmatmul.mubr.bf16.gmra.mrb[0].mxu0 %v2214
        %v2250 = vpop.f32.mrb[0].mxu0
        %v2251 = vadd.f32 %v2199, %v2250
        %v2252 = vpop.f32.mrb[0].mxu0
        %v2253 = vpop.f32.mrb[0].mxu0
        %v2254 = vpop.f32.mrb[0].mxu0
        %2255 = vdwg.mxu0
        %v2256 = vadd.f32 %v2251, %v1562
        %v2257 = vld [vmem:[%s16] sm:$0x1]
        %v2258 = vld [vmem:[%s17] sm:$0x1]
        %v2259 = vsel %vm882, %v2256, 0.0
        %2260 = vadd.xlane.f32.xlu0 %v2259
        %v2261 = vpop.xlane.xlu0 %2260
        %v2262 = vmul.f32 %v2261, %v1538
        %v2263 = vsub.f32 %v2256, %v2262
        %v2264 = vmul.f32 %v2263, %v2263
        %v2265 = vsel %vm882, %v2264, 0.0
        %2266 = vadd.xlane.f32.xlu0 %v2265
        %v2267 = vpop.xlane.xlu0 %2266
        %v2268 = vmul.f32 %v2267, %v1538
        %v2269 = vadd.f32 %v2268, 1e-05
        %v2270 = vrsqrt.pop %v2269
        %v2271 = vmul.f32 %v2263, %v2270
        %v2273 = vlaneseq
        %v2274 = vshrl.u32 %v2273, 7
        %v2275 = vsub.s32 0, %v2274
        %v2276 = vrot.slane %v2257, %v2275
        %v2278 = vmul.f32 %v2271, %v2276
        %v2280 = vlaneseq
        %v2281 = vshrl.u32 %v2280, 7
        %v2282 = vsub.s32 0, %v2281
        %v2283 = vrot.slane %v2258, %v2282
        %v2285 = vadd.f32 %v2278, %v2283
        %v2286 = vpack.c.bf16 %v2285, %v2285
        %v2287 = vld [vmem:[%s18] sm:$0xf]
        %v2288 = vld [vmem:[%s18 + $0x4] sm:$0xf]
        %v2289 = vld [vmem:[%s18 + $0x8] sm:$0xf]
        %v2290 = vld [vmem:[%s18 + $0xc] sm:$0xf]
        %v2291 = vld [vmem:[%s19] sm:$0x1]
        %v2293 = vlaneseq
        %v2294 = vshrl.u32 %v2293, 7
        %v2295 = vsub.s32 0, %v2294
        %v2296 = vrot.slane %v2291, %v2295
        %v2302 = vunpack.c.l.b16 %v2287
        %v2303 = vunpack.c.l.b16 %v2288
        %v2304 = vunpack.c.l.b16 %v2289
        %v2305 = vunpack.c.l.b16 %v2290
        %v2306 = vpack.c.b16 %v2303, %v2302
        %v2307 = vpack.c.b16 %v2305, %v2304
        %v2311 = vsel %vm882, %v2286, 0
        %2313 = vmatprep.subr.bf16.mxu0 0
        %2314 = vmatpush1.bf16.msra.mxu0 %v2306
        %2315 = vmatprep.subr.bf16.mxu0 0
        %2316 = vmatpush1.bf16.msra.mxu0 %v2307
        %2317 = vmatprep.subr.bf16.mxu0 0
        %2318 = vmatpush1.bf16.msra.mxu0 0
        %2319 = vmatprep.subr.bf16.mxu0 0
        %2320 = vmatpush1.bf16.msra.mxu0 0
        %2321 = vmatprep.subr.bf16.mxu0 0
        %2322 = vmatpush1.bf16.msra.mxu0 0
        %2323 = vmatprep.subr.bf16.mxu0 0
        %2324 = vmatpush1.bf16.msra.mxu0 0
        %2325 = vmatprep.subr.bf16.mxu0 0
        %2326 = vmatpush1.bf16.msra.mxu0 0
        %2327 = vmatprep.subr.bf16.mxu0 0
        %2328 = vmatpush1.bf16.msra.mxu0 0
        %2329 = vmatprep.subr.bf16.mxu0 0
        %2330 = vmatpush1.bf16.msra.mxu0 0
        %2331 = vmatprep.subr.bf16.mxu0 0
        %2332 = vmatpush1.bf16.msra.mxu0 0
        %2333 = vmatprep.subr.bf16.mxu0 0
        %2334 = vmatpush1.bf16.msra.mxu0 0
        %2335 = vmatprep.subr.bf16.mxu0 0
        %2336 = vmatpush1.bf16.msra.mxu0 0
        %2337 = vmatprep.subr.bf16.mxu0 0
        %2338 = vmatpush1.bf16.msra.mxu0 0
        %2339 = vmatprep.subr.bf16.mxu0 0
        %2340 = vmatpush1.bf16.msra.mxu0 0
        %2341 = vmatprep.subr.bf16.mxu0 0
        %2342 = vmatpush1.bf16.msra.mxu0 0
        %2343 = vmatprep.subr.bf16.mxu0 0
        %2344 = vmatpush1.bf16.msra.mxu0 0
        %2345 = vmatprep.mubr.bf16.mxu0 0
        %2346 = vmatmul.mubr.bf16.gmra.mrb[0].mxu0 %v2311
        %v2347 = vpop.f32.mrb[0].mxu0
        %v2348 = vadd.f32 %v2296, %v2347
        %v2349 = vpop.f32.mrb[0].mxu0
        %v2350 = vpop.f32.mrb[0].mxu0
        %v2351 = vpop.f32.mrb[0].mxu0
        %2352 = vdwg.mxu0
        %v2353 = vmax.f32 %v2348, 0.0
        %v2354 = vpack.c.bf16 %v2353, %v2353
        %v2355 = vld [vmem:[%s20] sm:$0xf]
        %v2356 = vld [vmem:[%s20 + $0x4] sm:$0xf]
        %v2357 = vld [vmem:[%s20 + $0x8] sm:$0xf]
        %v2358 = vld [vmem:[%s20 + $0xc] sm:$0xf]
        %v2359 = vld [vmem:[%s20 + $0x10] sm:$0xf]
        %v2360 = vld [vmem:[%s20 + $0x14] sm:$0xf]
        %v2361 = vld [vmem:[%s20 + $0x18] sm:$0xf]
        %v2362 = vld [vmem:[%s20 + $0x1c] sm:$0xf]
        %v2363 = vld [vmem:[%s21] sm:$0x1]
        %v2365 = vlaneseq
        %v2366 = vshrl.u32 %v2365, 7
        %v2367 = vsub.s32 0, %v2366
        %v2368 = vrot.slane %v2363, %v2367
        %v2378 = vunpack.c.l.b16 %v2355
        %v2379 = vunpack.c.l.b16 %v2356
        %v2380 = vunpack.c.l.b16 %v2357
        %v2381 = vunpack.c.l.b16 %v2358
        %v2382 = vunpack.c.l.b16 %v2359
        %v2383 = vunpack.c.l.b16 %v2360
        %v2384 = vunpack.c.l.b16 %v2361
        %v2385 = vunpack.c.l.b16 %v2362
        %v2386 = vpack.c.b16 %v2379, %v2378
        %v2387 = vpack.c.b16 %v2381, %v2380
        %v2388 = vpack.c.b16 %v2383, %v2382
        %v2389 = vpack.c.b16 %v2385, %v2384
        %vm2394 = vcmask 523264
        %v2396 = vsel %vm2394, %v2354, 0
        %2398 = vmatprep.subr.bf16.mxu0 0
        %2399 = vmatpush1.bf16.msra.mxu0 %v2386
        %2400 = vmatprep.subr.bf16.mxu0 0
        %2401 = vmatpush1.bf16.msra.mxu0 %v2387
        %2402 = vmatprep.subr.bf16.mxu0 0
        %2403 = vmatpush1.bf16.msra.mxu0 %v2388
        %2404 = vmatprep.subr.bf16.mxu0 0
        %2405 = vmatpush1.bf16.msra.mxu0 %v2389
        %2406 = vmatprep.subr.bf16.mxu0 0
        %2407 = vmatpush1.bf16.msra.mxu0 0
        %2408 = vmatprep.subr.bf16.mxu0 0
        %2409 = vmatpush1.bf16.msra.mxu0 0
        %2410 = vmatprep.subr.bf16.mxu0 0
        %2411 = vmatpush1.bf16.msra.mxu0 0
        %2412 = vmatprep.subr.bf16.mxu0 0
        %2413 = vmatpush1.bf16.msra.mxu0 0
        %2414 = vmatprep.subr.bf16.mxu0 0
        %2415 = vmatpush1.bf16.msra.mxu0 0
        %2416 = vmatprep.subr.bf16.mxu0 0
        %2417 = vmatpush1.bf16.msra.mxu0 0
        %2418 = vmatprep.subr.bf16.mxu0 0
        %2419 = vmatpush1.bf16.msra.mxu0 0
        %2420 = vmatprep.subr.bf16.mxu0 0
        %2421 = vmatpush1.bf16.msra.mxu0 0
        %2422 = vmatprep.subr.bf16.mxu0 0
        %2423 = vmatpush1.bf16.msra.mxu0 0
        %2424 = vmatprep.subr.bf16.mxu0 0
        %2425 = vmatpush1.bf16.msra.mxu0 0
        %2426 = vmatprep.subr.bf16.mxu0 0
        %2427 = vmatpush1.bf16.msra.mxu0 0
        %2428 = vmatprep.subr.bf16.mxu0 0
        %2429 = vmatpush1.bf16.msra.mxu0 0
        %2430 = vmatprep.mubr.bf16.mxu0 0
        %2431 = vmatmul.mubr.bf16.gmra.mrb[0].mxu0 %v2396
        %v2432 = vpop.f32.mrb[0].mxu0
        %v2433 = vadd.f32 %v2368, %v2432
        %v2434 = vpop.f32.mrb[0].mxu0
        %v2435 = vpop.f32.mrb[0].mxu0
        %v2436 = vpop.f32.mrb[0].mxu0
        %2437 = vdwg.mxu0
        %v2438 = vadd.f32 %v2433, %v2285
        %v2439 = vld [vmem:[%s22] sm:$0x1]
        %v2440 = vld [vmem:[%s23] sm:$0x1]
        %v2441 = vsel %vm882, %v2438, 0.0
        %2442 = vadd.xlane.f32.xlu0 %v2441
        %v2443 = vpop.xlane.xlu0 %2442
        %v2444 = vmul.f32 %v2443, %v1538
        %v2445 = vsub.f32 %v2438, %v2444
        %v2446 = vmul.f32 %v2445, %v2445
        %v2447 = vsel %vm882, %v2446, 0.0
        %2448 = vadd.xlane.f32.xlu0 %v2447
        %v2449 = vpop.xlane.xlu0 %2448
        %v2450 = vmul.f32 %v2449, %v1538
        %v2451 = vadd.f32 %v2450, 1e-05
        %v2452 = vrsqrt.pop %v2451
        %v2453 = vmul.f32 %v2445, %v2452
        %v2455 = vlaneseq
        %v2456 = vshrl.u32 %v2455, 7
        %v2457 = vsub.s32 0, %v2456
        %v2458 = vrot.slane %v2439, %v2457
        %v2460 = vmul.f32 %v2453, %v2458
        %v2462 = vlaneseq
        %v2463 = vshrl.u32 %v2462, 7
        %v2464 = vsub.s32 0, %v2463
        %v2465 = vrot.slane %v2440, %v2464
        %v2467 = vadd.f32 %v2460, %v2465
        %2468 = vst.msk [vmem:[%s823] sm:$0xff] %vm882, %v2467
        %s2469 = sand.u32 %s596, 1
        %s2470 = scalar_lea.sflag [#allocation4], %s2469
        %s2471 = sand.u32 %s596, 1
        %s2472 = smul.addr %s2471, 8
        %s2473 = scalar_lea.vmem [#allocation3], %s2472
        // Predicated region
        $region117: #{tpu_custom_call.1} parent=115 // pred_check
          %p2474 = pneg %p606
        $region118: #{tpu_custom_call.1} parent=115 // pred_check_branch
          %2476 = sbr.rel (%p2474) target = $region120
        $region119: #{tpu_custom_call.1} parent=115 // pred_region
          %s2478 = ssub.s32 128, 128
          %2479 = vsyncadd %s2470, %s2478
          %s2480 = smul.addr %s42, 2
          %s2481 = sadd.s32 %s43, %s2480
          %s2482 = smul.addr %s2481, 128
          %s2483 = scalar_lea.hbm %s24, %s2482
          %s2485 = sshll.u32 %s2473, 4
          %s2486 = int_to_ptr.vmem [resolvable:$true] %s2485
          %2488 = dma.vmem_to_hbm [thread:$0]  %s2486, 128, %s2483, %s2470
        $region120: #{tpu_custom_call.1} parent=115 // pred_fallthru
          _
      $region116: #{tpu_custom_call.1} parent=5 // pred_fallthru
        _
      %p2489 = scmp.le.s32.totalorder 2, %s33
      // Predicated region
      $region121: #{tpu_custom_call.1} parent=5 // pred_check
        %p2490 = pneg %p2489
      $region122: #{tpu_custom_call.1} parent=5 // pred_check_branch
        %2492 = sbr.rel (%p2490) target = $region124
      $region123: #{tpu_custom_call.1} parent=5 // pred_region
        %s2493 = ssub.s32 %s33, 2
        // Predicated region
        $region125: #{tpu_custom_call.1} parent=123 // pred_check
          %p2494 = pneg %p612
        $region126: #{tpu_custom_call.1} parent=123 // pred_check_branch
          %2496 = sbr.rel (%p2494) target = $region128
        $region127: #{tpu_custom_call.1} parent=123 // pred_region
          %s2497 = sand.u32 %s597, 1
          %s2498 = scalar_lea.sflag [#allocation4], %s2497
          %s2499 = sand.u32 %s597, 1
          %s2500 = smul.addr %s2499, 8
          %s2501 = scalar_lea.vmem [#allocation3], %s2500
          %2502 = dma.done %s2498, 128
        $region128: #{tpu_custom_call.1} parent=123 // pred_fallthru
          _
      $region124: #{tpu_custom_call.1} parent=5 // pred_fallthru
        _
    $region6: #{tpu_custom_call.1} parent=1 // loop_footer
      %s37 = sadd.s32 1, %s33
    $region7: #{tpu_custom_call.1} parent=1 // loop_footer_branch
      %32 = sbr.rel target = $region3
    $region8: #{tpu_custom_call.1} parent=1 // loop_exit
      _
    %2503 = vsyncpa [#allocation4], 1
    %s2504 = scalar_lea.sflag [#allocation4], 1
    %2505 = vsyncpa %s2504, 1

</llo_original>
